<compile_context>
chip_gen: v5e
topology: v5e:2x2
jax: 0.10.0
libtpu: 0.0.40
codegen_flags: <defaults>
</compile_context>

<pallas_src>
import math
import functools

import jax
import jax.numpy as jnp
from jax import lax
from jax.experimental import pallas as pl
from jax.experimental.pallas import tpu as pltpu


# ------------------------------ fused kernel --------------------------------

def _decoder_kernel(
    x_ref, enc_ref, dist_ref, tmask_ref, smask_ref, pe_ref,
    na_ref, nb_ref,
    a1_wqkv_ref, a1_bqkv_ref, a1_wo_ref, a1_bo_ref,
    a2_wqkv_ref, a2_bqkv_ref, a2_wo_ref, a2_bo_ref,
    ff_w1_ref, ff_b1_ref, ff_w2_ref, ff_b2_ref,
    fa_ref, fb_ref,
    out_ref, att_ref,
    q_s, k_s, v_s, ctx_s,
    *, n_layers, heads, d_model, eps, T, Ts):
  dk = d_model // heads
  inv_sqrt_dk = 1.0 / math.sqrt(dk)
  bf16 = jnp.bfloat16

  def norm(x, alpha, beta):
    # PyTorch-style: alpha * (x - mean) / (std_unbiased + eps) + beta   (exact f32)
    mu = jnp.mean(x, axis=-1, keepdims=True)
    xc = x - mu
    var = jnp.sum(xc * xc, axis=-1, keepdims=True) * (1.0 / (d_model - 1))
    return alpha * xc / (jnp.sqrt(var) + eps) + beta

  def softmax(s):
    s = s - jnp.max(s, axis=-1, keepdims=True)
    p = jnp.exp(s)
    return p / jnp.sum(p, axis=-1, keepdims=True)     # exact: probs sum to 1

  # Per-batch activations (grid axis 0 = batch, blocks squeezed via [0]).
  x = x_ref[0] * math.sqrt(d_model) + pe_ref[...]       # (T, D)  f32
  enc = enc_ref[0]                                      # (Ts, D) f32
  dist = dist_ref[0]                                    # (T, T)
  self_mask = tmask_ref[0]                              # (T, T)
  cross_mask = smask_ref[0]                             # (T, Ts)

  def attention(q, k, v, Tk, mask, extra, wo, bo, att_off):
    """q: (T, D) f32; k, v: (Tk, D) f32. Returns out-proj(ctx) + bias, (T, D) f32."""
    full_kv = (Tk == k_s.shape[1])
    # Head split via VMEM scratch slabs (no concatenates / relayout reshapes).
    for h in range(heads):
      q_s[h] = q[:, h * dk:(h + 1) * dk]
      if full_kv:
        k_s[h] = k[:, h * dk:(h + 1) * dk]
        v_s[h] = v[:, h * dk:(h + 1) * dk]
      else:
        k_s[h, :Tk, :] = k[:, h * dk:(h + 1) * dk]
        v_s[h, :Tk, :] = v[:, h * dk:(h + 1) * dk]
    qh = q_s[...].astype(bf16)                                       # (H, T, dk)
    kh = (k_s[...] if full_kv else k_s[:, :Tk, :]).astype(bf16)      # (H, Tk, dk)
    vh = (v_s[...] if full_kv else v_s[:, :Tk, :]).astype(bf16)      # (H, Tk, dk)

    # Batched (over heads) score / context matmuls on the MXU, f32 accumulate.
    s = lax.dot_general(qh, kh, (((2,), (2,)), ((0,), (0,))),
                        preferred_element_type=jnp.float32) * inv_sqrt_dk
    if extra is not None:
      s = s + extra[None, :, :]
    s = jnp.where(mask[None, :, :] == 0.0, -1e9, s)
    p = softmax(s)                                                   # (H, T, Tk) f32
    ctx = lax.dot_general(p.astype(bf16), vh, (((2,), (1,)), ((0,), (0,))),
                          preferred_element_type=jnp.float32)        # (H, T, dk)

    # Write probs directly into the lane-dense output block; heads into ctx slab.
    for h in range(heads):
      att_ref[0, :, att_off + h * Tk: att_off + (h + 1) * Tk] = p[h]
      ctx_s[:, h * dk:(h + 1) * dk] = ctx[h]
    return jnp.dot(ctx_s[...].astype(bf16), wo,
                   preferred_element_type=jnp.float32) + bo

  span = heads * (T + Ts)
  for l in range(n_layers):
    base = l * span

    # ---- pre-norm self-attention (fused QKV matmul) + residual ----
    x2 = norm(x, na_ref[3 * l:3 * l + 1, :], nb_ref[3 * l:3 * l + 1, :])
    qkv = jnp.dot(x2.astype(bf16), a1_wqkv_ref[l],
                  preferred_element_type=jnp.float32) + a1_bqkv_ref[l:l + 1, :]
    x = x + attention(qkv[:, :d_model], qkv[:, d_model:2 * d_model],
                      qkv[:, 2 * d_model:], T, self_mask, dist,
                      a1_wo_ref[l], a1_bo_ref[l:l + 1, :], base)

    # ---- pre-norm cross-attention over encoder outputs + residual ----
    x2 = norm(x, na_ref[3 * l + 1:3 * l + 2, :], nb_ref[3 * l + 1:3 * l + 2, :])
    wqkv2 = a2_wqkv_ref[l]                                           # (D, 3D) bf16
    bqkv2 = a2_bqkv_ref[l:l + 1, :]                                  # (1, 3D) f32
    q = jnp.dot(x2.astype(bf16), wqkv2[:, :d_model],
                preferred_element_type=jnp.float32) + bqkv2[:, :d_model]
    kv = jnp.dot(enc.astype(bf16), wqkv2[:, d_model:],
                 preferred_element_type=jnp.float32) + bqkv2[:, d_model:]
    x = x + attention(q, kv[:, :d_model], kv[:, d_model:], Ts, cross_mask,
                      None, a2_wo_ref[l], a2_bo_ref[l:l + 1, :],
                      base + heads * T)

    # ---- pre-norm ReLU feed-forward + residual ----
    x2 = norm(x, na_ref[3 * l + 2:3 * l + 3, :], nb_ref[3 * l + 2:3 * l + 3, :])
    h1 = jnp.maximum(
        jnp.dot(x2.astype(bf16), ff_w1_ref[l],
                preferred_element_type=jnp.float32) + ff_b1_ref[l:l + 1, :], 0.0)
    x = x + jnp.dot(h1.astype(bf16), ff_w2_ref[l],
                    preferred_element_type=jnp.float32) + ff_b2_ref[l:l + 1, :]

  # Final norm.
  out_ref[0] = norm(x, fa_ref[...], fb_ref[...])


# ------------------------------ wrapper --------------------------------------

def decoder_forward(params, trg, e_outputs, distances, src_mask, trg_mask,
                    is_test=True):
  B, T, D = trg.shape
  Ts = e_outputs.shape[1]
  heads = params["heads"]
  N = params["a1_wqkv"].shape[0]
  assert D % heads == 0, "d_model must be divisible by heads"
  dk = D // heads
  tk_max = max(T, Ts)
  span = heads * (T + Ts)
  L = N * span                    # lane-dense (== 128 at the demo sizes)

  f32, bf16 = jnp.float32, jnp.bfloat16

  def batch_spec(shape):
    rank = len(shape)
    return pl.BlockSpec((1,) + tuple(shape[1:]),
                        lambda b, r=rank: (b,) + (0,) * (r - 1))

  def bcast_spec(shape):
    rank = len(shape)
    return pl.BlockSpec(tuple(shape), lambda b, r=rank: (0,) * r)

  inputs = (
      trg.astype(f32),                              # (B, T, D)    per-batch
      e_outputs.astype(f32),                        # (B, Ts, D)   per-batch
      distances.astype(f32),                        # (B, T, T)    per-batch
      trg_mask.astype(f32),                         # (B, T, T)    per-batch
      src_mask.astype(f32),                         # (B, T, Ts)   per-batch
      params["pe"][:T],                             # (T, D)
      params["norm_a"], params["norm_b"],           # (3N, D)
      params["a1_wqkv"].astype(bf16), params["a1_bqkv"],
      params["a1_wo"].astype(bf16), params["a1_bo"],
      params["a2_wqkv"].astype(bf16), params["a2_bqkv"],
      params["a2_wo"].astype(bf16), params["a2_bo"],
      params["ff_w1"].astype(bf16), params["ff_b1"],
      params["ff_w2"].astype(bf16), params["ff_b2"],
      params["fnorm_a"], params["fnorm_b"],
  )
  per_batch = (True, True, True, True, True) + (False,) * 17

  out_shapes = (
      jax.ShapeDtypeStruct((B, T, D), f32),
      jax.ShapeDtypeStruct((B, T, L), f32),
  )

  kernel = functools.partial(_decoder_kernel, n_layers=N, heads=heads,
                             d_model=D, eps=1e-6, T=T, Ts=Ts)

  out, att = pl.pallas_call(
      kernel,
      grid=(B,),
      in_specs=[batch_spec(a.shape) if pb else bcast_spec(a.shape)
                for a, pb in zip(inputs, per_batch)],
      out_specs=(batch_spec((B, T, D)), batch_spec((B, T, L))),
      out_shape=out_shapes,
      scratch_shapes=[
          pltpu.VMEM((heads, T, dk), f32),       # q heads slab
          pltpu.VMEM((heads, tk_max, dk), f32),  # k heads slab
          pltpu.VMEM((heads, tk_max, dk), f32),  # v heads slab
          pltpu.VMEM((T, D), f32),               # merged context slab
      ],
      compiler_params=pltpu.CompilerParams(
          dimension_semantics=("parallel",),
          vmem_limit_bytes=32 * 1024 * 1024),
  )(*inputs)

  # Unpack the lane-dense attention slab -> per-layer (B, heads, T, Tk).
  att_val_dec = {}
  for l in range(N):
    base = l * span
    p_self = att[:, :, base:base + heads * T]
    p_cross = att[:, :, base + heads * T:base + span]
    att_val_dec["layer" + str(l)] = {
        "self": p_self.reshape(B, T, heads, T).transpose(0, 2, 1, 3),
        "cross": p_cross.reshape(B, T, heads, Ts).transpose(0, 2, 1, 3),
    }
  return out, att_val_dec


# ----------------------------- parameter init --------------------------------

def _init_linear(key, fan_in, fan_out):
  kw, kb = jax.random.split(key)
  bound = 1.0 / math.sqrt(fan_in)
  w = jax.random.uniform(kw, (fan_in, fan_out), jnp.float32, -bound, bound)
  b = jax.random.uniform(kb, (fan_out,), jnp.float32, -bound, bound)
  return w, b


def _build_pe_table(max_frames, d_model):
  pos = jnp.arange(max_frames, dtype=jnp.float32)[:, None]          # (L, 1)
  i_even = jnp.arange(0, d_model, 2, dtype=jnp.float32)[None, :]    # (1, D/2)
  pe_sin = jnp.sin(pos / jnp.power(10000.0, (2.0 * i_even) / d_model))
  pe_cos = jnp.cos(pos / jnp.power(10000.0, (2.0 * (i_even + 1.0)) / d_model))
  pe = jnp.stack([pe_sin, pe_cos], axis=-1).reshape(max_frames, d_model)
  return pe.astype(jnp.float32)


def init_decoder_params(key, d_model, N, heads, max_frames, d_ff):
  def attn_params(k):
    k1, k2, k3, k4 = jax.random.split(k, 4)
    wq, bq = _init_linear(k1, d_model, d_model)
    wk, bk = _init_linear(k2, d_model, d_model)
    wv, bv = _init_linear(k3, d_model, d_model)
    wo, bo = _init_linear(k4, d_model, d_model)
    # fused QKV weight (D, 3D) / bias (3D,)
    return (jnp.concatenate([wq, wk, wv], axis=1),
            jnp.concatenate([bq, bk, bv], axis=0), wo, bo)

  a1_wqkv, a1_bqkv, a1_wo, a1_bo = [], [], [], []
  a2_wqkv, a2_bqkv, a2_wo, a2_bo = [], [], [], []
  ff_w1, ff_b1, ff_w2, ff_b2 = [], [], [], []
  for _ in range(N):
    key, k1, k2, k3, k4 = jax.random.split(key, 5)
    w, b, wo, bo = attn_params(k1)
    a1_wqkv.append(w); a1_bqkv.append(b); a1_wo.append(wo); a1_bo.append(bo)
    w, b, wo, bo = attn_params(k2)
    a2_wqkv.append(w); a2_bqkv.append(b); a2_wo.append(wo); a2_bo.append(bo)
    w1, b1 = _init_linear(k3, d_model, d_ff)
    w2, b2 = _init_linear(k4, d_ff, d_model)
    ff_w1.append(w1); ff_b1.append(b1); ff_w2.append(w2); ff_b2.append(b2)

  stack = lambda xs: jnp.stack(xs, axis=0)
  return {
      "heads": heads,
      "pe": _build_pe_table(max_frames, d_model),
      # per layer: [norm1, norm2, norm3] rows
      "norm_a": jnp.ones((3 * N, d_model), jnp.float32),
      "norm_b": jnp.zeros((3 * N, d_model), jnp.float32),
      "a1_wqkv": stack(a1_wqkv), "a1_bqkv": stack(a1_bqkv),
      "a1_wo": stack(a1_wo), "a1_bo": stack(a1_bo),
      "a2_wqkv": stack(a2_wqkv), "a2_bqkv": stack(a2_bqkv),
      "a2_wo": stack(a2_wo), "a2_bo": stack(a2_bo),
      "ff_w1": stack(ff_w1), "ff_b1": stack(ff_b1),
      "ff_w2": stack(ff_w2), "ff_b2": stack(ff_b2),
      "fnorm_a": jnp.ones((1, d_model), jnp.float32),
      "fnorm_b": jnp.zeros((1, d_model), jnp.float32),
  }


# ----------------------------------- main -------------------------------------

if __name__ == "__main__":
  B, T_trg, T_src = 2, 8, 8
  d_model, heads, N_layers, max_frames, d_ff = 32, 4, 2, 16, 64

  root = jax.random.PRNGKey(0)
  k_par, k_trg, k_enc = jax.random.split(root, 3)

  params = init_decoder_params(k_par, d_model, N_layers, heads, max_frames, d_ff)

  trg = jax.random.normal(k_trg, (B, T_trg, d_model), jnp.float32)
  e_outputs = jax.random.normal(k_enc, (B, T_src, d_model), jnp.float32)
  distances = jnp.zeros((B, T_trg, T_trg), jnp.float32)
  # causal target mask, full source mask
  trg_mask = jnp.broadcast_to(
      jnp.tril(jnp.ones((T_trg, T_trg), jnp.float32)), (B, T_trg, T_trg))
  src_mask = jnp.ones((B, T_trg, T_src), jnp.float32)

  out, att_val_dec = decoder_forward(params, trg, e_outputs, distances,
                                     src_mask, trg_mask, is_test=True)
  jax.block_until_ready(out)
  for layer_atts in att_val_dec.values():
    jax.block_until_ready(layer_atts["self"])
    jax.block_until_ready(layer_atts["cross"])

  assert out.shape == (B, T_trg, d_model)
  assert jnp.all(jnp.isfinite(out))
  for layer_atts in att_val_dec.values():
    assert layer_atts["self"].shape == (B, heads, T_trg, T_trg)
    assert layer_atts["cross"].shape == (B, heads, T_trg, T_src)
    assert jnp.all(jnp.isfinite(layer_atts["self"]))
    assert jnp.all(jnp.isfinite(layer_atts["cross"]))
    # softmax uses exact division -> probabilities sum to 1
    assert jnp.allclose(jnp.sum(layer_atts["self"], axis=-1), 1.0, atol=1e-3)
    assert jnp.allclose(jnp.sum(layer_atts["cross"], axis=-1), 1.0, atol=1e-3)
  print("KERNEL_OK")
</pallas_src>

<mosaic_0001>
module attributes {stable_mosaic.version = 11 : i64} {
  func.func @_decoder_kernel(%arg0: i32, %arg1: memref<1x8x32xf32, #tpu.memory_space<vmem>>, %arg2: memref<1x8x32xf32, #tpu.memory_space<vmem>>, %arg3: memref<1x8x8xf32, #tpu.memory_space<vmem>>, %arg4: memref<1x8x8xf32, #tpu.memory_space<vmem>>, %arg5: memref<1x8x8xf32, #tpu.memory_space<vmem>>, %arg6: memref<8x32xf32, #tpu.memory_space<vmem>>, %arg7: memref<6x32xf32, #tpu.memory_space<vmem>>, %arg8: memref<6x32xf32, #tpu.memory_space<vmem>>, %arg9: memref<2x32x96xbf16, #tpu.memory_space<vmem>>, %arg10: memref<2x96xf32, #tpu.memory_space<vmem>>, %arg11: memref<2x32x32xbf16, #tpu.memory_space<vmem>>, %arg12: memref<2x32xf32, #tpu.memory_space<vmem>>, %arg13: memref<2x32x96xbf16, #tpu.memory_space<vmem>>, %arg14: memref<2x96xf32, #tpu.memory_space<vmem>>, %arg15: memref<2x32x32xbf16, #tpu.memory_space<vmem>>, %arg16: memref<2x32xf32, #tpu.memory_space<vmem>>, %arg17: memref<2x32x64xbf16, #tpu.memory_space<vmem>>, %arg18: memref<2x64xf32, #tpu.memory_space<vmem>>, %arg19: memref<2x64x32xbf16, #tpu.memory_space<vmem>>, %arg20: memref<2x32xf32, #tpu.memory_space<vmem>>, %arg21: memref<1x32xf32, #tpu.memory_space<vmem>>, %arg22: memref<1x32xf32, #tpu.memory_space<vmem>>, %arg23: memref<1x8x32xf32, #tpu.memory_space<vmem>>, %arg24: memref<1x8x128xf32, #tpu.memory_space<vmem>>, %arg25: memref<4x8x8xf32, #tpu.memory_space<vmem>>, %arg26: memref<4x8x8xf32, #tpu.memory_space<vmem>>, %arg27: memref<4x8x8xf32, #tpu.memory_space<vmem>>, %arg28: memref<8x32xf32, #tpu.memory_space<vmem>>) attributes {dimension_semantics = [#tpu.dimension_semantics<parallel>], iteration_bounds = array<i64: 2>, scalar_prefetch = 0 : i64, scratch_operands = 4 : i64, tpu.core_type = #tpu.core_type<tc>, window_params = [{transform_indices = @transform_0, window_bounds = array<i64: 1, 8, 32>}, {transform_indices = @transform_1, window_bounds = array<i64: 1, 8, 32>}, {transform_indices = @transform_2, window_bounds = array<i64: 1, 8, 8>}, {transform_indices = @transform_3, window_bounds = array<i64: 1, 8, 8>}, {transform_indices = @transform_4, window_bounds = array<i64: 1, 8, 8>}, {pipeline_mode = #tpu.pipeline_mode<synchronous>, transform_indices = @transform_5, window_bounds = array<i64: 8, 32>}, {pipeline_mode = #tpu.pipeline_mode<synchronous>, transform_indices = @transform_6, window_bounds = array<i64: 6, 32>}, {pipeline_mode = #tpu.pipeline_mode<synchronous>, transform_indices = @transform_7, window_bounds = array<i64: 6, 32>}, {pipeline_mode = #tpu.pipeline_mode<synchronous>, transform_indices = @transform_8, window_bounds = array<i64: 2, 32, 96>}, {pipeline_mode = #tpu.pipeline_mode<synchronous>, transform_indices = @transform_9, window_bounds = array<i64: 2, 96>}, {pipeline_mode = #tpu.pipeline_mode<synchronous>, transform_indices = @transform_10, window_bounds = array<i64: 2, 32, 32>}, {pipeline_mode = #tpu.pipeline_mode<synchronous>, transform_indices = @transform_11, window_bounds = array<i64: 2, 32>}, {pipeline_mode = #tpu.pipeline_mode<synchronous>, transform_indices = @transform_12, window_bounds = array<i64: 2, 32, 96>}, {pipeline_mode = #tpu.pipeline_mode<synchronous>, transform_indices = @transform_13, window_bounds = array<i64: 2, 96>}, {pipeline_mode = #tpu.pipeline_mode<synchronous>, transform_indices = @transform_14, window_bounds = array<i64: 2, 32, 32>}, {pipeline_mode = #tpu.pipeline_mode<synchronous>, transform_indices = @transform_15, window_bounds = array<i64: 2, 32>}, {pipeline_mode = #tpu.pipeline_mode<synchronous>, transform_indices = @transform_16, window_bounds = array<i64: 2, 32, 64>}, {pipeline_mode = #tpu.pipeline_mode<synchronous>, transform_indices = @transform_17, window_bounds = array<i64: 2, 64>}, {pipeline_mode = #tpu.pipeline_mode<synchronous>, transform_indices = @transform_18, window_bounds = array<i64: 2, 64, 32>}, {pipeline_mode = #tpu.pipeline_mode<synchronous>, transform_indices = @transform_19, window_bounds = array<i64: 2, 32>}, {pipeline_mode = #tpu.pipeline_mode<synchronous>, transform_indices = @transform_20, window_bounds = array<i64: 1, 32>}, {pipeline_mode = #tpu.pipeline_mode<synchronous>, transform_indices = @transform_21, window_bounds = array<i64: 1, 32>}, {transform_indices = @transform_22, window_bounds = array<i64: 1, 8, 32>}, {transform_indices = @transform_23, window_bounds = array<i64: 1, 8, 128>}]} {
    %c0 = arith.constant 0 : index
    %c0_0 = arith.constant 0 : index
    %c0_1 = arith.constant 0 : index
    %0 = vector.load %arg1[%c0, %c0_0, %c0_1] : memref<1x8x32xf32, #tpu.memory_space<vmem>>, vector<1x8x32xf32>
    %1 = vector.shape_cast %0 : vector<1x8x32xf32> to vector<8x32xf32>
    %cst = arith.constant 5.65685415 : f32
    %2 = vector.broadcast %cst : f32 to vector<8x32xf32>
    %3 = arith.mulf %1, %2 : vector<8x32xf32>
    %c0_2 = arith.constant 0 : index
    %c0_3 = arith.constant 0 : index
    %4 = vector.load %arg6[%c0_2, %c0_3] : memref<8x32xf32, #tpu.memory_space<vmem>>, vector<8x32xf32>
    %5 = arith.addf %3, %4 : vector<8x32xf32>
    %c0_4 = arith.constant 0 : index
    %c0_5 = arith.constant 0 : index
    %c0_6 = arith.constant 0 : index
    %6 = vector.load %arg2[%c0_4, %c0_5, %c0_6] : memref<1x8x32xf32, #tpu.memory_space<vmem>>, vector<1x8x32xf32>
    %7 = vector.shape_cast %6 : vector<1x8x32xf32> to vector<8x32xf32>
    %c0_7 = arith.constant 0 : index
    %c0_8 = arith.constant 0 : index
    %c0_9 = arith.constant 0 : index
    %8 = vector.load %arg3[%c0_7, %c0_8, %c0_9] : memref<1x8x8xf32, #tpu.memory_space<vmem>>, vector<1x8x8xf32>
    %9 = vector.shape_cast %8 : vector<1x8x8xf32> to vector<8x8xf32>
    %c0_10 = arith.constant 0 : index
    %c0_11 = arith.constant 0 : index
    %c0_12 = arith.constant 0 : index
    %10 = vector.load %arg4[%c0_10, %c0_11, %c0_12] : memref<1x8x8xf32, #tpu.memory_space<vmem>>, vector<1x8x8xf32>
    %11 = vector.shape_cast %10 : vector<1x8x8xf32> to vector<8x8xf32>
    %c0_13 = arith.constant 0 : index
    %c0_14 = arith.constant 0 : index
    %c0_15 = arith.constant 0 : index
    %12 = vector.load %arg5[%c0_13, %c0_14, %c0_15] : memref<1x8x8xf32, #tpu.memory_space<vmem>>, vector<1x8x8xf32>
    %13 = vector.shape_cast %12 : vector<1x8x8xf32> to vector<8x8xf32>
    %c0_16 = arith.constant 0 : index
    %c0_17 = arith.constant 0 : index
    %14 = vector.load %arg7[%c0_16, %c0_17] : memref<6x32xf32, #tpu.memory_space<vmem>>, vector<1x32xf32>
    %c0_18 = arith.constant 0 : index
    %c0_19 = arith.constant 0 : index
    %15 = vector.load %arg8[%c0_18, %c0_19] : memref<6x32xf32, #tpu.memory_space<vmem>>, vector<1x32xf32>
    %cst_20 = arith.constant dense<0.000000e+00> : vector<8xf32>
    %16 = vector.multi_reduction <add>, %5, %cst_20 [1] : vector<8x32xf32> to vector<8xf32>
    %17 = vector.shape_cast %16 : vector<8xf32> to vector<8x1xf32>
    %cst_21 = arith.constant 3.200000e+01 : f32
    %18 = vector.broadcast %cst_21 : f32 to vector<8x1xf32>
    %19 = arith.divf %17, %18 : vector<8x1xf32>
    %20 = vector.broadcast %19 : vector<8x1xf32> to vector<8x32xf32>
    %21 = arith.subf %5, %20 : vector<8x32xf32>
    %22 = arith.mulf %21, %21 : vector<8x32xf32>
    %cst_22 = arith.constant dense<0.000000e+00> : vector<8xf32>
    %23 = vector.multi_reduction <add>, %22, %cst_22 [1] : vector<8x32xf32> to vector<8xf32>
    %24 = vector.shape_cast %23 : vector<8xf32> to vector<8x1xf32>
    %cst_23 = arith.constant 0.0322580636 : f32
    %25 = vector.broadcast %cst_23 : f32 to vector<8x1xf32>
    %26 = arith.mulf %24, %25 : vector<8x1xf32>
    %27 = vector.broadcast %14 : vector<1x32xf32> to vector<8x32xf32>
    %28 = arith.mulf %27, %21 : vector<8x32xf32>
    %29 = math.sqrt %26 : vector<8x1xf32>
    %cst_24 = arith.constant 9.99999997E-7 : f32
    %30 = vector.broadcast %cst_24 : f32 to vector<8x1xf32>
    %31 = arith.addf %29, %30 : vector<8x1xf32>
    %32 = vector.broadcast %31 : vector<8x1xf32> to vector<8x32xf32>
    %33 = arith.divf %28, %32 : vector<8x32xf32>
    %34 = vector.broadcast %15 : vector<1x32xf32> to vector<8x32xf32>
    %35 = arith.addf %33, %34 : vector<8x32xf32>
    %36 = arith.truncf %35 : vector<8x32xf32> to vector<8x32xbf16>
    %c0_25 = arith.constant 0 : index
    %c0_26 = arith.constant 0 : index
    %c0_27 = arith.constant 0 : index
    %37 = vector.load %arg9[%c0_25, %c0_26, %c0_27] : memref<2x32x96xbf16, #tpu.memory_space<vmem>>, vector<1x32x96xbf16>
    %38 = vector.shape_cast %37 : vector<1x32x96xbf16> to vector<32x96xbf16>
    %cst_28 = arith.constant dense<0.000000e+00> : vector<8x96xf32>
    %39 = tpu.matmul %36, %38, %cst_28 {dimension_numbers = #tpu.dot_dimension_numbers<[1], [0], [0], [1], [0, 0, 1, 1], [], []>} : vector<8x32xbf16>, vector<32x96xbf16>, vector<8x96xf32> -> vector<8x96xf32>
    %c0_29 = arith.constant 0 : index
    %c0_30 = arith.constant 0 : index
    %40 = vector.load %arg10[%c0_29, %c0_30] : memref<2x96xf32, #tpu.memory_space<vmem>>, vector<1x96xf32>
    %41 = vector.broadcast %40 : vector<1x96xf32> to vector<8x96xf32>
    %42 = arith.addf %39, %41 : vector<8x96xf32>
    %43 = vector.extract_strided_slice %42 {offsets = [0, 0], sizes = [8, 32], strides = [1, 1]} : vector<8x96xf32> to vector<8x32xf32>
    %44 = vector.extract_strided_slice %42 {offsets = [0, 32], sizes = [8, 32], strides = [1, 1]} : vector<8x96xf32> to vector<8x32xf32>
    %45 = vector.extract_strided_slice %42 {offsets = [0, 64], sizes = [8, 32], strides = [1, 1]} : vector<8x96xf32> to vector<8x32xf32>
    %c0_31 = arith.constant 0 : index
    %c0_32 = arith.constant 0 : index
    %c0_33 = arith.constant 0 : index
    %46 = vector.load %arg11[%c0_31, %c0_32, %c0_33] : memref<2x32x32xbf16, #tpu.memory_space<vmem>>, vector<1x32x32xbf16>
    %47 = vector.shape_cast %46 : vector<1x32x32xbf16> to vector<32x32xbf16>
    %c0_34 = arith.constant 0 : index
    %c0_35 = arith.constant 0 : index
    %48 = vector.load %arg12[%c0_34, %c0_35] : memref<2x32xf32, #tpu.memory_space<vmem>>, vector<1x32xf32>
    %49 = vector.extract_strided_slice %43 {offsets = [0, 0], sizes = [8, 8], strides = [1, 1]} : vector<8x32xf32> to vector<8x8xf32>
    %c0_36 = arith.constant 0 : index
    %c0_37 = arith.constant 0 : index
    %c0_38 = arith.constant 0 : index
    %50 = vector.load %arg25[%c0_36, %c0_37, %c0_38] : memref<4x8x8xf32, #tpu.memory_space<vmem>>, vector<1x8x8xf32>
    %51 = vector.shape_cast %50 : vector<1x8x8xf32> to vector<8x8xf32>
    %52 = vector.shape_cast %49 : vector<8x8xf32> to vector<1x8x8xf32>
    tpu.vector_store %arg25[%c0_36, %c0_37, %c0_38], %52 {strides = array<i32>} : memref<4x8x8xf32, #tpu.memory_space<vmem>>, vector<1x8x8xf32>,
    %53 = vector.extract_strided_slice %44 {offsets = [0, 0], sizes = [8, 8], strides = [1, 1]} : vector<8x32xf32> to vector<8x8xf32>
    %c0_39 = arith.constant 0 : index
    %c0_40 = arith.constant 0 : index
    %c0_41 = arith.constant 0 : index
    %54 = vector.load %arg26[%c0_39, %c0_40, %c0_41] : memref<4x8x8xf32, #tpu.memory_space<vmem>>, vector<1x8x8xf32>
    %55 = vector.shape_cast %54 : vector<1x8x8xf32> to vector<8x8xf32>
    %56 = vector.shape_cast %53 : vector<8x8xf32> to vector<1x8x8xf32>
    tpu.vector_store %arg26[%c0_39, %c0_40, %c0_41], %56 {strides = array<i32>} : memref<4x8x8xf32, #tpu.memory_space<vmem>>, vector<1x8x8xf32>,
    %57 = vector.extract_strided_slice %45 {offsets = [0, 0], sizes = [8, 8], strides = [1, 1]} : vector<8x32xf32> to vector<8x8xf32>
    %c0_42 = arith.constant 0 : index
    %c0_43 = arith.constant 0 : index
    %c0_44 = arith.constant 0 : index
    %58 = vector.load %arg27[%c0_42, %c0_43, %c0_44] : memref<4x8x8xf32, #tpu.memory_space<vmem>>, vector<1x8x8xf32>
    %59 = vector.shape_cast %58 : vector<1x8x8xf32> to vector<8x8xf32>
    %60 = vector.shape_cast %57 : vector<8x8xf32> to vector<1x8x8xf32>
    tpu.vector_store %arg27[%c0_42, %c0_43, %c0_44], %60 {strides = array<i32>} : memref<4x8x8xf32, #tpu.memory_space<vmem>>, vector<1x8x8xf32>,
    %61 = vector.extract_strided_slice %43 {offsets = [0, 8], sizes = [8, 8], strides = [1, 1]} : vector<8x32xf32> to vector<8x8xf32>
    %c1 = arith.constant 1 : index
    %c0_45 = arith.constant 0 : index
    %c0_46 = arith.constant 0 : index
    %62 = vector.load %arg25[%c1, %c0_45, %c0_46] : memref<4x8x8xf32, #tpu.memory_space<vmem>>, vector<1x8x8xf32>
    %63 = vector.shape_cast %62 : vector<1x8x8xf32> to vector<8x8xf32>
    %64 = vector.shape_cast %61 : vector<8x8xf32> to vector<1x8x8xf32>
    tpu.vector_store %arg25[%c1, %c0_45, %c0_46], %64 {strides = array<i32>} : memref<4x8x8xf32, #tpu.memory_space<vmem>>, vector<1x8x8xf32>,
    %65 = vector.extract_strided_slice %44 {offsets = [0, 8], sizes = [8, 8], strides = [1, 1]} : vector<8x32xf32> to vector<8x8xf32>
    %c1_47 = arith.constant 1 : index
    %c0_48 = arith.constant 0 : index
    %c0_49 = arith.constant 0 : index
    %66 = vector.load %arg26[%c1_47, %c0_48, %c0_49] : memref<4x8x8xf32, #tpu.memory_space<vmem>>, vector<1x8x8xf32>
    %67 = vector.shape_cast %66 : vector<1x8x8xf32> to vector<8x8xf32>
    %68 = vector.shape_cast %65 : vector<8x8xf32> to vector<1x8x8xf32>
    tpu.vector_store %arg26[%c1_47, %c0_48, %c0_49], %68 {strides = array<i32>} : memref<4x8x8xf32, #tpu.memory_space<vmem>>, vector<1x8x8xf32>,
    %69 = vector.extract_strided_slice %45 {offsets = [0, 8], sizes = [8, 8], strides = [1, 1]} : vector<8x32xf32> to vector<8x8xf32>
    %c1_50 = arith.constant 1 : index
    %c0_51 = arith.constant 0 : index
    %c0_52 = arith.constant 0 : index
    %70 = vector.load %arg27[%c1_50, %c0_51, %c0_52] : memref<4x8x8xf32, #tpu.memory_space<vmem>>, vector<1x8x8xf32>
    %71 = vector.shape_cast %70 : vector<1x8x8xf32> to vector<8x8xf32>
    %72 = vector.shape_cast %69 : vector<8x8xf32> to vector<1x8x8xf32>
    tpu.vector_store %arg27[%c1_50, %c0_51, %c0_52], %72 {strides = array<i32>} : memref<4x8x8xf32, #tpu.memory_space<vmem>>, vector<1x8x8xf32>,
    %73 = vector.extract_strided_slice %43 {offsets = [0, 16], sizes = [8, 8], strides = [1, 1]} : vector<8x32xf32> to vector<8x8xf32>
    %c2 = arith.constant 2 : index
    %c0_53 = arith.constant 0 : index
    %c0_54 = arith.constant 0 : index
    %74 = vector.load %arg25[%c2, %c0_53, %c0_54] : memref<4x8x8xf32, #tpu.memory_space<vmem>>, vector<1x8x8xf32>
    %75 = vector.shape_cast %74 : vector<1x8x8xf32> to vector<8x8xf32>
    %76 = vector.shape_cast %73 : vector<8x8xf32> to vector<1x8x8xf32>
    tpu.vector_store %arg25[%c2, %c0_53, %c0_54], %76 {strides = array<i32>} : memref<4x8x8xf32, #tpu.memory_space<vmem>>, vector<1x8x8xf32>,
    %77 = vector.extract_strided_slice %44 {offsets = [0, 16], sizes = [8, 8], strides = [1, 1]} : vector<8x32xf32> to vector<8x8xf32>
    %c2_55 = arith.constant 2 : index
    %c0_56 = arith.constant 0 : index
    %c0_57 = arith.constant 0 : index
    %78 = vector.load %arg26[%c2_55, %c0_56, %c0_57] : memref<4x8x8xf32, #tpu.memory_space<vmem>>, vector<1x8x8xf32>
    %79 = vector.shape_cast %78 : vector<1x8x8xf32> to vector<8x8xf32>
    %80 = vector.shape_cast %77 : vector<8x8xf32> to vector<1x8x8xf32>
    tpu.vector_store %arg26[%c2_55, %c0_56, %c0_57], %80 {strides = array<i32>} : memref<4x8x8xf32, #tpu.memory_space<vmem>>, vector<1x8x8xf32>,
    %81 = vector.extract_strided_slice %45 {offsets = [0, 16], sizes = [8, 8], strides = [1, 1]} : vector<8x32xf32> to vector<8x8xf32>
    %c2_58 = arith.constant 2 : index
    %c0_59 = arith.constant 0 : index
    %c0_60 = arith.constant 0 : index
    %82 = vector.load %arg27[%c2_58, %c0_59, %c0_60] : memref<4x8x8xf32, #tpu.memory_space<vmem>>, vector<1x8x8xf32>
    %83 = vector.shape_cast %82 : vector<1x8x8xf32> to vector<8x8xf32>
    %84 = vector.shape_cast %81 : vector<8x8xf32> to vector<1x8x8xf32>
    tpu.vector_store %arg27[%c2_58, %c0_59, %c0_60], %84 {strides = array<i32>} : memref<4x8x8xf32, #tpu.memory_space<vmem>>, vector<1x8x8xf32>,
    %85 = vector.extract_strided_slice %43 {offsets = [0, 24], sizes = [8, 8], strides = [1, 1]} : vector<8x32xf32> to vector<8x8xf32>
    %c3 = arith.constant 3 : index
    %c0_61 = arith.constant 0 : index
    %c0_62 = arith.constant 0 : index
    %86 = vector.load %arg25[%c3, %c0_61, %c0_62] : memref<4x8x8xf32, #tpu.memory_space<vmem>>, vector<1x8x8xf32>
    %87 = vector.shape_cast %86 : vector<1x8x8xf32> to vector<8x8xf32>
    %88 = vector.shape_cast %85 : vector<8x8xf32> to vector<1x8x8xf32>
    tpu.vector_store %arg25[%c3, %c0_61, %c0_62], %88 {strides = array<i32>} : memref<4x8x8xf32, #tpu.memory_space<vmem>>, vector<1x8x8xf32>,
    %89 = vector.extract_strided_slice %44 {offsets = [0, 24], sizes = [8, 8], strides = [1, 1]} : vector<8x32xf32> to vector<8x8xf32>
    %c3_63 = arith.constant 3 : index
    %c0_64 = arith.constant 0 : index
    %c0_65 = arith.constant 0 : index
    %90 = vector.load %arg26[%c3_63, %c0_64, %c0_65] : memref<4x8x8xf32, #tpu.memory_space<vmem>>, vector<1x8x8xf32>
    %91 = vector.shape_cast %90 : vector<1x8x8xf32> to vector<8x8xf32>
    %92 = vector.shape_cast %89 : vector<8x8xf32> to vector<1x8x8xf32>
    tpu.vector_store %arg26[%c3_63, %c0_64, %c0_65], %92 {strides = array<i32>} : memref<4x8x8xf32, #tpu.memory_space<vmem>>, vector<1x8x8xf32>,
    %93 = vector.extract_strided_slice %45 {offsets = [0, 24], sizes = [8, 8], strides = [1, 1]} : vector<8x32xf32> to vector<8x8xf32>
    %c3_66 = arith.constant 3 : index
    %c0_67 = arith.constant 0 : index
    %c0_68 = arith.constant 0 : index
    %94 = vector.load %arg27[%c3_66, %c0_67, %c0_68] : memref<4x8x8xf32, #tpu.memory_space<vmem>>, vector<1x8x8xf32>
    %95 = vector.shape_cast %94 : vector<1x8x8xf32> to vector<8x8xf32>
    %96 = vector.shape_cast %93 : vector<8x8xf32> to vector<1x8x8xf32>
    tpu.vector_store %arg27[%c3_66, %c0_67, %c0_68], %96 {strides = array<i32>} : memref<4x8x8xf32, #tpu.memory_space<vmem>>, vector<1x8x8xf32>,
    %c0_69 = arith.constant 0 : index
    %c0_70 = arith.constant 0 : index
    %c0_71 = arith.constant 0 : index
    %97 = vector.load %arg25[%c0_69, %c0_70, %c0_71] : memref<4x8x8xf32, #tpu.memory_space<vmem>>, vector<4x8x8xf32>
    %98 = arith.truncf %97 : vector<4x8x8xf32> to vector<4x8x8xbf16>
    %c0_72 = arith.constant 0 : index
    %c0_73 = arith.constant 0 : index
    %c0_74 = arith.constant 0 : index
    %99 = vector.load %arg26[%c0_72, %c0_73, %c0_74] : memref<4x8x8xf32, #tpu.memory_space<vmem>>, vector<4x8x8xf32>
    %100 = arith.truncf %99 : vector<4x8x8xf32> to vector<4x8x8xbf16>
    %c0_75 = arith.constant 0 : index
    %c0_76 = arith.constant 0 : index
    %c0_77 = arith.constant 0 : index
    %101 = vector.load %arg27[%c0_75, %c0_76, %c0_77] : memref<4x8x8xf32, #tpu.memory_space<vmem>>, vector<4x8x8xf32>
    %102 = arith.truncf %101 : vector<4x8x8xf32> to vector<4x8x8xbf16>
    %cst_78 = arith.constant dense<0.000000e+00> : vector<4x8x8xf32>
    %103 = tpu.matmul %98, %100, %cst_78 {dimension_numbers = #tpu.dot_dimension_numbers<[2], [2], [1], [1], [0, 0, 0, 1, 1, 1], [0], [0]>} : vector<4x8x8xbf16>, vector<4x8x8xbf16>, vector<4x8x8xf32> -> vector<4x8x8xf32>
    %cst_79 = arith.constant 0.353553385 : f32
    %104 = vector.broadcast %cst_79 : f32 to vector<4x8x8xf32>
    %105 = arith.mulf %103, %104 : vector<4x8x8xf32>
    %106 = vector.shape_cast %9 : vector<8x8xf32> to vector<1x8x8xf32>
    %107 = vector.broadcast %106 : vector<1x8x8xf32> to vector<4x8x8xf32>
    %108 = arith.addf %105, %107 : vector<4x8x8xf32>
    %109 = vector.shape_cast %11 : vector<8x8xf32> to vector<1x8x8xf32>
    %cst_80 = arith.constant 0.000000e+00 : f32
    %110 = vector.broadcast %cst_80 : f32 to vector<1x8x8xf32>
    %111 = arith.cmpf oeq, %109, %110 : vector<1x8x8xf32>
    %cst_81 = arith.constant -1.000000e+09 : f32
    %112 = vector.shape_cast %111 : vector<1x8x8xi1> to vector<1x8x8xi1>
    %113 = vector.broadcast %112 : vector<1x8x8xi1> to vector<4x8x8xi1>
    %114 = vector.broadcast %cst_81 : f32 to vector<4x8x8xf32>
    %115 = arith.select %113, %114, %108 : vector<4x8x8xi1>, vector<4x8x8xf32>
    %cst_82 = arith.constant dense<0xFF800000> : vector<4x8xf32>
    %116 = vector.multi_reduction <maximumf>, %115, %cst_82 [2] : vector<4x8x8xf32> to vector<4x8xf32>
    %117 = vector.shape_cast %116 : vector<4x8xf32> to vector<4x8x1xf32>
    %118 = vector.broadcast %117 : vector<4x8x1xf32> to vector<4x8x8xf32>
    %119 = arith.subf %115, %118 : vector<4x8x8xf32>
    %120 = math.exp %119 : vector<4x8x8xf32>
    %cst_83 = arith.constant dense<0.000000e+00> : vector<4x8xf32>
    %121 = vector.multi_reduction <add>, %120, %cst_83 [2] : vector<4x8x8xf32> to vector<4x8xf32>
    %122 = vector.shape_cast %121 : vector<4x8xf32> to vector<4x8x1xf32>
    %123 = vector.broadcast %122 : vector<4x8x1xf32> to vector<4x8x8xf32>
    %124 = arith.divf %120, %123 : vector<4x8x8xf32>
    %125 = arith.truncf %124 : vector<4x8x8xf32> to vector<4x8x8xbf16>
    %cst_84 = arith.constant dense<0.000000e+00> : vector<4x8x8xf32>
    %126 = tpu.matmul %125, %102, %cst_84 {dimension_numbers = #tpu.dot_dimension_numbers<[2], [1], [1], [2], [0, 0, 0, 1, 1, 2], [0], [0]>} : vector<4x8x8xbf16>, vector<4x8x8xbf16>, vector<4x8x8xf32> -> vector<4x8x8xf32>
    %127 = vector.extract_strided_slice %124 {offsets = [0, 0, 0], sizes = [1, 8, 8], strides = [1, 1, 1]} : vector<4x8x8xf32> to vector<1x8x8xf32>
    %128 = vector.shape_cast %127 : vector<1x8x8xf32> to vector<8x8xf32>
    %c0_85 = arith.constant 0 : index
    %c0_86 = arith.constant 0 : index
    %c0_87 = arith.constant 0 : index
    %129 = vector.load %arg24[%c0_85, %c0_86, %c0_87] : memref<1x8x128xf32, #tpu.memory_space<vmem>>, vector<1x8x8xf32>
    %130 = vector.shape_cast %129 : vector<1x8x8xf32> to vector<8x8xf32>
    %131 = vector.shape_cast %128 : vector<8x8xf32> to vector<1x8x8xf32>
    tpu.vector_store %arg24[%c0_85, %c0_86, %c0_87], %131 {strides = array<i32>} : memref<1x8x128xf32, #tpu.memory_space<vmem>>, vector<1x8x8xf32>,
    %132 = vector.extract_strided_slice %126 {offsets = [0, 0, 0], sizes = [1, 8, 8], strides = [1, 1, 1]} : vector<4x8x8xf32> to vector<1x8x8xf32>
    %133 = vector.shape_cast %132 : vector<1x8x8xf32> to vector<8x8xf32>
    %c0_88 = arith.constant 0 : index
    %c0_89 = arith.constant 0 : index
    %134 = vector.load %arg28[%c0_88, %c0_89] : memref<8x32xf32, #tpu.memory_space<vmem>>, vector<8x8xf32>
    tpu.vector_store %arg28[%c0_88, %c0_89], %133 {strides = array<i32>} : memref<8x32xf32, #tpu.memory_space<vmem>>, vector<8x8xf32>,
    %135 = vector.extract_strided_slice %124 {offsets = [1, 0, 0], sizes = [1, 8, 8], strides = [1, 1, 1]} : vector<4x8x8xf32> to vector<1x8x8xf32>
    %136 = vector.shape_cast %135 : vector<1x8x8xf32> to vector<8x8xf32>
    %c0_90 = arith.constant 0 : index
    %c0_91 = arith.constant 0 : index
    %c8 = arith.constant 8 : index
    %137 = vector.load %arg24[%c0_90, %c0_91, %c8] : memref<1x8x128xf32, #tpu.memory_space<vmem>>, vector<1x8x8xf32>
    %138 = vector.shape_cast %137 : vector<1x8x8xf32> to vector<8x8xf32>
    %139 = vector.shape_cast %136 : vector<8x8xf32> to vector<1x8x8xf32>
    tpu.vector_store %arg24[%c0_90, %c0_91, %c8], %139 {strides = array<i32>} : memref<1x8x128xf32, #tpu.memory_space<vmem>>, vector<1x8x8xf32>,
    %140 = vector.extract_strided_slice %126 {offsets = [1, 0, 0], sizes = [1, 8, 8], strides = [1, 1, 1]} : vector<4x8x8xf32> to vector<1x8x8xf32>
    %141 = vector.shape_cast %140 : vector<1x8x8xf32> to vector<8x8xf32>
    %c0_92 = arith.constant 0 : index
    %c8_93 = arith.constant 8 : index
    %142 = vector.load %arg28[%c0_92, %c8_93] : memref<8x32xf32, #tpu.memory_space<vmem>>, vector<8x8xf32>
    tpu.vector_store %arg28[%c0_92, %c8_93], %141 {strides = array<i32>} : memref<8x32xf32, #tpu.memory_space<vmem>>, vector<8x8xf32>,
    %143 = vector.extract_strided_slice %124 {offsets = [2, 0, 0], sizes = [1, 8, 8], strides = [1, 1, 1]} : vector<4x8x8xf32> to vector<1x8x8xf32>
    %144 = vector.shape_cast %143 : vector<1x8x8xf32> to vector<8x8xf32>
    %c0_94 = arith.constant 0 : index
    %c0_95 = arith.constant 0 : index
    %c16 = arith.constant 16 : index
    %145 = vector.load %arg24[%c0_94, %c0_95, %c16] : memref<1x8x128xf32, #tpu.memory_space<vmem>>, vector<1x8x8xf32>
    %146 = vector.shape_cast %145 : vector<1x8x8xf32> to vector<8x8xf32>
    %147 = vector.shape_cast %144 : vector<8x8xf32> to vector<1x8x8xf32>
    tpu.vector_store %arg24[%c0_94, %c0_95, %c16], %147 {strides = array<i32>} : memref<1x8x128xf32, #tpu.memory_space<vmem>>, vector<1x8x8xf32>,
    %148 = vector.extract_strided_slice %126 {offsets = [2, 0, 0], sizes = [1, 8, 8], strides = [1, 1, 1]} : vector<4x8x8xf32> to vector<1x8x8xf32>
    %149 = vector.shape_cast %148 : vector<1x8x8xf32> to vector<8x8xf32>
    %c0_96 = arith.constant 0 : index
    %c16_97 = arith.constant 16 : index
    %150 = vector.load %arg28[%c0_96, %c16_97] : memref<8x32xf32, #tpu.memory_space<vmem>>, vector<8x8xf32>
    tpu.vector_store %arg28[%c0_96, %c16_97], %149 {strides = array<i32>} : memref<8x32xf32, #tpu.memory_space<vmem>>, vector<8x8xf32>,
    %151 = vector.extract_strided_slice %124 {offsets = [3, 0, 0], sizes = [1, 8, 8], strides = [1, 1, 1]} : vector<4x8x8xf32> to vector<1x8x8xf32>
    %152 = vector.shape_cast %151 : vector<1x8x8xf32> to vector<8x8xf32>
    %c0_98 = arith.constant 0 : index
    %c0_99 = arith.constant 0 : index
    %c24 = arith.constant 24 : index
    %153 = vector.load %arg24[%c0_98, %c0_99, %c24] : memref<1x8x128xf32, #tpu.memory_space<vmem>>, vector<1x8x8xf32>
    %154 = vector.shape_cast %153 : vector<1x8x8xf32> to vector<8x8xf32>
    %155 = vector.shape_cast %152 : vector<8x8xf32> to vector<1x8x8xf32>
    tpu.vector_store %arg24[%c0_98, %c0_99, %c24], %155 {strides = array<i32>} : memref<1x8x128xf32, #tpu.memory_space<vmem>>, vector<1x8x8xf32>,
    %156 = vector.extract_strided_slice %126 {offsets = [3, 0, 0], sizes = [1, 8, 8], strides = [1, 1, 1]} : vector<4x8x8xf32> to vector<1x8x8xf32>
    %157 = vector.shape_cast %156 : vector<1x8x8xf32> to vector<8x8xf32>
    %c0_100 = arith.constant 0 : index
    %c24_101 = arith.constant 24 : index
    %158 = vector.load %arg28[%c0_100, %c24_101] : memref<8x32xf32, #tpu.memory_space<vmem>>, vector<8x8xf32>
    tpu.vector_store %arg28[%c0_100, %c24_101], %157 {strides = array<i32>} : memref<8x32xf32, #tpu.memory_space<vmem>>, vector<8x8xf32>,
    %c0_102 = arith.constant 0 : index
    %c0_103 = arith.constant 0 : index
    %159 = vector.load %arg28[%c0_102, %c0_103] : memref<8x32xf32, #tpu.memory_space<vmem>>, vector<8x32xf32>
    %160 = arith.truncf %159 : vector<8x32xf32> to vector<8x32xbf16>
    %cst_104 = arith.constant dense<0.000000e+00> : vector<8x32xf32>
    %161 = tpu.matmul %160, %47, %cst_104 {dimension_numbers = #tpu.dot_dimension_numbers<[1], [0], [0], [1], [0, 0, 1, 1], [], []>} : vector<8x32xbf16>, vector<32x32xbf16>, vector<8x32xf32> -> vector<8x32xf32>
    %162 = vector.broadcast %48 : vector<1x32xf32> to vector<8x32xf32>
    %163 = arith.addf %161, %162 : vector<8x32xf32>
    %164 = arith.addf %5, %163 : vector<8x32xf32>
    %c1_105 = arith.constant 1 : index
    %c0_106 = arith.constant 0 : index
    %165 = vector.load %arg7[%c1_105, %c0_106] : memref<6x32xf32, #tpu.memory_space<vmem>>, vector<1x32xf32>
    %c1_107 = arith.constant 1 : index
    %c0_108 = arith.constant 0 : index
    %166 = vector.load %arg8[%c1_107, %c0_108] : memref<6x32xf32, #tpu.memory_space<vmem>>, vector<1x32xf32>
    %cst_109 = arith.constant dense<0.000000e+00> : vector<8xf32>
    %167 = vector.multi_reduction <add>, %164, %cst_109 [1] : vector<8x32xf32> to vector<8xf32>
    %168 = vector.shape_cast %167 : vector<8xf32> to vector<8x1xf32>
    %cst_110 = arith.constant 3.200000e+01 : f32
    %169 = vector.broadcast %cst_110 : f32 to vector<8x1xf32>
    %170 = arith.divf %168, %169 : vector<8x1xf32>
    %171 = vector.broadcast %170 : vector<8x1xf32> to vector<8x32xf32>
    %172 = arith.subf %164, %171 : vector<8x32xf32>
    %173 = arith.mulf %172, %172 : vector<8x32xf32>
    %cst_111 = arith.constant dense<0.000000e+00> : vector<8xf32>
    %174 = vector.multi_reduction <add>, %173, %cst_111 [1] : vector<8x32xf32> to vector<8xf32>
    %175 = vector.shape_cast %174 : vector<8xf32> to vector<8x1xf32>
    %cst_112 = arith.constant 0.0322580636 : f32
    %176 = vector.broadcast %cst_112 : f32 to vector<8x1xf32>
    %177 = arith.mulf %175, %176 : vector<8x1xf32>
    %178 = vector.broadcast %165 : vector<1x32xf32> to vector<8x32xf32>
    %179 = arith.mulf %178, %172 : vector<8x32xf32>
    %180 = math.sqrt %177 : vector<8x1xf32>
    %cst_113 = arith.constant 9.99999997E-7 : f32
    %181 = vector.broadcast %cst_113 : f32 to vector<8x1xf32>
    %182 = arith.addf %180, %181 : vector<8x1xf32>
    %183 = vector.broadcast %182 : vector<8x1xf32> to vector<8x32xf32>
    %184 = arith.divf %179, %183 : vector<8x32xf32>
    %185 = vector.broadcast %166 : vector<1x32xf32> to vector<8x32xf32>
    %186 = arith.addf %184, %185 : vector<8x32xf32>
    %c0_114 = arith.constant 0 : index
    %c0_115 = arith.constant 0 : index
    %c0_116 = arith.constant 0 : index
    %187 = vector.load %arg13[%c0_114, %c0_115, %c0_116] : memref<2x32x96xbf16, #tpu.memory_space<vmem>>, vector<1x32x96xbf16>
    %188 = vector.shape_cast %187 : vector<1x32x96xbf16> to vector<32x96xbf16>
    %c0_117 = arith.constant 0 : index
    %c0_118 = arith.constant 0 : index
    %189 = vector.load %arg14[%c0_117, %c0_118] : memref<2x96xf32, #tpu.memory_space<vmem>>, vector<1x96xf32>
    %190 = arith.truncf %186 : vector<8x32xf32> to vector<8x32xbf16>
    %191 = vector.extract_strided_slice %188 {offsets = [0, 0], sizes = [32, 32], strides = [1, 1]} : vector<32x96xbf16> to vector<32x32xbf16>
    %cst_119 = arith.constant dense<0.000000e+00> : vector<8x32xf32>
    %192 = tpu.matmul %190, %191, %cst_119 {dimension_numbers = #tpu.dot_dimension_numbers<[1], [0], [0], [1], [0, 0, 1, 1], [], []>} : vector<8x32xbf16>, vector<32x32xbf16>, vector<8x32xf32> -> vector<8x32xf32>
    %193 = vector.extract_strided_slice %189 {offsets = [0, 0], sizes = [1, 32], strides = [1, 1]} : vector<1x96xf32> to vector<1x32xf32>
    %194 = vector.broadcast %193 : vector<1x32xf32> to vector<8x32xf32>
    %195 = arith.addf %192, %194 : vector<8x32xf32>
    %196 = arith.truncf %7 : vector<8x32xf32> to vector<8x32xbf16>
    %197 = vector.extract_strided_slice %188 {offsets = [0, 32], sizes = [32, 64], strides = [1, 1]} : vector<32x96xbf16> to vector<32x64xbf16>
    %cst_120 = arith.constant dense<0.000000e+00> : vector<8x64xf32>
    %198 = tpu.matmul %196, %197, %cst_120 {dimension_numbers = #tpu.dot_dimension_numbers<[1], [0], [0], [1], [0, 0, 1, 1], [], []>} : vector<8x32xbf16>, vector<32x64xbf16>, vector<8x64xf32> -> vector<8x64xf32>
    %199 = vector.extract_strided_slice %189 {offsets = [0, 32], sizes = [1, 64], strides = [1, 1]} : vector<1x96xf32> to vector<1x64xf32>
    %200 = vector.broadcast %199 : vector<1x64xf32> to vector<8x64xf32>
    %201 = arith.addf %198, %200 : vector<8x64xf32>
    %202 = vector.extract_strided_slice %201 {offsets = [0, 0], sizes = [8, 32], strides = [1, 1]} : vector<8x64xf32> to vector<8x32xf32>
    %203 = vector.extract_strided_slice %201 {offsets = [0, 32], sizes = [8, 32], strides = [1, 1]} : vector<8x64xf32> to vector<8x32xf32>
    %c0_121 = arith.constant 0 : index
    %c0_122 = arith.constant 0 : index
    %c0_123 = arith.constant 0 : index
    %204 = vector.load %arg15[%c0_121, %c0_122, %c0_123] : memref<2x32x32xbf16, #tpu.memory_space<vmem>>, vector<1x32x32xbf16>
    %205 = vector.shape_cast %204 : vector<1x32x32xbf16> to vector<32x32xbf16>
    %c0_124 = arith.constant 0 : index
    %c0_125 = arith.constant 0 : index
    %206 = vector.load %arg16[%c0_124, %c0_125] : memref<2x32xf32, #tpu.memory_space<vmem>>, vector<1x32xf32>
    %207 = vector.extract_strided_slice %195 {offsets = [0, 0], sizes = [8, 8], strides = [1, 1]} : vector<8x32xf32> to vector<8x8xf32>
    %c0_126 = arith.constant 0 : index
    %c0_127 = arith.constant 0 : index
    %c0_128 = arith.constant 0 : index
    %208 = vector.load %arg25[%c0_126, %c0_127, %c0_128] : memref<4x8x8xf32, #tpu.memory_space<vmem>>, vector<1x8x8xf32>
    %209 = vector.shape_cast %208 : vector<1x8x8xf32> to vector<8x8xf32>
    %210 = vector.shape_cast %207 : vector<8x8xf32> to vector<1x8x8xf32>
    tpu.vector_store %arg25[%c0_126, %c0_127, %c0_128], %210 {strides = array<i32>} : memref<4x8x8xf32, #tpu.memory_space<vmem>>, vector<1x8x8xf32>,
    %211 = vector.extract_strided_slice %202 {offsets = [0, 0], sizes = [8, 8], strides = [1, 1]} : vector<8x32xf32> to vector<8x8xf32>
    %c0_129 = arith.constant 0 : index
    %c0_130 = arith.constant 0 : index
    %c0_131 = arith.constant 0 : index
    %212 = vector.load %arg26[%c0_129, %c0_130, %c0_131] : memref<4x8x8xf32, #tpu.memory_space<vmem>>, vector<1x8x8xf32>
    %213 = vector.shape_cast %212 : vector<1x8x8xf32> to vector<8x8xf32>
    %214 = vector.shape_cast %211 : vector<8x8xf32> to vector<1x8x8xf32>
    tpu.vector_store %arg26[%c0_129, %c0_130, %c0_131], %214 {strides = array<i32>} : memref<4x8x8xf32, #tpu.memory_space<vmem>>, vector<1x8x8xf32>,
    %215 = vector.extract_strided_slice %203 {offsets = [0, 0], sizes = [8, 8], strides = [1, 1]} : vector<8x32xf32> to vector<8x8xf32>
    %c0_132 = arith.constant 0 : index
    %c0_133 = arith.constant 0 : index
    %c0_134 = arith.constant 0 : index
    %216 = vector.load %arg27[%c0_132, %c0_133, %c0_134] : memref<4x8x8xf32, #tpu.memory_space<vmem>>, vector<1x8x8xf32>
    %217 = vector.shape_cast %216 : vector<1x8x8xf32> to vector<8x8xf32>
    %218 = vector.shape_cast %215 : vector<8x8xf32> to vector<1x8x8xf32>
    tpu.vector_store %arg27[%c0_132, %c0_133, %c0_134], %218 {strides = array<i32>} : memref<4x8x8xf32, #tpu.memory_space<vmem>>, vector<1x8x8xf32>,
    %219 = vector.extract_strided_slice %195 {offsets = [0, 8], sizes = [8, 8], strides = [1, 1]} : vector<8x32xf32> to vector<8x8xf32>
    %c1_135 = arith.constant 1 : index
    %c0_136 = arith.constant 0 : index
    %c0_137 = arith.constant 0 : index
    %220 = vector.load %arg25[%c1_135, %c0_136, %c0_137] : memref<4x8x8xf32, #tpu.memory_space<vmem>>, vector<1x8x8xf32>
    %221 = vector.shape_cast %220 : vector<1x8x8xf32> to vector<8x8xf32>
    %222 = vector.shape_cast %219 : vector<8x8xf32> to vector<1x8x8xf32>
    tpu.vector_store %arg25[%c1_135, %c0_136, %c0_137], %222 {strides = array<i32>} : memref<4x8x8xf32, #tpu.memory_space<vmem>>, vector<1x8x8xf32>,
    %223 = vector.extract_strided_slice %202 {offsets = [0, 8], sizes = [8, 8], strides = [1, 1]} : vector<8x32xf32> to vector<8x8xf32>
    %c1_138 = arith.constant 1 : index
    %c0_139 = arith.constant 0 : index
    %c0_140 = arith.constant 0 : index
    %224 = vector.load %arg26[%c1_138, %c0_139, %c0_140] : memref<4x8x8xf32, #tpu.memory_space<vmem>>, vector<1x8x8xf32>
    %225 = vector.shape_cast %224 : vector<1x8x8xf32> to vector<8x8xf32>
    %226 = vector.shape_cast %223 : vector<8x8xf32> to vector<1x8x8xf32>
    tpu.vector_store %arg26[%c1_138, %c0_139, %c0_140], %226 {strides = array<i32>} : memref<4x8x8xf32, #tpu.memory_space<vmem>>, vector<1x8x8xf32>,
    %227 = vector.extract_strided_slice %203 {offsets = [0, 8], sizes = [8, 8], strides = [1, 1]} : vector<8x32xf32> to vector<8x8xf32>
    %c1_141 = arith.constant 1 : index
    %c0_142 = arith.constant 0 : index
    %c0_143 = arith.constant 0 : index
    %228 = vector.load %arg27[%c1_141, %c0_142, %c0_143] : memref<4x8x8xf32, #tpu.memory_space<vmem>>, vector<1x8x8xf32>
    %229 = vector.shape_cast %228 : vector<1x8x8xf32> to vector<8x8xf32>
    %230 = vector.shape_cast %227 : vector<8x8xf32> to vector<1x8x8xf32>
    tpu.vector_store %arg27[%c1_141, %c0_142, %c0_143], %230 {strides = array<i32>} : memref<4x8x8xf32, #tpu.memory_space<vmem>>, vector<1x8x8xf32>,
    %231 = vector.extract_strided_slice %195 {offsets = [0, 16], sizes = [8, 8], strides = [1, 1]} : vector<8x32xf32> to vector<8x8xf32>
    %c2_144 = arith.constant 2 : index
    %c0_145 = arith.constant 0 : index
    %c0_146 = arith.constant 0 : index
    %232 = vector.load %arg25[%c2_144, %c0_145, %c0_146] : memref<4x8x8xf32, #tpu.memory_space<vmem>>, vector<1x8x8xf32>
    %233 = vector.shape_cast %232 : vector<1x8x8xf32> to vector<8x8xf32>
    %234 = vector.shape_cast %231 : vector<8x8xf32> to vector<1x8x8xf32>
    tpu.vector_store %arg25[%c2_144, %c0_145, %c0_146], %234 {strides = array<i32>} : memref<4x8x8xf32, #tpu.memory_space<vmem>>, vector<1x8x8xf32>,
    %235 = vector.extract_strided_slice %202 {offsets = [0, 16], sizes = [8, 8], strides = [1, 1]} : vector<8x32xf32> to vector<8x8xf32>
    %c2_147 = arith.constant 2 : index
    %c0_148 = arith.constant 0 : index
    %c0_149 = arith.constant 0 : index
    %236 = vector.load %arg26[%c2_147, %c0_148, %c0_149] : memref<4x8x8xf32, #tpu.memory_space<vmem>>, vector<1x8x8xf32>
    %237 = vector.shape_cast %236 : vector<1x8x8xf32> to vector<8x8xf32>
    %238 = vector.shape_cast %235 : vector<8x8xf32> to vector<1x8x8xf32>
    tpu.vector_store %arg26[%c2_147, %c0_148, %c0_149], %238 {strides = array<i32>} : memref<4x8x8xf32, #tpu.memory_space<vmem>>, vector<1x8x8xf32>,
    %239 = vector.extract_strided_slice %203 {offsets = [0, 16], sizes = [8, 8], strides = [1, 1]} : vector<8x32xf32> to vector<8x8xf32>
    %c2_150 = arith.constant 2 : index
    %c0_151 = arith.constant 0 : index
    %c0_152 = arith.constant 0 : index
    %240 = vector.load %arg27[%c2_150, %c0_151, %c0_152] : memref<4x8x8xf32, #tpu.memory_space<vmem>>, vector<1x8x8xf32>
    %241 = vector.shape_cast %240 : vector<1x8x8xf32> to vector<8x8xf32>
    %242 = vector.shape_cast %239 : vector<8x8xf32> to vector<1x8x8xf32>
    tpu.vector_store %arg27[%c2_150, %c0_151, %c0_152], %242 {strides = array<i32>} : memref<4x8x8xf32, #tpu.memory_space<vmem>>, vector<1x8x8xf32>,
    %243 = vector.extract_strided_slice %195 {offsets = [0, 24], sizes = [8, 8], strides = [1, 1]} : vector<8x32xf32> to vector<8x8xf32>
    %c3_153 = arith.constant 3 : index
    %c0_154 = arith.constant 0 : index
    %c0_155 = arith.constant 0 : index
    %244 = vector.load %arg25[%c3_153, %c0_154, %c0_155] : memref<4x8x8xf32, #tpu.memory_space<vmem>>, vector<1x8x8xf32>
    %245 = vector.shape_cast %244 : vector<1x8x8xf32> to vector<8x8xf32>
    %246 = vector.shape_cast %243 : vector<8x8xf32> to vector<1x8x8xf32>
    tpu.vector_store %arg25[%c3_153, %c0_154, %c0_155], %246 {strides = array<i32>} : memref<4x8x8xf32, #tpu.memory_space<vmem>>, vector<1x8x8xf32>,
    %247 = vector.extract_strided_slice %202 {offsets = [0, 24], sizes = [8, 8], strides = [1, 1]} : vector<8x32xf32> to vector<8x8xf32>
    %c3_156 = arith.constant 3 : index
    %c0_157 = arith.constant 0 : index
    %c0_158 = arith.constant 0 : index
    %248 = vector.load %arg26[%c3_156, %c0_157, %c0_158] : memref<4x8x8xf32, #tpu.memory_space<vmem>>, vector<1x8x8xf32>
    %249 = vector.shape_cast %248 : vector<1x8x8xf32> to vector<8x8xf32>
    %250 = vector.shape_cast %247 : vector<8x8xf32> to vector<1x8x8xf32>
    tpu.vector_store %arg26[%c3_156, %c0_157, %c0_158], %250 {strides = array<i32>} : memref<4x8x8xf32, #tpu.memory_space<vmem>>, vector<1x8x8xf32>,
    %251 = vector.extract_strided_slice %203 {offsets = [0, 24], sizes = [8, 8], strides = [1, 1]} : vector<8x32xf32> to vector<8x8xf32>
    %c3_159 = arith.constant 3 : index
    %c0_160 = arith.constant 0 : index
    %c0_161 = arith.constant 0 : index
    %252 = vector.load %arg27[%c3_159, %c0_160, %c0_161] : memref<4x8x8xf32, #tpu.memory_space<vmem>>, vector<1x8x8xf32>
    %253 = vector.shape_cast %252 : vector<1x8x8xf32> to vector<8x8xf32>
    %254 = vector.shape_cast %251 : vector<8x8xf32> to vector<1x8x8xf32>
    tpu.vector_store %arg27[%c3_159, %c0_160, %c0_161], %254 {strides = array<i32>} : memref<4x8x8xf32, #tpu.memory_space<vmem>>, vector<1x8x8xf32>,
    %c0_162 = arith.constant 0 : index
    %c0_163 = arith.constant 0 : index
    %c0_164 = arith.constant 0 : index
    %255 = vector.load %arg25[%c0_162, %c0_163, %c0_164] : memref<4x8x8xf32, #tpu.memory_space<vmem>>, vector<4x8x8xf32>
    %256 = arith.truncf %255 : vector<4x8x8xf32> to vector<4x8x8xbf16>
    %c0_165 = arith.constant 0 : index
    %c0_166 = arith.constant 0 : index
    %c0_167 = arith.constant 0 : index
    %257 = vector.load %arg26[%c0_165, %c0_166, %c0_167] : memref<4x8x8xf32, #tpu.memory_space<vmem>>, vector<4x8x8xf32>
    %258 = arith.truncf %257 : vector<4x8x8xf32> to vector<4x8x8xbf16>
    %c0_168 = arith.constant 0 : index
    %c0_169 = arith.constant 0 : index
    %c0_170 = arith.constant 0 : index
    %259 = vector.load %arg27[%c0_168, %c0_169, %c0_170] : memref<4x8x8xf32, #tpu.memory_space<vmem>>, vector<4x8x8xf32>
    %260 = arith.truncf %259 : vector<4x8x8xf32> to vector<4x8x8xbf16>
    %cst_171 = arith.constant dense<0.000000e+00> : vector<4x8x8xf32>
    %261 = tpu.matmul %256, %258, %cst_171 {dimension_numbers = #tpu.dot_dimension_numbers<[2], [2], [1], [1], [0, 0, 0, 1, 1, 1], [0], [0]>} : vector<4x8x8xbf16>, vector<4x8x8xbf16>, vector<4x8x8xf32> -> vector<4x8x8xf32>
    %cst_172 = arith.constant 0.353553385 : f32
    %262 = vector.broadcast %cst_172 : f32 to vector<4x8x8xf32>
    %263 = arith.mulf %261, %262 : vector<4x8x8xf32>
    %264 = vector.shape_cast %13 : vector<8x8xf32> to vector<1x8x8xf32>
    %cst_173 = arith.constant 0.000000e+00 : f32
    %265 = vector.broadcast %cst_173 : f32 to vector<1x8x8xf32>
    %266 = arith.cmpf oeq, %264, %265 : vector<1x8x8xf32>
    %cst_174 = arith.constant -1.000000e+09 : f32
    %267 = vector.shape_cast %266 : vector<1x8x8xi1> to vector<1x8x8xi1>
    %268 = vector.broadcast %267 : vector<1x8x8xi1> to vector<4x8x8xi1>
    %269 = vector.broadcast %cst_174 : f32 to vector<4x8x8xf32>
    %270 = arith.select %268, %269, %263 : vector<4x8x8xi1>, vector<4x8x8xf32>
    %cst_175 = arith.constant dense<0xFF800000> : vector<4x8xf32>
    %271 = vector.multi_reduction <maximumf>, %270, %cst_175 [2] : vector<4x8x8xf32> to vector<4x8xf32>
    %272 = vector.shape_cast %271 : vector<4x8xf32> to vector<4x8x1xf32>
    %273 = vector.broadcast %272 : vector<4x8x1xf32> to vector<4x8x8xf32>
    %274 = arith.subf %270, %273 : vector<4x8x8xf32>
    %275 = math.exp %274 : vector<4x8x8xf32>
    %cst_176 = arith.constant dense<0.000000e+00> : vector<4x8xf32>
    %276 = vector.multi_reduction <add>, %275, %cst_176 [2] : vector<4x8x8xf32> to vector<4x8xf32>
    %277 = vector.shape_cast %276 : vector<4x8xf32> to vector<4x8x1xf32>
    %278 = vector.broadcast %277 : vector<4x8x1xf32> to vector<4x8x8xf32>
    %279 = arith.divf %275, %278 : vector<4x8x8xf32>
    %280 = arith.truncf %279 : vector<4x8x8xf32> to vector<4x8x8xbf16>
    %cst_177 = arith.constant dense<0.000000e+00> : vector<4x8x8xf32>
    %281 = tpu.matmul %280, %260, %cst_177 {dimension_numbers = #tpu.dot_dimension_numbers<[2], [1], [1], [2], [0, 0, 0, 1, 1, 2], [0], [0]>} : vector<4x8x8xbf16>, vector<4x8x8xbf16>, vector<4x8x8xf32> -> vector<4x8x8xf32>
    %282 = vector.extract_strided_slice %279 {offsets = [0, 0, 0], sizes = [1, 8, 8], strides = [1, 1, 1]} : vector<4x8x8xf32> to vector<1x8x8xf32>
    %283 = vector.shape_cast %282 : vector<1x8x8xf32> to vector<8x8xf32>
    %c0_178 = arith.constant 0 : index
    %c0_179 = arith.constant 0 : index
    %c32 = arith.constant 32 : index
    %284 = vector.load %arg24[%c0_178, %c0_179, %c32] : memref<1x8x128xf32, #tpu.memory_space<vmem>>, vector<1x8x8xf32>
    %285 = vector.shape_cast %284 : vector<1x8x8xf32> to vector<8x8xf32>
    %286 = vector.shape_cast %283 : vector<8x8xf32> to vector<1x8x8xf32>
    tpu.vector_store %arg24[%c0_178, %c0_179, %c32], %286 {strides = array<i32>} : memref<1x8x128xf32, #tpu.memory_space<vmem>>, vector<1x8x8xf32>,
    %287 = vector.extract_strided_slice %281 {offsets = [0, 0, 0], sizes = [1, 8, 8], strides = [1, 1, 1]} : vector<4x8x8xf32> to vector<1x8x8xf32>
    %288 = vector.shape_cast %287 : vector<1x8x8xf32> to vector<8x8xf32>
    %c0_180 = arith.constant 0 : index
    %c0_181 = arith.constant 0 : index
    %289 = vector.load %arg28[%c0_180, %c0_181] : memref<8x32xf32, #tpu.memory_space<vmem>>, vector<8x8xf32>
    tpu.vector_store %arg28[%c0_180, %c0_181], %288 {strides = array<i32>} : memref<8x32xf32, #tpu.memory_space<vmem>>, vector<8x8xf32>,
    %290 = vector.extract_strided_slice %279 {offsets = [1, 0, 0], sizes = [1, 8, 8], strides = [1, 1, 1]} : vector<4x8x8xf32> to vector<1x8x8xf32>
    %291 = vector.shape_cast %290 : vector<1x8x8xf32> to vector<8x8xf32>
    %c0_182 = arith.constant 0 : index
    %c0_183 = arith.constant 0 : index
    %c40 = arith.constant 40 : index
    %292 = vector.load %arg24[%c0_182, %c0_183, %c40] : memref<1x8x128xf32, #tpu.memory_space<vmem>>, vector<1x8x8xf32>
    %293 = vector.shape_cast %292 : vector<1x8x8xf32> to vector<8x8xf32>
    %294 = vector.shape_cast %291 : vector<8x8xf32> to vector<1x8x8xf32>
    tpu.vector_store %arg24[%c0_182, %c0_183, %c40], %294 {strides = array<i32>} : memref<1x8x128xf32, #tpu.memory_space<vmem>>, vector<1x8x8xf32>,
    %295 = vector.extract_strided_slice %281 {offsets = [1, 0, 0], sizes = [1, 8, 8], strides = [1, 1, 1]} : vector<4x8x8xf32> to vector<1x8x8xf32>
    %296 = vector.shape_cast %295 : vector<1x8x8xf32> to vector<8x8xf32>
    %c0_184 = arith.constant 0 : index
    %c8_185 = arith.constant 8 : index
    %297 = vector.load %arg28[%c0_184, %c8_185] : memref<8x32xf32, #tpu.memory_space<vmem>>, vector<8x8xf32>
    tpu.vector_store %arg28[%c0_184, %c8_185], %296 {strides = array<i32>} : memref<8x32xf32, #tpu.memory_space<vmem>>, vector<8x8xf32>,
    %298 = vector.extract_strided_slice %279 {offsets = [2, 0, 0], sizes = [1, 8, 8], strides = [1, 1, 1]} : vector<4x8x8xf32> to vector<1x8x8xf32>
    %299 = vector.shape_cast %298 : vector<1x8x8xf32> to vector<8x8xf32>
    %c0_186 = arith.constant 0 : index
    %c0_187 = arith.constant 0 : index
    %c48 = arith.constant 48 : index
    %300 = vector.load %arg24[%c0_186, %c0_187, %c48] : memref<1x8x128xf32, #tpu.memory_space<vmem>>, vector<1x8x8xf32>
    %301 = vector.shape_cast %300 : vector<1x8x8xf32> to vector<8x8xf32>
    %302 = vector.shape_cast %299 : vector<8x8xf32> to vector<1x8x8xf32>
    tpu.vector_store %arg24[%c0_186, %c0_187, %c48], %302 {strides = array<i32>} : memref<1x8x128xf32, #tpu.memory_space<vmem>>, vector<1x8x8xf32>,
    %303 = vector.extract_strided_slice %281 {offsets = [2, 0, 0], sizes = [1, 8, 8], strides = [1, 1, 1]} : vector<4x8x8xf32> to vector<1x8x8xf32>
    %304 = vector.shape_cast %303 : vector<1x8x8xf32> to vector<8x8xf32>
    %c0_188 = arith.constant 0 : index
    %c16_189 = arith.constant 16 : index
    %305 = vector.load %arg28[%c0_188, %c16_189] : memref<8x32xf32, #tpu.memory_space<vmem>>, vector<8x8xf32>
    tpu.vector_store %arg28[%c0_188, %c16_189], %304 {strides = array<i32>} : memref<8x32xf32, #tpu.memory_space<vmem>>, vector<8x8xf32>,
    %306 = vector.extract_strided_slice %279 {offsets = [3, 0, 0], sizes = [1, 8, 8], strides = [1, 1, 1]} : vector<4x8x8xf32> to vector<1x8x8xf32>
    %307 = vector.shape_cast %306 : vector<1x8x8xf32> to vector<8x8xf32>
    %c0_190 = arith.constant 0 : index
    %c0_191 = arith.constant 0 : index
    %c56 = arith.constant 56 : index
    %308 = vector.load %arg24[%c0_190, %c0_191, %c56] : memref<1x8x128xf32, #tpu.memory_space<vmem>>, vector<1x8x8xf32>
    %309 = vector.shape_cast %308 : vector<1x8x8xf32> to vector<8x8xf32>
    %310 = vector.shape_cast %307 : vector<8x8xf32> to vector<1x8x8xf32>
    tpu.vector_store %arg24[%c0_190, %c0_191, %c56], %310 {strides = array<i32>} : memref<1x8x128xf32, #tpu.memory_space<vmem>>, vector<1x8x8xf32>,
    %311 = vector.extract_strided_slice %281 {offsets = [3, 0, 0], sizes = [1, 8, 8], strides = [1, 1, 1]} : vector<4x8x8xf32> to vector<1x8x8xf32>
    %312 = vector.shape_cast %311 : vector<1x8x8xf32> to vector<8x8xf32>
    %c0_192 = arith.constant 0 : index
    %c24_193 = arith.constant 24 : index
    %313 = vector.load %arg28[%c0_192, %c24_193] : memref<8x32xf32, #tpu.memory_space<vmem>>, vector<8x8xf32>
    tpu.vector_store %arg28[%c0_192, %c24_193], %312 {strides = array<i32>} : memref<8x32xf32, #tpu.memory_space<vmem>>, vector<8x8xf32>,
    %c0_194 = arith.constant 0 : index
    %c0_195 = arith.constant 0 : index
    %314 = vector.load %arg28[%c0_194, %c0_195] : memref<8x32xf32, #tpu.memory_space<vmem>>, vector<8x32xf32>
    %315 = arith.truncf %314 : vector<8x32xf32> to vector<8x32xbf16>
    %cst_196 = arith.constant dense<0.000000e+00> : vector<8x32xf32>
    %316 = tpu.matmul %315, %205, %cst_196 {dimension_numbers = #tpu.dot_dimension_numbers<[1], [0], [0], [1], [0, 0, 1, 1], [], []>} : vector<8x32xbf16>, vector<32x32xbf16>, vector<8x32xf32> -> vector<8x32xf32>
    %317 = vector.broadcast %206 : vector<1x32xf32> to vector<8x32xf32>
    %318 = arith.addf %316, %317 : vector<8x32xf32>
    %319 = arith.addf %164, %318 : vector<8x32xf32>
    %c2_197 = arith.constant 2 : index
    %c0_198 = arith.constant 0 : index
    %320 = vector.load %arg7[%c2_197, %c0_198] : memref<6x32xf32, #tpu.memory_space<vmem>>, vector<1x32xf32>
    %c2_199 = arith.constant 2 : index
    %c0_200 = arith.constant 0 : index
    %321 = vector.load %arg8[%c2_199, %c0_200] : memref<6x32xf32, #tpu.memory_space<vmem>>, vector<1x32xf32>
    %cst_201 = arith.constant dense<0.000000e+00> : vector<8xf32>
    %322 = vector.multi_reduction <add>, %319, %cst_201 [1] : vector<8x32xf32> to vector<8xf32>
    %323 = vector.shape_cast %322 : vector<8xf32> to vector<8x1xf32>
    %cst_202 = arith.constant 3.200000e+01 : f32
    %324 = vector.broadcast %cst_202 : f32 to vector<8x1xf32>
    %325 = arith.divf %323, %324 : vector<8x1xf32>
    %326 = vector.broadcast %325 : vector<8x1xf32> to vector<8x32xf32>
    %327 = arith.subf %319, %326 : vector<8x32xf32>
    %328 = arith.mulf %327, %327 : vector<8x32xf32>
    %cst_203 = arith.constant dense<0.000000e+00> : vector<8xf32>
    %329 = vector.multi_reduction <add>, %328, %cst_203 [1] : vector<8x32xf32> to vector<8xf32>
    %330 = vector.shape_cast %329 : vector<8xf32> to vector<8x1xf32>
    %cst_204 = arith.constant 0.0322580636 : f32
    %331 = vector.broadcast %cst_204 : f32 to vector<8x1xf32>
    %332 = arith.mulf %330, %331 : vector<8x1xf32>
    %333 = vector.broadcast %320 : vector<1x32xf32> to vector<8x32xf32>
    %334 = arith.mulf %333, %327 : vector<8x32xf32>
    %335 = math.sqrt %332 : vector<8x1xf32>
    %cst_205 = arith.constant 9.99999997E-7 : f32
    %336 = vector.broadcast %cst_205 : f32 to vector<8x1xf32>
    %337 = arith.addf %335, %336 : vector<8x1xf32>
    %338 = vector.broadcast %337 : vector<8x1xf32> to vector<8x32xf32>
    %339 = arith.divf %334, %338 : vector<8x32xf32>
    %340 = vector.broadcast %321 : vector<1x32xf32> to vector<8x32xf32>
    %341 = arith.addf %339, %340 : vector<8x32xf32>
    %342 = arith.truncf %341 : vector<8x32xf32> to vector<8x32xbf16>
    %c0_206 = arith.constant 0 : index
    %c0_207 = arith.constant 0 : index
    %c0_208 = arith.constant 0 : index
    %343 = vector.load %arg17[%c0_206, %c0_207, %c0_208] : memref<2x32x64xbf16, #tpu.memory_space<vmem>>, vector<1x32x64xbf16>
    %344 = vector.shape_cast %343 : vector<1x32x64xbf16> to vector<32x64xbf16>
    %cst_209 = arith.constant dense<0.000000e+00> : vector<8x64xf32>
    %345 = tpu.matmul %342, %344, %cst_209 {dimension_numbers = #tpu.dot_dimension_numbers<[1], [0], [0], [1], [0, 0, 1, 1], [], []>} : vector<8x32xbf16>, vector<32x64xbf16>, vector<8x64xf32> -> vector<8x64xf32>
    %c0_210 = arith.constant 0 : index
    %c0_211 = arith.constant 0 : index
    %346 = vector.load %arg18[%c0_210, %c0_211] : memref<2x64xf32, #tpu.memory_space<vmem>>, vector<1x64xf32>
    %347 = vector.broadcast %346 : vector<1x64xf32> to vector<8x64xf32>
    %348 = arith.addf %345, %347 : vector<8x64xf32>
    %cst_212 = arith.constant 0.000000e+00 : f32
    %349 = vector.broadcast %cst_212 : f32 to vector<8x64xf32>
    %350 = arith.maximumf %348, %349 : vector<8x64xf32>
    %351 = arith.truncf %350 : vector<8x64xf32> to vector<8x64xbf16>
    %c0_213 = arith.constant 0 : index
    %c0_214 = arith.constant 0 : index
    %c0_215 = arith.constant 0 : index
    %352 = vector.load %arg19[%c0_213, %c0_214, %c0_215] : memref<2x64x32xbf16, #tpu.memory_space<vmem>>, vector<1x64x32xbf16>
    %353 = vector.shape_cast %352 : vector<1x64x32xbf16> to vector<64x32xbf16>
    %cst_216 = arith.constant dense<0.000000e+00> : vector<8x32xf32>
    %354 = tpu.matmul %351, %353, %cst_216 {dimension_numbers = #tpu.dot_dimension_numbers<[1], [0], [0], [1], [0, 0, 1, 1], [], []>} : vector<8x64xbf16>, vector<64x32xbf16>, vector<8x32xf32> -> vector<8x32xf32>
    %355 = arith.addf %319, %354 : vector<8x32xf32>
    %c0_217 = arith.constant 0 : index
    %c0_218 = arith.constant 0 : index
    %356 = vector.load %arg20[%c0_217, %c0_218] : memref<2x32xf32, #tpu.memory_space<vmem>>, vector<1x32xf32>
    %357 = vector.broadcast %356 : vector<1x32xf32> to vector<8x32xf32>
    %358 = arith.addf %355, %357 : vector<8x32xf32>
    %c3_219 = arith.constant 3 : index
    %c0_220 = arith.constant 0 : index
    %359 = vector.load %arg7[%c3_219, %c0_220] : memref<6x32xf32, #tpu.memory_space<vmem>>, vector<1x32xf32>
    %c3_221 = arith.constant 3 : index
    %c0_222 = arith.constant 0 : index
    %360 = vector.load %arg8[%c3_221, %c0_222] : memref<6x32xf32, #tpu.memory_space<vmem>>, vector<1x32xf32>
    %cst_223 = arith.constant dense<0.000000e+00> : vector<8xf32>
    %361 = vector.multi_reduction <add>, %358, %cst_223 [1] : vector<8x32xf32> to vector<8xf32>
    %362 = vector.shape_cast %361 : vector<8xf32> to vector<8x1xf32>
    %cst_224 = arith.constant 3.200000e+01 : f32
    %363 = vector.broadcast %cst_224 : f32 to vector<8x1xf32>
    %364 = arith.divf %362, %363 : vector<8x1xf32>
    %365 = vector.broadcast %364 : vector<8x1xf32> to vector<8x32xf32>
    %366 = arith.subf %358, %365 : vector<8x32xf32>
    %367 = arith.mulf %366, %366 : vector<8x32xf32>
    %cst_225 = arith.constant dense<0.000000e+00> : vector<8xf32>
    %368 = vector.multi_reduction <add>, %367, %cst_225 [1] : vector<8x32xf32> to vector<8xf32>
    %369 = vector.shape_cast %368 : vector<8xf32> to vector<8x1xf32>
    %cst_226 = arith.constant 0.0322580636 : f32
    %370 = vector.broadcast %cst_226 : f32 to vector<8x1xf32>
    %371 = arith.mulf %369, %370 : vector<8x1xf32>
    %372 = vector.broadcast %359 : vector<1x32xf32> to vector<8x32xf32>
    %373 = arith.mulf %372, %366 : vector<8x32xf32>
    %374 = math.sqrt %371 : vector<8x1xf32>
    %cst_227 = arith.constant 9.99999997E-7 : f32
    %375 = vector.broadcast %cst_227 : f32 to vector<8x1xf32>
    %376 = arith.addf %374, %375 : vector<8x1xf32>
    %377 = vector.broadcast %376 : vector<8x1xf32> to vector<8x32xf32>
    %378 = arith.divf %373, %377 : vector<8x32xf32>
    %379 = vector.broadcast %360 : vector<1x32xf32> to vector<8x32xf32>
    %380 = arith.addf %378, %379 : vector<8x32xf32>
    %381 = arith.truncf %380 : vector<8x32xf32> to vector<8x32xbf16>
    %c1_228 = arith.constant 1 : index
    %c0_229 = arith.constant 0 : index
    %c0_230 = arith.constant 0 : index
    %382 = vector.load %arg9[%c1_228, %c0_229, %c0_230] : memref<2x32x96xbf16, #tpu.memory_space<vmem>>, vector<1x32x96xbf16>
    %383 = vector.shape_cast %382 : vector<1x32x96xbf16> to vector<32x96xbf16>
    %cst_231 = arith.constant dense<0.000000e+00> : vector<8x96xf32>
    %384 = tpu.matmul %381, %383, %cst_231 {dimension_numbers = #tpu.dot_dimension_numbers<[1], [0], [0], [1], [0, 0, 1, 1], [], []>} : vector<8x32xbf16>, vector<32x96xbf16>, vector<8x96xf32> -> vector<8x96xf32>
    %c1_232 = arith.constant 1 : index
    %c0_233 = arith.constant 0 : index
    %385 = vector.load %arg10[%c1_232, %c0_233] : memref<2x96xf32, #tpu.memory_space<vmem>>, vector<1x96xf32>
    %386 = vector.broadcast %385 : vector<1x96xf32> to vector<8x96xf32>
    %387 = arith.addf %384, %386 : vector<8x96xf32>
    %388 = vector.extract_strided_slice %387 {offsets = [0, 0], sizes = [8, 32], strides = [1, 1]} : vector<8x96xf32> to vector<8x32xf32>
    %389 = vector.extract_strided_slice %387 {offsets = [0, 32], sizes = [8, 32], strides = [1, 1]} : vector<8x96xf32> to vector<8x32xf32>
    %390 = vector.extract_strided_slice %387 {offsets = [0, 64], sizes = [8, 32], strides = [1, 1]} : vector<8x96xf32> to vector<8x32xf32>
    %c1_234 = arith.constant 1 : index
    %c0_235 = arith.constant 0 : index
    %c0_236 = arith.constant 0 : index
    %391 = vector.load %arg11[%c1_234, %c0_235, %c0_236] : memref<2x32x32xbf16, #tpu.memory_space<vmem>>, vector<1x32x32xbf16>
    %392 = vector.shape_cast %391 : vector<1x32x32xbf16> to vector<32x32xbf16>
    %c1_237 = arith.constant 1 : index
    %c0_238 = arith.constant 0 : index
    %393 = vector.load %arg12[%c1_237, %c0_238] : memref<2x32xf32, #tpu.memory_space<vmem>>, vector<1x32xf32>
    %394 = vector.extract_strided_slice %388 {offsets = [0, 0], sizes = [8, 8], strides = [1, 1]} : vector<8x32xf32> to vector<8x8xf32>
    %c0_239 = arith.constant 0 : index
    %c0_240 = arith.constant 0 : index
    %c0_241 = arith.constant 0 : index
    %395 = vector.load %arg25[%c0_239, %c0_240, %c0_241] : memref<4x8x8xf32, #tpu.memory_space<vmem>>, vector<1x8x8xf32>
    %396 = vector.shape_cast %395 : vector<1x8x8xf32> to vector<8x8xf32>
    %397 = vector.shape_cast %394 : vector<8x8xf32> to vector<1x8x8xf32>
    tpu.vector_store %arg25[%c0_239, %c0_240, %c0_241], %397 {strides = array<i32>} : memref<4x8x8xf32, #tpu.memory_space<vmem>>, vector<1x8x8xf32>,
    %398 = vector.extract_strided_slice %389 {offsets = [0, 0], sizes = [8, 8], strides = [1, 1]} : vector<8x32xf32> to vector<8x8xf32>
    %c0_242 = arith.constant 0 : index
    %c0_243 = arith.constant 0 : index
    %c0_244 = arith.constant 0 : index
    %399 = vector.load %arg26[%c0_242, %c0_243, %c0_244] : memref<4x8x8xf32, #tpu.memory_space<vmem>>, vector<1x8x8xf32>
    %400 = vector.shape_cast %399 : vector<1x8x8xf32> to vector<8x8xf32>
    %401 = vector.shape_cast %398 : vector<8x8xf32> to vector<1x8x8xf32>
    tpu.vector_store %arg26[%c0_242, %c0_243, %c0_244], %401 {strides = array<i32>} : memref<4x8x8xf32, #tpu.memory_space<vmem>>, vector<1x8x8xf32>,
    %402 = vector.extract_strided_slice %390 {offsets = [0, 0], sizes = [8, 8], strides = [1, 1]} : vector<8x32xf32> to vector<8x8xf32>
    %c0_245 = arith.constant 0 : index
    %c0_246 = arith.constant 0 : index
    %c0_247 = arith.constant 0 : index
    %403 = vector.load %arg27[%c0_245, %c0_246, %c0_247] : memref<4x8x8xf32, #tpu.memory_space<vmem>>, vector<1x8x8xf32>
    %404 = vector.shape_cast %403 : vector<1x8x8xf32> to vector<8x8xf32>
    %405 = vector.shape_cast %402 : vector<8x8xf32> to vector<1x8x8xf32>
    tpu.vector_store %arg27[%c0_245, %c0_246, %c0_247], %405 {strides = array<i32>} : memref<4x8x8xf32, #tpu.memory_space<vmem>>, vector<1x8x8xf32>,
    %406 = vector.extract_strided_slice %388 {offsets = [0, 8], sizes = [8, 8], strides = [1, 1]} : vector<8x32xf32> to vector<8x8xf32>
    %c1_248 = arith.constant 1 : index
    %c0_249 = arith.constant 0 : index
    %c0_250 = arith.constant 0 : index
    %407 = vector.load %arg25[%c1_248, %c0_249, %c0_250] : memref<4x8x8xf32, #tpu.memory_space<vmem>>, vector<1x8x8xf32>
    %408 = vector.shape_cast %407 : vector<1x8x8xf32> to vector<8x8xf32>
    %409 = vector.shape_cast %406 : vector<8x8xf32> to vector<1x8x8xf32>
    tpu.vector_store %arg25[%c1_248, %c0_249, %c0_250], %409 {strides = array<i32>} : memref<4x8x8xf32, #tpu.memory_space<vmem>>, vector<1x8x8xf32>,
    %410 = vector.extract_strided_slice %389 {offsets = [0, 8], sizes = [8, 8], strides = [1, 1]} : vector<8x32xf32> to vector<8x8xf32>
    %c1_251 = arith.constant 1 : index
    %c0_252 = arith.constant 0 : index
    %c0_253 = arith.constant 0 : index
    %411 = vector.load %arg26[%c1_251, %c0_252, %c0_253] : memref<4x8x8xf32, #tpu.memory_space<vmem>>, vector<1x8x8xf32>
    %412 = vector.shape_cast %411 : vector<1x8x8xf32> to vector<8x8xf32>
    %413 = vector.shape_cast %410 : vector<8x8xf32> to vector<1x8x8xf32>
    tpu.vector_store %arg26[%c1_251, %c0_252, %c0_253], %413 {strides = array<i32>} : memref<4x8x8xf32, #tpu.memory_space<vmem>>, vector<1x8x8xf32>,
    %414 = vector.extract_strided_slice %390 {offsets = [0, 8], sizes = [8, 8], strides = [1, 1]} : vector<8x32xf32> to vector<8x8xf32>
    %c1_254 = arith.constant 1 : index
    %c0_255 = arith.constant 0 : index
    %c0_256 = arith.constant 0 : index
    %415 = vector.load %arg27[%c1_254, %c0_255, %c0_256] : memref<4x8x8xf32, #tpu.memory_space<vmem>>, vector<1x8x8xf32>
    %416 = vector.shape_cast %415 : vector<1x8x8xf32> to vector<8x8xf32>
    %417 = vector.shape_cast %414 : vector<8x8xf32> to vector<1x8x8xf32>
    tpu.vector_store %arg27[%c1_254, %c0_255, %c0_256], %417 {strides = array<i32>} : memref<4x8x8xf32, #tpu.memory_space<vmem>>, vector<1x8x8xf32>,
    %418 = vector.extract_strided_slice %388 {offsets = [0, 16], sizes = [8, 8], strides = [1, 1]} : vector<8x32xf32> to vector<8x8xf32>
    %c2_257 = arith.constant 2 : index
    %c0_258 = arith.constant 0 : index
    %c0_259 = arith.constant 0 : index
    %419 = vector.load %arg25[%c2_257, %c0_258, %c0_259] : memref<4x8x8xf32, #tpu.memory_space<vmem>>, vector<1x8x8xf32>
    %420 = vector.shape_cast %419 : vector<1x8x8xf32> to vector<8x8xf32>
    %421 = vector.shape_cast %418 : vector<8x8xf32> to vector<1x8x8xf32>
    tpu.vector_store %arg25[%c2_257, %c0_258, %c0_259], %421 {strides = array<i32>} : memref<4x8x8xf32, #tpu.memory_space<vmem>>, vector<1x8x8xf32>,
    %422 = vector.extract_strided_slice %389 {offsets = [0, 16], sizes = [8, 8], strides = [1, 1]} : vector<8x32xf32> to vector<8x8xf32>
    %c2_260 = arith.constant 2 : index
    %c0_261 = arith.constant 0 : index
    %c0_262 = arith.constant 0 : index
    %423 = vector.load %arg26[%c2_260, %c0_261, %c0_262] : memref<4x8x8xf32, #tpu.memory_space<vmem>>, vector<1x8x8xf32>
    %424 = vector.shape_cast %423 : vector<1x8x8xf32> to vector<8x8xf32>
    %425 = vector.shape_cast %422 : vector<8x8xf32> to vector<1x8x8xf32>
    tpu.vector_store %arg26[%c2_260, %c0_261, %c0_262], %425 {strides = array<i32>} : memref<4x8x8xf32, #tpu.memory_space<vmem>>, vector<1x8x8xf32>,
    %426 = vector.extract_strided_slice %390 {offsets = [0, 16], sizes = [8, 8], strides = [1, 1]} : vector<8x32xf32> to vector<8x8xf32>
    %c2_263 = arith.constant 2 : index
    %c0_264 = arith.constant 0 : index
    %c0_265 = arith.constant 0 : index
    %427 = vector.load %arg27[%c2_263, %c0_264, %c0_265] : memref<4x8x8xf32, #tpu.memory_space<vmem>>, vector<1x8x8xf32>
    %428 = vector.shape_cast %427 : vector<1x8x8xf32> to vector<8x8xf32>
    %429 = vector.shape_cast %426 : vector<8x8xf32> to vector<1x8x8xf32>
    tpu.vector_store %arg27[%c2_263, %c0_264, %c0_265], %429 {strides = array<i32>} : memref<4x8x8xf32, #tpu.memory_space<vmem>>, vector<1x8x8xf32>,
    %430 = vector.extract_strided_slice %388 {offsets = [0, 24], sizes = [8, 8], strides = [1, 1]} : vector<8x32xf32> to vector<8x8xf32>
    %c3_266 = arith.constant 3 : index
    %c0_267 = arith.constant 0 : index
    %c0_268 = arith.constant 0 : index
    %431 = vector.load %arg25[%c3_266, %c0_267, %c0_268] : memref<4x8x8xf32, #tpu.memory_space<vmem>>, vector<1x8x8xf32>
    %432 = vector.shape_cast %431 : vector<1x8x8xf32> to vector<8x8xf32>
    %433 = vector.shape_cast %430 : vector<8x8xf32> to vector<1x8x8xf32>
    tpu.vector_store %arg25[%c3_266, %c0_267, %c0_268], %433 {strides = array<i32>} : memref<4x8x8xf32, #tpu.memory_space<vmem>>, vector<1x8x8xf32>,
    %434 = vector.extract_strided_slice %389 {offsets = [0, 24], sizes = [8, 8], strides = [1, 1]} : vector<8x32xf32> to vector<8x8xf32>
    %c3_269 = arith.constant 3 : index
    %c0_270 = arith.constant 0 : index
    %c0_271 = arith.constant 0 : index
    %435 = vector.load %arg26[%c3_269, %c0_270, %c0_271] : memref<4x8x8xf32, #tpu.memory_space<vmem>>, vector<1x8x8xf32>
    %436 = vector.shape_cast %435 : vector<1x8x8xf32> to vector<8x8xf32>
    %437 = vector.shape_cast %434 : vector<8x8xf32> to vector<1x8x8xf32>
    tpu.vector_store %arg26[%c3_269, %c0_270, %c0_271], %437 {strides = array<i32>} : memref<4x8x8xf32, #tpu.memory_space<vmem>>, vector<1x8x8xf32>,
    %438 = vector.extract_strided_slice %390 {offsets = [0, 24], sizes = [8, 8], strides = [1, 1]} : vector<8x32xf32> to vector<8x8xf32>
    %c3_272 = arith.constant 3 : index
    %c0_273 = arith.constant 0 : index
    %c0_274 = arith.constant 0 : index
    %439 = vector.load %arg27[%c3_272, %c0_273, %c0_274] : memref<4x8x8xf32, #tpu.memory_space<vmem>>, vector<1x8x8xf32>
    %440 = vector.shape_cast %439 : vector<1x8x8xf32> to vector<8x8xf32>
    %441 = vector.shape_cast %438 : vector<8x8xf32> to vector<1x8x8xf32>
    tpu.vector_store %arg27[%c3_272, %c0_273, %c0_274], %441 {strides = array<i32>} : memref<4x8x8xf32, #tpu.memory_space<vmem>>, vector<1x8x8xf32>,
    %c0_275 = arith.constant 0 : index
    %c0_276 = arith.constant 0 : index
    %c0_277 = arith.constant 0 : index
    %442 = vector.load %arg25[%c0_275, %c0_276, %c0_277] : memref<4x8x8xf32, #tpu.memory_space<vmem>>, vector<4x8x8xf32>
    %443 = arith.truncf %442 : vector<4x8x8xf32> to vector<4x8x8xbf16>
    %c0_278 = arith.constant 0 : index
    %c0_279 = arith.constant 0 : index
    %c0_280 = arith.constant 0 : index
    %444 = vector.load %arg26[%c0_278, %c0_279, %c0_280] : memref<4x8x8xf32, #tpu.memory_space<vmem>>, vector<4x8x8xf32>
    %445 = arith.truncf %444 : vector<4x8x8xf32> to vector<4x8x8xbf16>
    %c0_281 = arith.constant 0 : index
    %c0_282 = arith.constant 0 : index
    %c0_283 = arith.constant 0 : index
    %446 = vector.load %arg27[%c0_281, %c0_282, %c0_283] : memref<4x8x8xf32, #tpu.memory_space<vmem>>, vector<4x8x8xf32>
    %447 = arith.truncf %446 : vector<4x8x8xf32> to vector<4x8x8xbf16>
    %cst_284 = arith.constant dense<0.000000e+00> : vector<4x8x8xf32>
    %448 = tpu.matmul %443, %445, %cst_284 {dimension_numbers = #tpu.dot_dimension_numbers<[2], [2], [1], [1], [0, 0, 0, 1, 1, 1], [0], [0]>} : vector<4x8x8xbf16>, vector<4x8x8xbf16>, vector<4x8x8xf32> -> vector<4x8x8xf32>
    %cst_285 = arith.constant 0.353553385 : f32
    %449 = vector.broadcast %cst_285 : f32 to vector<4x8x8xf32>
    %450 = arith.mulf %448, %449 : vector<4x8x8xf32>
    %451 = vector.shape_cast %9 : vector<8x8xf32> to vector<1x8x8xf32>
    %452 = vector.broadcast %451 : vector<1x8x8xf32> to vector<4x8x8xf32>
    %453 = arith.addf %450, %452 : vector<4x8x8xf32>
    %454 = vector.shape_cast %11 : vector<8x8xf32> to vector<1x8x8xf32>
    %cst_286 = arith.constant 0.000000e+00 : f32
    %455 = vector.broadcast %cst_286 : f32 to vector<1x8x8xf32>
    %456 = arith.cmpf oeq, %454, %455 : vector<1x8x8xf32>
    %cst_287 = arith.constant -1.000000e+09 : f32
    %457 = vector.shape_cast %456 : vector<1x8x8xi1> to vector<1x8x8xi1>
    %458 = vector.broadcast %457 : vector<1x8x8xi1> to vector<4x8x8xi1>
    %459 = vector.broadcast %cst_287 : f32 to vector<4x8x8xf32>
    %460 = arith.select %458, %459, %453 : vector<4x8x8xi1>, vector<4x8x8xf32>
    %cst_288 = arith.constant dense<0xFF800000> : vector<4x8xf32>
    %461 = vector.multi_reduction <maximumf>, %460, %cst_288 [2] : vector<4x8x8xf32> to vector<4x8xf32>
    %462 = vector.shape_cast %461 : vector<4x8xf32> to vector<4x8x1xf32>
    %463 = vector.broadcast %462 : vector<4x8x1xf32> to vector<4x8x8xf32>
    %464 = arith.subf %460, %463 : vector<4x8x8xf32>
    %465 = math.exp %464 : vector<4x8x8xf32>
    %cst_289 = arith.constant dense<0.000000e+00> : vector<4x8xf32>
    %466 = vector.multi_reduction <add>, %465, %cst_289 [2] : vector<4x8x8xf32> to vector<4x8xf32>
    %467 = vector.shape_cast %466 : vector<4x8xf32> to vector<4x8x1xf32>
    %468 = vector.broadcast %467 : vector<4x8x1xf32> to vector<4x8x8xf32>
    %469 = arith.divf %465, %468 : vector<4x8x8xf32>
    %470 = arith.truncf %469 : vector<4x8x8xf32> to vector<4x8x8xbf16>
    %cst_290 = arith.constant dense<0.000000e+00> : vector<4x8x8xf32>
    %471 = tpu.matmul %470, %447, %cst_290 {dimension_numbers = #tpu.dot_dimension_numbers<[2], [1], [1], [2], [0, 0, 0, 1, 1, 2], [0], [0]>} : vector<4x8x8xbf16>, vector<4x8x8xbf16>, vector<4x8x8xf32> -> vector<4x8x8xf32>
    %472 = vector.extract_strided_slice %469 {offsets = [0, 0, 0], sizes = [1, 8, 8], strides = [1, 1, 1]} : vector<4x8x8xf32> to vector<1x8x8xf32>
    %473 = vector.shape_cast %472 : vector<1x8x8xf32> to vector<8x8xf32>
    %c0_291 = arith.constant 0 : index
    %c0_292 = arith.constant 0 : index
    %c64 = arith.constant 64 : index
    %474 = vector.load %arg24[%c0_291, %c0_292, %c64] : memref<1x8x128xf32, #tpu.memory_space<vmem>>, vector<1x8x8xf32>
    %475 = vector.shape_cast %474 : vector<1x8x8xf32> to vector<8x8xf32>
    %476 = vector.shape_cast %473 : vector<8x8xf32> to vector<1x8x8xf32>
    tpu.vector_store %arg24[%c0_291, %c0_292, %c64], %476 {strides = array<i32>} : memref<1x8x128xf32, #tpu.memory_space<vmem>>, vector<1x8x8xf32>,
    %477 = vector.extract_strided_slice %471 {offsets = [0, 0, 0], sizes = [1, 8, 8], strides = [1, 1, 1]} : vector<4x8x8xf32> to vector<1x8x8xf32>
    %478 = vector.shape_cast %477 : vector<1x8x8xf32> to vector<8x8xf32>
    %c0_293 = arith.constant 0 : index
    %c0_294 = arith.constant 0 : index
    %479 = vector.load %arg28[%c0_293, %c0_294] : memref<8x32xf32, #tpu.memory_space<vmem>>, vector<8x8xf32>
    tpu.vector_store %arg28[%c0_293, %c0_294], %478 {strides = array<i32>} : memref<8x32xf32, #tpu.memory_space<vmem>>, vector<8x8xf32>,
    %480 = vector.extract_strided_slice %469 {offsets = [1, 0, 0], sizes = [1, 8, 8], strides = [1, 1, 1]} : vector<4x8x8xf32> to vector<1x8x8xf32>
    %481 = vector.shape_cast %480 : vector<1x8x8xf32> to vector<8x8xf32>
    %c0_295 = arith.constant 0 : index
    %c0_296 = arith.constant 0 : index
    %c72 = arith.constant 72 : index
    %482 = vector.load %arg24[%c0_295, %c0_296, %c72] : memref<1x8x128xf32, #tpu.memory_space<vmem>>, vector<1x8x8xf32>
    %483 = vector.shape_cast %482 : vector<1x8x8xf32> to vector<8x8xf32>
    %484 = vector.shape_cast %481 : vector<8x8xf32> to vector<1x8x8xf32>
    tpu.vector_store %arg24[%c0_295, %c0_296, %c72], %484 {strides = array<i32>} : memref<1x8x128xf32, #tpu.memory_space<vmem>>, vector<1x8x8xf32>,
    %485 = vector.extract_strided_slice %471 {offsets = [1, 0, 0], sizes = [1, 8, 8], strides = [1, 1, 1]} : vector<4x8x8xf32> to vector<1x8x8xf32>
    %486 = vector.shape_cast %485 : vector<1x8x8xf32> to vector<8x8xf32>
    %c0_297 = arith.constant 0 : index
    %c8_298 = arith.constant 8 : index
    %487 = vector.load %arg28[%c0_297, %c8_298] : memref<8x32xf32, #tpu.memory_space<vmem>>, vector<8x8xf32>
    tpu.vector_store %arg28[%c0_297, %c8_298], %486 {strides = array<i32>} : memref<8x32xf32, #tpu.memory_space<vmem>>, vector<8x8xf32>,
    %488 = vector.extract_strided_slice %469 {offsets = [2, 0, 0], sizes = [1, 8, 8], strides = [1, 1, 1]} : vector<4x8x8xf32> to vector<1x8x8xf32>
    %489 = vector.shape_cast %488 : vector<1x8x8xf32> to vector<8x8xf32>
    %c0_299 = arith.constant 0 : index
    %c0_300 = arith.constant 0 : index
    %c80 = arith.constant 80 : index
    %490 = vector.load %arg24[%c0_299, %c0_300, %c80] : memref<1x8x128xf32, #tpu.memory_space<vmem>>, vector<1x8x8xf32>
    %491 = vector.shape_cast %490 : vector<1x8x8xf32> to vector<8x8xf32>
    %492 = vector.shape_cast %489 : vector<8x8xf32> to vector<1x8x8xf32>
    tpu.vector_store %arg24[%c0_299, %c0_300, %c80], %492 {strides = array<i32>} : memref<1x8x128xf32, #tpu.memory_space<vmem>>, vector<1x8x8xf32>,
    %493 = vector.extract_strided_slice %471 {offsets = [2, 0, 0], sizes = [1, 8, 8], strides = [1, 1, 1]} : vector<4x8x8xf32> to vector<1x8x8xf32>
    %494 = vector.shape_cast %493 : vector<1x8x8xf32> to vector<8x8xf32>
    %c0_301 = arith.constant 0 : index
    %c16_302 = arith.constant 16 : index
    %495 = vector.load %arg28[%c0_301, %c16_302] : memref<8x32xf32, #tpu.memory_space<vmem>>, vector<8x8xf32>
    tpu.vector_store %arg28[%c0_301, %c16_302], %494 {strides = array<i32>} : memref<8x32xf32, #tpu.memory_space<vmem>>, vector<8x8xf32>,
    %496 = vector.extract_strided_slice %469 {offsets = [3, 0, 0], sizes = [1, 8, 8], strides = [1, 1, 1]} : vector<4x8x8xf32> to vector<1x8x8xf32>
    %497 = vector.shape_cast %496 : vector<1x8x8xf32> to vector<8x8xf32>
    %c0_303 = arith.constant 0 : index
    %c0_304 = arith.constant 0 : index
    %c88 = arith.constant 88 : index
    %498 = vector.load %arg24[%c0_303, %c0_304, %c88] : memref<1x8x128xf32, #tpu.memory_space<vmem>>, vector<1x8x8xf32>
    %499 = vector.shape_cast %498 : vector<1x8x8xf32> to vector<8x8xf32>
    %500 = vector.shape_cast %497 : vector<8x8xf32> to vector<1x8x8xf32>
    tpu.vector_store %arg24[%c0_303, %c0_304, %c88], %500 {strides = array<i32>} : memref<1x8x128xf32, #tpu.memory_space<vmem>>, vector<1x8x8xf32>,
    %501 = vector.extract_strided_slice %471 {offsets = [3, 0, 0], sizes = [1, 8, 8], strides = [1, 1, 1]} : vector<4x8x8xf32> to vector<1x8x8xf32>
    %502 = vector.shape_cast %501 : vector<1x8x8xf32> to vector<8x8xf32>
    %c0_305 = arith.constant 0 : index
    %c24_306 = arith.constant 24 : index
    %503 = vector.load %arg28[%c0_305, %c24_306] : memref<8x32xf32, #tpu.memory_space<vmem>>, vector<8x8xf32>
    tpu.vector_store %arg28[%c0_305, %c24_306], %502 {strides = array<i32>} : memref<8x32xf32, #tpu.memory_space<vmem>>, vector<8x8xf32>,
    %c0_307 = arith.constant 0 : index
    %c0_308 = arith.constant 0 : index
    %504 = vector.load %arg28[%c0_307, %c0_308] : memref<8x32xf32, #tpu.memory_space<vmem>>, vector<8x32xf32>
    %505 = arith.truncf %504 : vector<8x32xf32> to vector<8x32xbf16>
    %cst_309 = arith.constant dense<0.000000e+00> : vector<8x32xf32>
    %506 = tpu.matmul %505, %392, %cst_309 {dimension_numbers = #tpu.dot_dimension_numbers<[1], [0], [0], [1], [0, 0, 1, 1], [], []>} : vector<8x32xbf16>, vector<32x32xbf16>, vector<8x32xf32> -> vector<8x32xf32>
    %507 = vector.broadcast %393 : vector<1x32xf32> to vector<8x32xf32>
    %508 = arith.addf %506, %507 : vector<8x32xf32>
    %509 = arith.addf %358, %508 : vector<8x32xf32>
    %c4 = arith.constant 4 : index
    %c0_310 = arith.constant 0 : index
    %510 = vector.load %arg7[%c4, %c0_310] : memref<6x32xf32, #tpu.memory_space<vmem>>, vector<1x32xf32>
    %c4_311 = arith.constant 4 : index
    %c0_312 = arith.constant 0 : index
    %511 = vector.load %arg8[%c4_311, %c0_312] : memref<6x32xf32, #tpu.memory_space<vmem>>, vector<1x32xf32>
    %cst_313 = arith.constant dense<0.000000e+00> : vector<8xf32>
    %512 = vector.multi_reduction <add>, %509, %cst_313 [1] : vector<8x32xf32> to vector<8xf32>
    %513 = vector.shape_cast %512 : vector<8xf32> to vector<8x1xf32>
    %cst_314 = arith.constant 3.200000e+01 : f32
    %514 = vector.broadcast %cst_314 : f32 to vector<8x1xf32>
    %515 = arith.divf %513, %514 : vector<8x1xf32>
    %516 = vector.broadcast %515 : vector<8x1xf32> to vector<8x32xf32>
    %517 = arith.subf %509, %516 : vector<8x32xf32>
    %518 = arith.mulf %517, %517 : vector<8x32xf32>
    %cst_315 = arith.constant dense<0.000000e+00> : vector<8xf32>
    %519 = vector.multi_reduction <add>, %518, %cst_315 [1] : vector<8x32xf32> to vector<8xf32>
    %520 = vector.shape_cast %519 : vector<8xf32> to vector<8x1xf32>
    %cst_316 = arith.constant 0.0322580636 : f32
    %521 = vector.broadcast %cst_316 : f32 to vector<8x1xf32>
    %522 = arith.mulf %520, %521 : vector<8x1xf32>
    %523 = vector.broadcast %510 : vector<1x32xf32> to vector<8x32xf32>
    %524 = arith.mulf %523, %517 : vector<8x32xf32>
    %525 = math.sqrt %522 : vector<8x1xf32>
    %cst_317 = arith.constant 9.99999997E-7 : f32
    %526 = vector.broadcast %cst_317 : f32 to vector<8x1xf32>
    %527 = arith.addf %525, %526 : vector<8x1xf32>
    %528 = vector.broadcast %527 : vector<8x1xf32> to vector<8x32xf32>
    %529 = arith.divf %524, %528 : vector<8x32xf32>
    %530 = vector.broadcast %511 : vector<1x32xf32> to vector<8x32xf32>
    %531 = arith.addf %529, %530 : vector<8x32xf32>
    %c1_318 = arith.constant 1 : index
    %c0_319 = arith.constant 0 : index
    %c0_320 = arith.constant 0 : index
    %532 = vector.load %arg13[%c1_318, %c0_319, %c0_320] : memref<2x32x96xbf16, #tpu.memory_space<vmem>>, vector<1x32x96xbf16>
    %533 = vector.shape_cast %532 : vector<1x32x96xbf16> to vector<32x96xbf16>
    %c1_321 = arith.constant 1 : index
    %c0_322 = arith.constant 0 : index
    %534 = vector.load %arg14[%c1_321, %c0_322] : memref<2x96xf32, #tpu.memory_space<vmem>>, vector<1x96xf32>
    %535 = arith.truncf %531 : vector<8x32xf32> to vector<8x32xbf16>
    %536 = vector.extract_strided_slice %533 {offsets = [0, 0], sizes = [32, 32], strides = [1, 1]} : vector<32x96xbf16> to vector<32x32xbf16>
    %cst_323 = arith.constant dense<0.000000e+00> : vector<8x32xf32>
    %537 = tpu.matmul %535, %536, %cst_323 {dimension_numbers = #tpu.dot_dimension_numbers<[1], [0], [0], [1], [0, 0, 1, 1], [], []>} : vector<8x32xbf16>, vector<32x32xbf16>, vector<8x32xf32> -> vector<8x32xf32>
    %538 = vector.extract_strided_slice %534 {offsets = [0, 0], sizes = [1, 32], strides = [1, 1]} : vector<1x96xf32> to vector<1x32xf32>
    %539 = vector.broadcast %538 : vector<1x32xf32> to vector<8x32xf32>
    %540 = arith.addf %537, %539 : vector<8x32xf32>
    %541 = arith.truncf %7 : vector<8x32xf32> to vector<8x32xbf16>
    %542 = vector.extract_strided_slice %533 {offsets = [0, 32], sizes = [32, 64], strides = [1, 1]} : vector<32x96xbf16> to vector<32x64xbf16>
    %cst_324 = arith.constant dense<0.000000e+00> : vector<8x64xf32>
    %543 = tpu.matmul %541, %542, %cst_324 {dimension_numbers = #tpu.dot_dimension_numbers<[1], [0], [0], [1], [0, 0, 1, 1], [], []>} : vector<8x32xbf16>, vector<32x64xbf16>, vector<8x64xf32> -> vector<8x64xf32>
    %544 = vector.extract_strided_slice %534 {offsets = [0, 32], sizes = [1, 64], strides = [1, 1]} : vector<1x96xf32> to vector<1x64xf32>
    %545 = vector.broadcast %544 : vector<1x64xf32> to vector<8x64xf32>
    %546 = arith.addf %543, %545 : vector<8x64xf32>
    %547 = vector.extract_strided_slice %546 {offsets = [0, 0], sizes = [8, 32], strides = [1, 1]} : vector<8x64xf32> to vector<8x32xf32>
    %548 = vector.extract_strided_slice %546 {offsets = [0, 32], sizes = [8, 32], strides = [1, 1]} : vector<8x64xf32> to vector<8x32xf32>
    %c1_325 = arith.constant 1 : index
    %c0_326 = arith.constant 0 : index
    %c0_327 = arith.constant 0 : index
    %549 = vector.load %arg15[%c1_325, %c0_326, %c0_327] : memref<2x32x32xbf16, #tpu.memory_space<vmem>>, vector<1x32x32xbf16>
    %550 = vector.shape_cast %549 : vector<1x32x32xbf16> to vector<32x32xbf16>
    %c1_328 = arith.constant 1 : index
    %c0_329 = arith.constant 0 : index
    %551 = vector.load %arg16[%c1_328, %c0_329] : memref<2x32xf32, #tpu.memory_space<vmem>>, vector<1x32xf32>
    %552 = vector.extract_strided_slice %540 {offsets = [0, 0], sizes = [8, 8], strides = [1, 1]} : vector<8x32xf32> to vector<8x8xf32>
    %c0_330 = arith.constant 0 : index
    %c0_331 = arith.constant 0 : index
    %c0_332 = arith.constant 0 : index
    %553 = vector.load %arg25[%c0_330, %c0_331, %c0_332] : memref<4x8x8xf32, #tpu.memory_space<vmem>>, vector<1x8x8xf32>
    %554 = vector.shape_cast %553 : vector<1x8x8xf32> to vector<8x8xf32>
    %555 = vector.shape_cast %552 : vector<8x8xf32> to vector<1x8x8xf32>
    tpu.vector_store %arg25[%c0_330, %c0_331, %c0_332], %555 {strides = array<i32>} : memref<4x8x8xf32, #tpu.memory_space<vmem>>, vector<1x8x8xf32>,
    %556 = vector.extract_strided_slice %547 {offsets = [0, 0], sizes = [8, 8], strides = [1, 1]} : vector<8x32xf32> to vector<8x8xf32>
    %c0_333 = arith.constant 0 : index
    %c0_334 = arith.constant 0 : index
    %c0_335 = arith.constant 0 : index
    %557 = vector.load %arg26[%c0_333, %c0_334, %c0_335] : memref<4x8x8xf32, #tpu.memory_space<vmem>>, vector<1x8x8xf32>
    %558 = vector.shape_cast %557 : vector<1x8x8xf32> to vector<8x8xf32>
    %559 = vector.shape_cast %556 : vector<8x8xf32> to vector<1x8x8xf32>
    tpu.vector_store %arg26[%c0_333, %c0_334, %c0_335], %559 {strides = array<i32>} : memref<4x8x8xf32, #tpu.memory_space<vmem>>, vector<1x8x8xf32>,
    %560 = vector.extract_strided_slice %548 {offsets = [0, 0], sizes = [8, 8], strides = [1, 1]} : vector<8x32xf32> to vector<8x8xf32>
    %c0_336 = arith.constant 0 : index
    %c0_337 = arith.constant 0 : index
    %c0_338 = arith.constant 0 : index
    %561 = vector.load %arg27[%c0_336, %c0_337, %c0_338] : memref<4x8x8xf32, #tpu.memory_space<vmem>>, vector<1x8x8xf32>
    %562 = vector.shape_cast %561 : vector<1x8x8xf32> to vector<8x8xf32>
    %563 = vector.shape_cast %560 : vector<8x8xf32> to vector<1x8x8xf32>
    tpu.vector_store %arg27[%c0_336, %c0_337, %c0_338], %563 {strides = array<i32>} : memref<4x8x8xf32, #tpu.memory_space<vmem>>, vector<1x8x8xf32>,
    %564 = vector.extract_strided_slice %540 {offsets = [0, 8], sizes = [8, 8], strides = [1, 1]} : vector<8x32xf32> to vector<8x8xf32>
    %c1_339 = arith.constant 1 : index
    %c0_340 = arith.constant 0 : index
    %c0_341 = arith.constant 0 : index
    %565 = vector.load %arg25[%c1_339, %c0_340, %c0_341] : memref<4x8x8xf32, #tpu.memory_space<vmem>>, vector<1x8x8xf32>
    %566 = vector.shape_cast %565 : vector<1x8x8xf32> to vector<8x8xf32>
    %567 = vector.shape_cast %564 : vector<8x8xf32> to vector<1x8x8xf32>
    tpu.vector_store %arg25[%c1_339, %c0_340, %c0_341], %567 {strides = array<i32>} : memref<4x8x8xf32, #tpu.memory_space<vmem>>, vector<1x8x8xf32>,
    %568 = vector.extract_strided_slice %547 {offsets = [0, 8], sizes = [8, 8], strides = [1, 1]} : vector<8x32xf32> to vector<8x8xf32>
    %c1_342 = arith.constant 1 : index
    %c0_343 = arith.constant 0 : index
    %c0_344 = arith.constant 0 : index
    %569 = vector.load %arg26[%c1_342, %c0_343, %c0_344] : memref<4x8x8xf32, #tpu.memory_space<vmem>>, vector<1x8x8xf32>
    %570 = vector.shape_cast %569 : vector<1x8x8xf32> to vector<8x8xf32>
    %571 = vector.shape_cast %568 : vector<8x8xf32> to vector<1x8x8xf32>
    tpu.vector_store %arg26[%c1_342, %c0_343, %c0_344], %571 {strides = array<i32>} : memref<4x8x8xf32, #tpu.memory_space<vmem>>, vector<1x8x8xf32>,
    %572 = vector.extract_strided_slice %548 {offsets = [0, 8], sizes = [8, 8], strides = [1, 1]} : vector<8x32xf32> to vector<8x8xf32>
    %c1_345 = arith.constant 1 : index
    %c0_346 = arith.constant 0 : index
    %c0_347 = arith.constant 0 : index
    %573 = vector.load %arg27[%c1_345, %c0_346, %c0_347] : memref<4x8x8xf32, #tpu.memory_space<vmem>>, vector<1x8x8xf32>
    %574 = vector.shape_cast %573 : vector<1x8x8xf32> to vector<8x8xf32>
    %575 = vector.shape_cast %572 : vector<8x8xf32> to vector<1x8x8xf32>
    tpu.vector_store %arg27[%c1_345, %c0_346, %c0_347], %575 {strides = array<i32>} : memref<4x8x8xf32, #tpu.memory_space<vmem>>, vector<1x8x8xf32>,
    %576 = vector.extract_strided_slice %540 {offsets = [0, 16], sizes = [8, 8], strides = [1, 1]} : vector<8x32xf32> to vector<8x8xf32>
    %c2_348 = arith.constant 2 : index
    %c0_349 = arith.constant 0 : index
    %c0_350 = arith.constant 0 : index
    %577 = vector.load %arg25[%c2_348, %c0_349, %c0_350] : memref<4x8x8xf32, #tpu.memory_space<vmem>>, vector<1x8x8xf32>
    %578 = vector.shape_cast %577 : vector<1x8x8xf32> to vector<8x8xf32>
    %579 = vector.shape_cast %576 : vector<8x8xf32> to vector<1x8x8xf32>
    tpu.vector_store %arg25[%c2_348, %c0_349, %c0_350], %579 {strides = array<i32>} : memref<4x8x8xf32, #tpu.memory_space<vmem>>, vector<1x8x8xf32>,
    %580 = vector.extract_strided_slice %547 {offsets = [0, 16], sizes = [8, 8], strides = [1, 1]} : vector<8x32xf32> to vector<8x8xf32>
    %c2_351 = arith.constant 2 : index
    %c0_352 = arith.constant 0 : index
    %c0_353 = arith.constant 0 : index
    %581 = vector.load %arg26[%c2_351, %c0_352, %c0_353] : memref<4x8x8xf32, #tpu.memory_space<vmem>>, vector<1x8x8xf32>
    %582 = vector.shape_cast %581 : vector<1x8x8xf32> to vector<8x8xf32>
    %583 = vector.shape_cast %580 : vector<8x8xf32> to vector<1x8x8xf32>
    tpu.vector_store %arg26[%c2_351, %c0_352, %c0_353], %583 {strides = array<i32>} : memref<4x8x8xf32, #tpu.memory_space<vmem>>, vector<1x8x8xf32>,
    %584 = vector.extract_strided_slice %548 {offsets = [0, 16], sizes = [8, 8], strides = [1, 1]} : vector<8x32xf32> to vector<8x8xf32>
    %c2_354 = arith.constant 2 : index
    %c0_355 = arith.constant 0 : index
    %c0_356 = arith.constant 0 : index
    %585 = vector.load %arg27[%c2_354, %c0_355, %c0_356] : memref<4x8x8xf32, #tpu.memory_space<vmem>>, vector<1x8x8xf32>
    %586 = vector.shape_cast %585 : vector<1x8x8xf32> to vector<8x8xf32>
    %587 = vector.shape_cast %584 : vector<8x8xf32> to vector<1x8x8xf32>
    tpu.vector_store %arg27[%c2_354, %c0_355, %c0_356], %587 {strides = array<i32>} : memref<4x8x8xf32, #tpu.memory_space<vmem>>, vector<1x8x8xf32>,
    %588 = vector.extract_strided_slice %540 {offsets = [0, 24], sizes = [8, 8], strides = [1, 1]} : vector<8x32xf32> to vector<8x8xf32>
    %c3_357 = arith.constant 3 : index
    %c0_358 = arith.constant 0 : index
    %c0_359 = arith.constant 0 : index
    %589 = vector.load %arg25[%c3_357, %c0_358, %c0_359] : memref<4x8x8xf32, #tpu.memory_space<vmem>>, vector<1x8x8xf32>
    %590 = vector.shape_cast %589 : vector<1x8x8xf32> to vector<8x8xf32>
    %591 = vector.shape_cast %588 : vector<8x8xf32> to vector<1x8x8xf32>
    tpu.vector_store %arg25[%c3_357, %c0_358, %c0_359], %591 {strides = array<i32>} : memref<4x8x8xf32, #tpu.memory_space<vmem>>, vector<1x8x8xf32>,
    %592 = vector.extract_strided_slice %547 {offsets = [0, 24], sizes = [8, 8], strides = [1, 1]} : vector<8x32xf32> to vector<8x8xf32>
    %c3_360 = arith.constant 3 : index
    %c0_361 = arith.constant 0 : index
    %c0_362 = arith.constant 0 : index
    %593 = vector.load %arg26[%c3_360, %c0_361, %c0_362] : memref<4x8x8xf32, #tpu.memory_space<vmem>>, vector<1x8x8xf32>
    %594 = vector.shape_cast %593 : vector<1x8x8xf32> to vector<8x8xf32>
    %595 = vector.shape_cast %592 : vector<8x8xf32> to vector<1x8x8xf32>
    tpu.vector_store %arg26[%c3_360, %c0_361, %c0_362], %595 {strides = array<i32>} : memref<4x8x8xf32, #tpu.memory_space<vmem>>, vector<1x8x8xf32>,
    %596 = vector.extract_strided_slice %548 {offsets = [0, 24], sizes = [8, 8], strides = [1, 1]} : vector<8x32xf32> to vector<8x8xf32>
    %c3_363 = arith.constant 3 : index
    %c0_364 = arith.constant 0 : index
    %c0_365 = arith.constant 0 : index
    %597 = vector.load %arg27[%c3_363, %c0_364, %c0_365] : memref<4x8x8xf32, #tpu.memory_space<vmem>>, vector<1x8x8xf32>
    %598 = vector.shape_cast %597 : vector<1x8x8xf32> to vector<8x8xf32>
    %599 = vector.shape_cast %596 : vector<8x8xf32> to vector<1x8x8xf32>
    tpu.vector_store %arg27[%c3_363, %c0_364, %c0_365], %599 {strides = array<i32>} : memref<4x8x8xf32, #tpu.memory_space<vmem>>, vector<1x8x8xf32>,
    %c0_366 = arith.constant 0 : index
    %c0_367 = arith.constant 0 : index
    %c0_368 = arith.constant 0 : index
    %600 = vector.load %arg25[%c0_366, %c0_367, %c0_368] : memref<4x8x8xf32, #tpu.memory_space<vmem>>, vector<4x8x8xf32>
    %601 = arith.truncf %600 : vector<4x8x8xf32> to vector<4x8x8xbf16>
    %c0_369 = arith.constant 0 : index
    %c0_370 = arith.constant 0 : index
    %c0_371 = arith.constant 0 : index
    %602 = vector.load %arg26[%c0_369, %c0_370, %c0_371] : memref<4x8x8xf32, #tpu.memory_space<vmem>>, vector<4x8x8xf32>
    %603 = arith.truncf %602 : vector<4x8x8xf32> to vector<4x8x8xbf16>
    %c0_372 = arith.constant 0 : index
    %c0_373 = arith.constant 0 : index
    %c0_374 = arith.constant 0 : index
    %604 = vector.load %arg27[%c0_372, %c0_373, %c0_374] : memref<4x8x8xf32, #tpu.memory_space<vmem>>, vector<4x8x8xf32>
    %605 = arith.truncf %604 : vector<4x8x8xf32> to vector<4x8x8xbf16>
    %cst_375 = arith.constant dense<0.000000e+00> : vector<4x8x8xf32>
    %606 = tpu.matmul %601, %603, %cst_375 {dimension_numbers = #tpu.dot_dimension_numbers<[2], [2], [1], [1], [0, 0, 0, 1, 1, 1], [0], [0]>} : vector<4x8x8xbf16>, vector<4x8x8xbf16>, vector<4x8x8xf32> -> vector<4x8x8xf32>
    %cst_376 = arith.constant 0.353553385 : f32
    %607 = vector.broadcast %cst_376 : f32 to vector<4x8x8xf32>
    %608 = arith.mulf %606, %607 : vector<4x8x8xf32>
    %609 = vector.shape_cast %13 : vector<8x8xf32> to vector<1x8x8xf32>
    %cst_377 = arith.constant 0.000000e+00 : f32
    %610 = vector.broadcast %cst_377 : f32 to vector<1x8x8xf32>
    %611 = arith.cmpf oeq, %609, %610 : vector<1x8x8xf32>
    %cst_378 = arith.constant -1.000000e+09 : f32
    %612 = vector.shape_cast %611 : vector<1x8x8xi1> to vector<1x8x8xi1>
    %613 = vector.broadcast %612 : vector<1x8x8xi1> to vector<4x8x8xi1>
    %614 = vector.broadcast %cst_378 : f32 to vector<4x8x8xf32>
    %615 = arith.select %613, %614, %608 : vector<4x8x8xi1>, vector<4x8x8xf32>
    %cst_379 = arith.constant dense<0xFF800000> : vector<4x8xf32>
    %616 = vector.multi_reduction <maximumf>, %615, %cst_379 [2] : vector<4x8x8xf32> to vector<4x8xf32>
    %617 = vector.shape_cast %616 : vector<4x8xf32> to vector<4x8x1xf32>
    %618 = vector.broadcast %617 : vector<4x8x1xf32> to vector<4x8x8xf32>
    %619 = arith.subf %615, %618 : vector<4x8x8xf32>
    %620 = math.exp %619 : vector<4x8x8xf32>
    %cst_380 = arith.constant dense<0.000000e+00> : vector<4x8xf32>
    %621 = vector.multi_reduction <add>, %620, %cst_380 [2] : vector<4x8x8xf32> to vector<4x8xf32>
    %622 = vector.shape_cast %621 : vector<4x8xf32> to vector<4x8x1xf32>
    %623 = vector.broadcast %622 : vector<4x8x1xf32> to vector<4x8x8xf32>
    %624 = arith.divf %620, %623 : vector<4x8x8xf32>
    %625 = arith.truncf %624 : vector<4x8x8xf32> to vector<4x8x8xbf16>
    %cst_381 = arith.constant dense<0.000000e+00> : vector<4x8x8xf32>
    %626 = tpu.matmul %625, %605, %cst_381 {dimension_numbers = #tpu.dot_dimension_numbers<[2], [1], [1], [2], [0, 0, 0, 1, 1, 2], [0], [0]>} : vector<4x8x8xbf16>, vector<4x8x8xbf16>, vector<4x8x8xf32> -> vector<4x8x8xf32>
    %627 = vector.extract_strided_slice %624 {offsets = [0, 0, 0], sizes = [1, 8, 8], strides = [1, 1, 1]} : vector<4x8x8xf32> to vector<1x8x8xf32>
    %628 = vector.shape_cast %627 : vector<1x8x8xf32> to vector<8x8xf32>
    %c0_382 = arith.constant 0 : index
    %c0_383 = arith.constant 0 : index
    %c96 = arith.constant 96 : index
    %629 = vector.load %arg24[%c0_382, %c0_383, %c96] : memref<1x8x128xf32, #tpu.memory_space<vmem>>, vector<1x8x8xf32>
    %630 = vector.shape_cast %629 : vector<1x8x8xf32> to vector<8x8xf32>
    %631 = vector.shape_cast %628 : vector<8x8xf32> to vector<1x8x8xf32>
    tpu.vector_store %arg24[%c0_382, %c0_383, %c96], %631 {strides = array<i32>} : memref<1x8x128xf32, #tpu.memory_space<vmem>>, vector<1x8x8xf32>,
    %632 = vector.extract_strided_slice %626 {offsets = [0, 0, 0], sizes = [1, 8, 8], strides = [1, 1, 1]} : vector<4x8x8xf32> to vector<1x8x8xf32>
    %633 = vector.shape_cast %632 : vector<1x8x8xf32> to vector<8x8xf32>
    %c0_384 = arith.constant 0 : index
    %c0_385 = arith.constant 0 : index
    %634 = vector.load %arg28[%c0_384, %c0_385] : memref<8x32xf32, #tpu.memory_space<vmem>>, vector<8x8xf32>
    tpu.vector_store %arg28[%c0_384, %c0_385], %633 {strides = array<i32>} : memref<8x32xf32, #tpu.memory_space<vmem>>, vector<8x8xf32>,
    %635 = vector.extract_strided_slice %624 {offsets = [1, 0, 0], sizes = [1, 8, 8], strides = [1, 1, 1]} : vector<4x8x8xf32> to vector<1x8x8xf32>
    %636 = vector.shape_cast %635 : vector<1x8x8xf32> to vector<8x8xf32>
    %c0_386 = arith.constant 0 : index
    %c0_387 = arith.constant 0 : index
    %c104 = arith.constant 104 : index
    %637 = vector.load %arg24[%c0_386, %c0_387, %c104] : memref<1x8x128xf32, #tpu.memory_space<vmem>>, vector<1x8x8xf32>
    %638 = vector.shape_cast %637 : vector<1x8x8xf32> to vector<8x8xf32>
    %639 = vector.shape_cast %636 : vector<8x8xf32> to vector<1x8x8xf32>
    tpu.vector_store %arg24[%c0_386, %c0_387, %c104], %639 {strides = array<i32>} : memref<1x8x128xf32, #tpu.memory_space<vmem>>, vector<1x8x8xf32>,
    %640 = vector.extract_strided_slice %626 {offsets = [1, 0, 0], sizes = [1, 8, 8], strides = [1, 1, 1]} : vector<4x8x8xf32> to vector<1x8x8xf32>
    %641 = vector.shape_cast %640 : vector<1x8x8xf32> to vector<8x8xf32>
    %c0_388 = arith.constant 0 : index
    %c8_389 = arith.constant 8 : index
    %642 = vector.load %arg28[%c0_388, %c8_389] : memref<8x32xf32, #tpu.memory_space<vmem>>, vector<8x8xf32>
    tpu.vector_store %arg28[%c0_388, %c8_389], %641 {strides = array<i32>} : memref<8x32xf32, #tpu.memory_space<vmem>>, vector<8x8xf32>,
    %643 = vector.extract_strided_slice %624 {offsets = [2, 0, 0], sizes = [1, 8, 8], strides = [1, 1, 1]} : vector<4x8x8xf32> to vector<1x8x8xf32>
    %644 = vector.shape_cast %643 : vector<1x8x8xf32> to vector<8x8xf32>
    %c0_390 = arith.constant 0 : index
    %c0_391 = arith.constant 0 : index
    %c112 = arith.constant 112 : index
    %645 = vector.load %arg24[%c0_390, %c0_391, %c112] : memref<1x8x128xf32, #tpu.memory_space<vmem>>, vector<1x8x8xf32>
    %646 = vector.shape_cast %645 : vector<1x8x8xf32> to vector<8x8xf32>
    %647 = vector.shape_cast %644 : vector<8x8xf32> to vector<1x8x8xf32>
    tpu.vector_store %arg24[%c0_390, %c0_391, %c112], %647 {strides = array<i32>} : memref<1x8x128xf32, #tpu.memory_space<vmem>>, vector<1x8x8xf32>,
    %648 = vector.extract_strided_slice %626 {offsets = [2, 0, 0], sizes = [1, 8, 8], strides = [1, 1, 1]} : vector<4x8x8xf32> to vector<1x8x8xf32>
    %649 = vector.shape_cast %648 : vector<1x8x8xf32> to vector<8x8xf32>
    %c0_392 = arith.constant 0 : index
    %c16_393 = arith.constant 16 : index
    %650 = vector.load %arg28[%c0_392, %c16_393] : memref<8x32xf32, #tpu.memory_space<vmem>>, vector<8x8xf32>
    tpu.vector_store %arg28[%c0_392, %c16_393], %649 {strides = array<i32>} : memref<8x32xf32, #tpu.memory_space<vmem>>, vector<8x8xf32>,
    %651 = vector.extract_strided_slice %624 {offsets = [3, 0, 0], sizes = [1, 8, 8], strides = [1, 1, 1]} : vector<4x8x8xf32> to vector<1x8x8xf32>
    %652 = vector.shape_cast %651 : vector<1x8x8xf32> to vector<8x8xf32>
    %c0_394 = arith.constant 0 : index
    %c0_395 = arith.constant 0 : index
    %c120 = arith.constant 120 : index
    %653 = vector.load %arg24[%c0_394, %c0_395, %c120] : memref<1x8x128xf32, #tpu.memory_space<vmem>>, vector<1x8x8xf32>
    %654 = vector.shape_cast %653 : vector<1x8x8xf32> to vector<8x8xf32>
    %655 = vector.shape_cast %652 : vector<8x8xf32> to vector<1x8x8xf32>
    tpu.vector_store %arg24[%c0_394, %c0_395, %c120], %655 {strides = array<i32>} : memref<1x8x128xf32, #tpu.memory_space<vmem>>, vector<1x8x8xf32>,
    %656 = vector.extract_strided_slice %626 {offsets = [3, 0, 0], sizes = [1, 8, 8], strides = [1, 1, 1]} : vector<4x8x8xf32> to vector<1x8x8xf32>
    %657 = vector.shape_cast %656 : vector<1x8x8xf32> to vector<8x8xf32>
    %c0_396 = arith.constant 0 : index
    %c24_397 = arith.constant 24 : index
    %658 = vector.load %arg28[%c0_396, %c24_397] : memref<8x32xf32, #tpu.memory_space<vmem>>, vector<8x8xf32>
    tpu.vector_store %arg28[%c0_396, %c24_397], %657 {strides = array<i32>} : memref<8x32xf32, #tpu.memory_space<vmem>>, vector<8x8xf32>,
    %c0_398 = arith.constant 0 : index
    %c0_399 = arith.constant 0 : index
    %659 = vector.load %arg28[%c0_398, %c0_399] : memref<8x32xf32, #tpu.memory_space<vmem>>, vector<8x32xf32>
    %660 = arith.truncf %659 : vector<8x32xf32> to vector<8x32xbf16>
    %cst_400 = arith.constant dense<0.000000e+00> : vector<8x32xf32>
    %661 = tpu.matmul %660, %550, %cst_400 {dimension_numbers = #tpu.dot_dimension_numbers<[1], [0], [0], [1], [0, 0, 1, 1], [], []>} : vector<8x32xbf16>, vector<32x32xbf16>, vector<8x32xf32> -> vector<8x32xf32>
    %662 = vector.broadcast %551 : vector<1x32xf32> to vector<8x32xf32>
    %663 = arith.addf %661, %662 : vector<8x32xf32>
    %664 = arith.addf %509, %663 : vector<8x32xf32>
    %c5 = arith.constant 5 : index
    %c0_401 = arith.constant 0 : index
    %665 = vector.load %arg7[%c5, %c0_401] : memref<6x32xf32, #tpu.memory_space<vmem>>, vector<1x32xf32>
    %c5_402 = arith.constant 5 : index
    %c0_403 = arith.constant 0 : index
    %666 = vector.load %arg8[%c5_402, %c0_403] : memref<6x32xf32, #tpu.memory_space<vmem>>, vector<1x32xf32>
    %cst_404 = arith.constant dense<0.000000e+00> : vector<8xf32>
    %667 = vector.multi_reduction <add>, %664, %cst_404 [1] : vector<8x32xf32> to vector<8xf32>
    %668 = vector.shape_cast %667 : vector<8xf32> to vector<8x1xf32>
    %cst_405 = arith.constant 3.200000e+01 : f32
    %669 = vector.broadcast %cst_405 : f32 to vector<8x1xf32>
    %670 = arith.divf %668, %669 : vector<8x1xf32>
    %671 = vector.broadcast %670 : vector<8x1xf32> to vector<8x32xf32>
    %672 = arith.subf %664, %671 : vector<8x32xf32>
    %673 = arith.mulf %672, %672 : vector<8x32xf32>
    %cst_406 = arith.constant dense<0.000000e+00> : vector<8xf32>
    %674 = vector.multi_reduction <add>, %673, %cst_406 [1] : vector<8x32xf32> to vector<8xf32>
    %675 = vector.shape_cast %674 : vector<8xf32> to vector<8x1xf32>
    %cst_407 = arith.constant 0.0322580636 : f32
    %676 = vector.broadcast %cst_407 : f32 to vector<8x1xf32>
    %677 = arith.mulf %675, %676 : vector<8x1xf32>
    %678 = vector.broadcast %665 : vector<1x32xf32> to vector<8x32xf32>
    %679 = arith.mulf %678, %672 : vector<8x32xf32>
    %680 = math.sqrt %677 : vector<8x1xf32>
    %cst_408 = arith.constant 9.99999997E-7 : f32
    %681 = vector.broadcast %cst_408 : f32 to vector<8x1xf32>
    %682 = arith.addf %680, %681 : vector<8x1xf32>
    %683 = vector.broadcast %682 : vector<8x1xf32> to vector<8x32xf32>
    %684 = arith.divf %679, %683 : vector<8x32xf32>
    %685 = vector.broadcast %666 : vector<1x32xf32> to vector<8x32xf32>
    %686 = arith.addf %684, %685 : vector<8x32xf32>
    %687 = arith.truncf %686 : vector<8x32xf32> to vector<8x32xbf16>
    %c1_409 = arith.constant 1 : index
    %c0_410 = arith.constant 0 : index
    %c0_411 = arith.constant 0 : index
    %688 = vector.load %arg17[%c1_409, %c0_410, %c0_411] : memref<2x32x64xbf16, #tpu.memory_space<vmem>>, vector<1x32x64xbf16>
    %689 = vector.shape_cast %688 : vector<1x32x64xbf16> to vector<32x64xbf16>
    %cst_412 = arith.constant dense<0.000000e+00> : vector<8x64xf32>
    %690 = tpu.matmul %687, %689, %cst_412 {dimension_numbers = #tpu.dot_dimension_numbers<[1], [0], [0], [1], [0, 0, 1, 1], [], []>} : vector<8x32xbf16>, vector<32x64xbf16>, vector<8x64xf32> -> vector<8x64xf32>
    %c1_413 = arith.constant 1 : index
    %c0_414 = arith.constant 0 : index
    %691 = vector.load %arg18[%c1_413, %c0_414] : memref<2x64xf32, #tpu.memory_space<vmem>>, vector<1x64xf32>
    %692 = vector.broadcast %691 : vector<1x64xf32> to vector<8x64xf32>
    %693 = arith.addf %690, %692 : vector<8x64xf32>
    %cst_415 = arith.constant 0.000000e+00 : f32
    %694 = vector.broadcast %cst_415 : f32 to vector<8x64xf32>
    %695 = arith.maximumf %693, %694 : vector<8x64xf32>
    %696 = arith.truncf %695 : vector<8x64xf32> to vector<8x64xbf16>
    %c1_416 = arith.constant 1 : index
    %c0_417 = arith.constant 0 : index
    %c0_418 = arith.constant 0 : index
    %697 = vector.load %arg19[%c1_416, %c0_417, %c0_418] : memref<2x64x32xbf16, #tpu.memory_space<vmem>>, vector<1x64x32xbf16>
    %698 = vector.shape_cast %697 : vector<1x64x32xbf16> to vector<64x32xbf16>
    %cst_419 = arith.constant dense<0.000000e+00> : vector<8x32xf32>
    %699 = tpu.matmul %696, %698, %cst_419 {dimension_numbers = #tpu.dot_dimension_numbers<[1], [0], [0], [1], [0, 0, 1, 1], [], []>} : vector<8x64xbf16>, vector<64x32xbf16>, vector<8x32xf32> -> vector<8x32xf32>
    %700 = arith.addf %664, %699 : vector<8x32xf32>
    %c1_420 = arith.constant 1 : index
    %c0_421 = arith.constant 0 : index
    %701 = vector.load %arg20[%c1_420, %c0_421] : memref<2x32xf32, #tpu.memory_space<vmem>>, vector<1x32xf32>
    %702 = vector.broadcast %701 : vector<1x32xf32> to vector<8x32xf32>
    %703 = arith.addf %700, %702 : vector<8x32xf32>
    %c0_422 = arith.constant 0 : index
    %c0_423 = arith.constant 0 : index
    %704 = vector.load %arg21[%c0_422, %c0_423] : memref<1x32xf32, #tpu.memory_space<vmem>>, vector<1x32xf32>
    %c0_424 = arith.constant 0 : index
    %c0_425 = arith.constant 0 : index
    %705 = vector.load %arg22[%c0_424, %c0_425] : memref<1x32xf32, #tpu.memory_space<vmem>>, vector<1x32xf32>
    %cst_426 = arith.constant dense<0.000000e+00> : vector<8xf32>
    %706 = vector.multi_reduction <add>, %703, %cst_426 [1] : vector<8x32xf32> to vector<8xf32>
    %707 = vector.shape_cast %706 : vector<8xf32> to vector<8x1xf32>
    %cst_427 = arith.constant 3.200000e+01 : f32
    %708 = vector.broadcast %cst_427 : f32 to vector<8x1xf32>
    %709 = arith.divf %707, %708 : vector<8x1xf32>
    %710 = vector.broadcast %709 : vector<8x1xf32> to vector<8x32xf32>
    %711 = arith.subf %703, %710 : vector<8x32xf32>
    %712 = arith.mulf %711, %711 : vector<8x32xf32>
    %cst_428 = arith.constant dense<0.000000e+00> : vector<8xf32>
    %713 = vector.multi_reduction <add>, %712, %cst_428 [1] : vector<8x32xf32> to vector<8xf32>
    %714 = vector.shape_cast %713 : vector<8xf32> to vector<8x1xf32>
    %cst_429 = arith.constant 0.0322580636 : f32
    %715 = vector.broadcast %cst_429 : f32 to vector<8x1xf32>
    %716 = arith.mulf %714, %715 : vector<8x1xf32>
    %717 = vector.broadcast %704 : vector<1x32xf32> to vector<8x32xf32>
    %718 = arith.mulf %717, %711 : vector<8x32xf32>
    %719 = math.sqrt %716 : vector<8x1xf32>
    %cst_430 = arith.constant 9.99999997E-7 : f32
    %720 = vector.broadcast %cst_430 : f32 to vector<8x1xf32>
    %721 = arith.addf %719, %720 : vector<8x1xf32>
    %722 = vector.broadcast %721 : vector<8x1xf32> to vector<8x32xf32>
    %723 = arith.divf %718, %722 : vector<8x32xf32>
    %724 = vector.broadcast %705 : vector<1x32xf32> to vector<8x32xf32>
    %725 = arith.addf %723, %724 : vector<8x32xf32>
    %c0_431 = arith.constant 0 : index
    %c0_432 = arith.constant 0 : index
    %c0_433 = arith.constant 0 : index
    %726 = vector.load %arg23[%c0_431, %c0_432, %c0_433] : memref<1x8x32xf32, #tpu.memory_space<vmem>>, vector<1x8x32xf32>
    %727 = vector.shape_cast %726 : vector<1x8x32xf32> to vector<8x32xf32>
    %728 = vector.shape_cast %725 : vector<8x32xf32> to vector<1x8x32xf32>
    tpu.vector_store %arg23[%c0_431, %c0_432, %c0_433], %728 {strides = array<i32>} : memref<1x8x32xf32, #tpu.memory_space<vmem>>, vector<1x8x32xf32>,
    return
  }
  func.func @transform_0(%arg0: i32) -> (i32, i32, i32) {
    %c0_i32 = arith.constant 0 : i32
    %c0_i32_0 = arith.constant 0 : i32
    %c0_i32_1 = arith.constant 0 : i32
    return %arg0, %c0_i32, %c0_i32_0 : i32, i32, i32
  }
  func.func @transform_1(%arg0: i32) -> (i32, i32, i32) {
    %c0_i32 = arith.constant 0 : i32
    %c0_i32_0 = arith.constant 0 : i32
    %c0_i32_1 = arith.constant 0 : i32
    return %arg0, %c0_i32, %c0_i32_0 : i32, i32, i32
  }
  func.func @transform_2(%arg0: i32) -> (i32, i32, i32) {
    %c0_i32 = arith.constant 0 : i32
    %c0_i32_0 = arith.constant 0 : i32
    %c0_i32_1 = arith.constant 0 : i32
    return %arg0, %c0_i32, %c0_i32_0 : i32, i32, i32
  }
  func.func @transform_3(%arg0: i32) -> (i32, i32, i32) {
    %c0_i32 = arith.constant 0 : i32
    %c0_i32_0 = arith.constant 0 : i32
    %c0_i32_1 = arith.constant 0 : i32
    return %arg0, %c0_i32, %c0_i32_0 : i32, i32, i32
  }
  func.func @transform_4(%arg0: i32) -> (i32, i32, i32) {
    %c0_i32 = arith.constant 0 : i32
    %c0_i32_0 = arith.constant 0 : i32
    %c0_i32_1 = arith.constant 0 : i32
    return %arg0, %c0_i32, %c0_i32_0 : i32, i32, i32
  }
  func.func @transform_5(%arg0: i32) -> (i32, i32) {
    %c0_i32 = arith.constant 0 : i32
    %c0_i32_0 = arith.constant 0 : i32
    %c0_i32_1 = arith.constant 0 : i32
    return %c0_i32, %c0_i32_0 : i32, i32
  }
  func.func @transform_6(%arg0: i32) -> (i32, i32) {
    %c0_i32 = arith.constant 0 : i32
    %c0_i32_0 = arith.constant 0 : i32
    %c0_i32_1 = arith.constant 0 : i32
    return %c0_i32, %c0_i32_0 : i32, i32
  }
  func.func @transform_7(%arg0: i32) -> (i32, i32) {
    %c0_i32 = arith.constant 0 : i32
    %c0_i32_0 = arith.constant 0 : i32
    %c0_i32_1 = arith.constant 0 : i32
    return %c0_i32, %c0_i32_0 : i32, i32
  }
  func.func @transform_8(%arg0: i32) -> (i32, i32, i32) {
    %c0_i32 = arith.constant 0 : i32
    %c0_i32_0 = arith.constant 0 : i32
    %c0_i32_1 = arith.constant 0 : i32
    %c0_i32_2 = arith.constant 0 : i32
    return %c0_i32, %c0_i32_0, %c0_i32_1 : i32, i32, i32
  }
  func.func @transform_9(%arg0: i32) -> (i32, i32) {
    %c0_i32 = arith.constant 0 : i32
    %c0_i32_0 = arith.constant 0 : i32
    %c0_i32_1 = arith.constant 0 : i32
    return %c0_i32, %c0_i32_0 : i32, i32
  }
  func.func @transform_10(%arg0: i32) -> (i32, i32, i32) {
    %c0_i32 = arith.constant 0 : i32
    %c0_i32_0 = arith.constant 0 : i32
    %c0_i32_1 = arith.constant 0 : i32
    %c0_i32_2 = arith.constant 0 : i32
    return %c0_i32, %c0_i32_0, %c0_i32_1 : i32, i32, i32
  }
  func.func @transform_11(%arg0: i32) -> (i32, i32) {
    %c0_i32 = arith.constant 0 : i32
    %c0_i32_0 = arith.constant 0 : i32
    %c0_i32_1 = arith.constant 0 : i32
    return %c0_i32, %c0_i32_0 : i32, i32
  }
  func.func @transform_12(%arg0: i32) -> (i32, i32, i32) {
    %c0_i32 = arith.constant 0 : i32
    %c0_i32_0 = arith.constant 0 : i32
    %c0_i32_1 = arith.constant 0 : i32
    %c0_i32_2 = arith.constant 0 : i32
    return %c0_i32, %c0_i32_0, %c0_i32_1 : i32, i32, i32
  }
  func.func @transform_13(%arg0: i32) -> (i32, i32) {
    %c0_i32 = arith.constant 0 : i32
    %c0_i32_0 = arith.constant 0 : i32
    %c0_i32_1 = arith.constant 0 : i32
    return %c0_i32, %c0_i32_0 : i32, i32
  }
  func.func @transform_14(%arg0: i32) -> (i32, i32, i32) {
    %c0_i32 = arith.constant 0 : i32
    %c0_i32_0 = arith.constant 0 : i32
    %c0_i32_1 = arith.constant 0 : i32
    %c0_i32_2 = arith.constant 0 : i32
    return %c0_i32, %c0_i32_0, %c0_i32_1 : i32, i32, i32
  }
  func.func @transform_15(%arg0: i32) -> (i32, i32) {
    %c0_i32 = arith.constant 0 : i32
    %c0_i32_0 = arith.constant 0 : i32
    %c0_i32_1 = arith.constant 0 : i32
    return %c0_i32, %c0_i32_0 : i32, i32
  }
  func.func @transform_16(%arg0: i32) -> (i32, i32, i32) {
    %c0_i32 = arith.constant 0 : i32
    %c0_i32_0 = arith.constant 0 : i32
    %c0_i32_1 = arith.constant 0 : i32
    %c0_i32_2 = arith.constant 0 : i32
    return %c0_i32, %c0_i32_0, %c0_i32_1 : i32, i32, i32
  }
  func.func @transform_17(%arg0: i32) -> (i32, i32) {
    %c0_i32 = arith.constant 0 : i32
    %c0_i32_0 = arith.constant 0 : i32
    %c0_i32_1 = arith.constant 0 : i32
    return %c0_i32, %c0_i32_0 : i32, i32
  }
  func.func @transform_18(%arg0: i32) -> (i32, i32, i32) {
    %c0_i32 = arith.constant 0 : i32
    %c0_i32_0 = arith.constant 0 : i32
    %c0_i32_1 = arith.constant 0 : i32
    %c0_i32_2 = arith.constant 0 : i32
    return %c0_i32, %c0_i32_0, %c0_i32_1 : i32, i32, i32
  }
  func.func @transform_19(%arg0: i32) -> (i32, i32) {
    %c0_i32 = arith.constant 0 : i32
    %c0_i32_0 = arith.constant 0 : i32
    %c0_i32_1 = arith.constant 0 : i32
    return %c0_i32, %c0_i32_0 : i32, i32
  }
  func.func @transform_20(%arg0: i32) -> (i32, i32) {
    %c0_i32 = arith.constant 0 : i32
    %c0_i32_0 = arith.constant 0 : i32
    %c0_i32_1 = arith.constant 0 : i32
    return %c0_i32, %c0_i32_0 : i32, i32
  }
  func.func @transform_21(%arg0: i32) -> (i32, i32) {
    %c0_i32 = arith.constant 0 : i32
    %c0_i32_0 = arith.constant 0 : i32
    %c0_i32_1 = arith.constant 0 : i32
    return %c0_i32, %c0_i32_0 : i32, i32
  }
  func.func @transform_22(%arg0: i32) -> (i32, i32, i32) {
    %c0_i32 = arith.constant 0 : i32
    %c0_i32_0 = arith.constant 0 : i32
    %c0_i32_1 = arith.constant 0 : i32
    return %arg0, %c0_i32, %c0_i32_0 : i32, i32, i32
  }
  func.func @transform_23(%arg0: i32) -> (i32, i32, i32) {
    %c0_i32 = arith.constant 0 : i32
    %c0_i32_0 = arith.constant 0 : i32
    %c0_i32_1 = arith.constant 0 : i32
    return %arg0, %c0_i32, %c0_i32_0 : i32, i32, i32
  }
}

</mosaic_0001>

<llo_original>
// kernel: tpu_custom_call.1
$region0: #{tpu_custom_call.1}
  #allocation0 [shape = 'u32[]', space=smem, size = 0x4, offset = 0x4, fixed_abs, tag = 'smem constant byte address 0x4 - core index']
  #allocation1 [shape = 'u32[72,128]{1,0:T(1,128)}', space=vmem, size = 0x9000, scoped, tag = 'internal scratch']
  #allocation2 [shape = 'f32[4,8,8]{2,1,0:T(8,128)}', space=vmem, size = 0x4000, scoped, tag = 'scratch operand']
  #allocation3 [shape = 'f32[4,8,8]{2,1,0:T(8,128)}', space=vmem, size = 0x4000, scoped, tag = 'scratch operand']
  #allocation4 [shape = 'f32[4,8,8]{2,1,0:T(8,128)}', space=vmem, size = 0x4000, scoped, tag = 'scratch operand']
  #allocation5 [shape = 'f32[8,32]{1,0:T(8,128)}', space=vmem, size = 0x1000, scoped, tag = 'scratch operand']
  %s0 = inlined_call_operand.hbm [shape: f32[2,8,32], index: 0, kind: input, shape index: {}]
  %s1 = inlined_call_operand.hbm [shape: f32[2,8,32], index: 1, kind: input, shape index: {}]
  %s2 = inlined_call_operand.hbm [shape: f32[2,8,8], index: 2, kind: input, shape index: {}]
  %s3 = inlined_call_operand.hbm [shape: f32[2,8,8], index: 3, kind: input, shape index: {}]
  %s4 = inlined_call_operand.hbm [shape: f32[2,8,8], index: 4, kind: input, shape index: {}]
  %s5 = inlined_call_operand.hbm [shape: f32[8,32], index: 5, kind: input, shape index: {}]
  %s6 = inlined_call_operand.hbm [shape: f32[6,32], index: 6, kind: input, shape index: {}]
  %s7 = inlined_call_operand.hbm [shape: f32[6,32], index: 7, kind: input, shape index: {}]
  %s8 = inlined_call_operand.vmem [shape: bf16[2,32,96], index: 8, kind: input, shape index: {}]
  %s9 = inlined_call_operand.vmem [shape: f32[2,96], index: 9, kind: input, shape index: {}]
  %s10 = inlined_call_operand.vmem [shape: bf16[2,32,32], index: 10, kind: input, shape index: {}]
  %s11 = inlined_call_operand.vmem [shape: f32[2,32], index: 11, kind: input, shape index: {}]
  %s12 = inlined_call_operand.vmem [shape: bf16[2,32,96], index: 12, kind: input, shape index: {}]
  %s13 = inlined_call_operand.vmem [shape: f32[2,96], index: 13, kind: input, shape index: {}]
  %s14 = inlined_call_operand.hbm [shape: bf16[2,32,32], index: 14, kind: input, shape index: {}]
  %s15 = inlined_call_operand.vmem [shape: f32[2,32], index: 15, kind: input, shape index: {}]
  %s16 = inlined_call_operand.hbm [shape: bf16[2,32,64], index: 16, kind: input, shape index: {}]
  %s17 = inlined_call_operand.vmem [shape: f32[2,64], index: 17, kind: input, shape index: {}]
  %s18 = inlined_call_operand.vmem [shape: bf16[2,64,32], index: 18, kind: input, shape index: {}]
  %s19 = inlined_call_operand.vmem [shape: f32[2,32], index: 19, kind: input, shape index: {}]
  %s20 = inlined_call_operand.vmem [shape: f32[1,32], index: 20, kind: input, shape index: {}]
  %s21 = inlined_call_operand.vmem [shape: f32[1,32], index: 21, kind: input, shape index: {}]
  %s22 = inlined_call_operand.hbm [shape: f32[2,8,32], index: 22, kind: output, shape index: {0}]
  %s23 = inlined_call_operand.hbm [shape: f32[2,8,128], index: 23, kind: output, shape index: {1}]
  %24 = xla_tuple %s22, %s23
  %s25 = sld [smem:[#allocation0]]
  $region169: #{tpu_custom_call.1} parent=0
    _
  %s27 = ssub.s32 1, %s25
  %s28 = scalar_select 0, %s27, %s25
  $region1: #{tpu_custom_call.1} parent=0
    #allocation6 [shape = 'u8[8192]{0}', space=vmem, size = 0x2000, scoped, tag = 'input window, operand 0']
    #allocation7 [shape = 's32[2]{0}', space=sflag, size = 0x8, scoped, tag = 'scoped memory for tpu_custom_call.1']
    #allocation8 [shape = 's32[2]{0}', space=sflag, size = 0x8, scoped, tag = 'scoped memory for tpu_custom_call.1']
    #allocation9 [shape = 'u8[8192]{0}', space=vmem, size = 0x2000, scoped, tag = 'input window, operand 1']
    #allocation10 [shape = 's32[2]{0}', space=sflag, size = 0x8, scoped, tag = 'scoped memory for tpu_custom_call.1']
    #allocation11 [shape = 'u8[8192]{0}', space=vmem, size = 0x2000, scoped, tag = 'input window, operand 2']
    #allocation12 [shape = 'u8[8192]{0}', space=vmem, size = 0x2000, scoped, tag = 'input window, operand 3']
    #allocation13 [shape = 's32[2]{0}', space=sflag, size = 0x8, scoped, tag = 'scoped memory for tpu_custom_call.1']
    #allocation14 [shape = 'u8[8192]{0}', space=vmem, size = 0x2000, scoped, tag = 'input window, operand 4']
    #allocation15 [shape = 'u8[4096]{0}', space=vmem, size = 0x1000, scoped, tag = 'input window, operand 5, single buffered']
    #allocation16 [shape = 's32[1]{0}', space=sflag, size = 0x4, scoped, tag = 'scoped memory for tpu_custom_call.1']
    #allocation17 [shape = 'u8[4096]{0}', space=vmem, size = 0x1000, scoped, tag = 'input window, operand 6, single buffered']
    #allocation18 [shape = 'u8[4096]{0}', space=vmem, size = 0x1000, scoped, tag = 'input window, operand 7, single buffered']
    #allocation19 [shape = 's32[1]{0}', space=sflag, size = 0x4, scoped, tag = 'scoped memory for tpu_custom_call.1']
    #allocation20 [shape = 'u8[16384]{0}', space=vmem, size = 0x4000, scoped, tag = 'input window, operand 14, single buffered']
    #allocation21 [shape = 'u8[16384]{0}', space=vmem, size = 0x4000, scoped, tag = 'input window, operand 16, single buffered']
    #allocation22 [shape = 's32[1]{0}', space=sflag, size = 0x4, scoped, tag = 'scoped memory for tpu_custom_call.1']
    #allocation23 [shape = 'u8[8192]{0}', space=vmem, size = 0x2000, scoped, tag = 'output window, operand 0']
    #allocation24 [shape = 'u8[8192]{0}', space=vmem, size = 0x2000, scoped, tag = 'output window, operand 1']
    #allocation25 [shape = 's32[2]{0}', space=sflag, size = 0x8, scoped, tag = 'scoped memory for tpu_custom_call.1']
    %29 = vsyncpa [#allocation7], 0
    %s30 = scalar_lea.sflag [#allocation7], 1
    %31 = vsyncpa %s30, 0
    %32 = vsyncpa [#allocation10], 0
    %s33 = scalar_lea.sflag [#allocation10], 1
    %34 = vsyncpa %s33, 0
    %35 = vsyncpa [#allocation13], 0
    %s36 = scalar_lea.sflag [#allocation13], 1
    %37 = vsyncpa %s36, 0
    %38 = vsyncpa [#allocation16], 0
    %39 = vsyncpa [#allocation19], 0
    %40 = vsyncpa [#allocation22], 0
    %41 = vsyncpa [#allocation8], 0
    %s42 = scalar_lea.sflag [#allocation8], 1
    %43 = vsyncpa %s42, 0
    %44 = vsyncpa [#allocation25], 0
    %s45 = scalar_lea.sflag [#allocation25], 1
    %46 = vsyncpa %s45, 0
    loop: start=0, step=1, limit=4
    $region2: #{tpu_custom_call.1} parent=1 // loop_pre_header
      _
    $region3: #{tpu_custom_call.1} parent=1 // loop_header
      %s48 = sphi 0, %s52
      %p49 = scmp.ge.s32.totalorder %s48, 4
      %s58 = sphi 0, %s60
      %s61 = sphi 0, %s58
      %s62 = sphi 0, %s61
      %s78 = sphi 0, %s62
      %s84 = sphi 0, %s86
      %s87 = sphi 0, %s84
      %s88 = sphi 0, %s87
      %s104 = sphi 0, %s88
      %s110 = sphi 0, %s112
      %s113 = sphi 0, %s110
      %s114 = sphi 0, %s113
      %s130 = sphi 0, %s114
      %s136 = sphi 0, %s138
      %s139 = sphi 0, %s136
      %s140 = sphi 0, %s139
      %s156 = sphi 0, %s140
      %s162 = sphi 0, %s164
      %s165 = sphi 0, %s162
      %s166 = sphi 0, %s165
      %s182 = sphi 0, %s166
      %s186 = sphi 0, %s186
      %s188 = sphi 0, %s186
      %s189 = sphi 0, %s188
      %s203 = sphi 0, %s189
      %s207 = sphi 0, %s207
      %s209 = sphi 0, %s207
      %s210 = sphi 0, %s209
      %s224 = sphi 0, %s210
      %s228 = sphi 0, %s228
      %s230 = sphi 0, %s228
      %s231 = sphi 0, %s230
      %s245 = sphi 0, %s231
      %s249 = sphi 0, %s249
      %s251 = sphi 0, %s249
      %s252 = sphi 0, %s251
      %s266 = sphi 0, %s252
      %s270 = sphi 0, %s270
      %s272 = sphi 0, %s270
      %s273 = sphi 0, %s272
      %s287 = sphi 0, %s273
      %s291 = sphi 0, %s291
      %s293 = sphi 0, %s291
      %s294 = sphi 0, %s293
      %s308 = sphi 0, %s294
      %s312 = sphi 0, %s312
      %s314 = sphi 0, %s312
      %s315 = sphi 0, %s314
      %s329 = sphi 0, %s315
      %s333 = sphi 0, %s333
      %s335 = sphi 0, %s333
      %s336 = sphi 0, %s335
      %s350 = sphi 0, %s336
      %s354 = sphi 0, %s354
      %s356 = sphi 0, %s354
      %s357 = sphi 0, %s356
      %s371 = sphi 0, %s357
      %s375 = sphi 0, %s375
      %s377 = sphi 0, %s375
      %s378 = sphi 0, %s377
      %s392 = sphi 0, %s378
      %s396 = sphi 0, %s396
      %s398 = sphi 0, %s396
      %s399 = sphi 0, %s398
      %s413 = sphi 0, %s399
      %s417 = sphi 0, %s417
      %s419 = sphi 0, %s417
      %s420 = sphi 0, %s419
      %s434 = sphi 0, %s420
      %s438 = sphi 0, %s438
      %s440 = sphi 0, %s438
      %s441 = sphi 0, %s440
      %s455 = sphi 0, %s441
      %s459 = sphi 0, %s459
      %s461 = sphi 0, %s459
      %s462 = sphi 0, %s461
      %s476 = sphi 0, %s462
      %s480 = sphi 0, %s480
      %s482 = sphi 0, %s480
      %s483 = sphi 0, %s482
      %s497 = sphi 0, %s483
      %s501 = sphi 0, %s501
      %s503 = sphi 0, %s501
      %s504 = sphi 0, %s503
      %s518 = sphi 0, %s504
      %s522 = sphi 0, %s522
      %s524 = sphi 0, %s522
      %s525 = sphi 0, %s524
      %s539 = sphi 0, %s525
      %s545 = sphi 0, %s547
      %s548 = sphi 0, %s545
      %s549 = sphi 0, %s548
      %s565 = sphi 0, %s549
      %s571 = sphi 0, %s573
      %s574 = sphi 0, %s571
      %s575 = sphi 0, %s574
      %s591 = sphi 0, %s575
    $region4: #{tpu_custom_call.1} parent=1 // loop_header_branch
      %51 = sbr.rel (%p49) target = $region8
    $region5: #{tpu_custom_call.1} parent=1 // loop_body
      %s53 = ssub.s32 %s48, 1
      %s54 = ssub.s32 %s48, 2
      %s55 = sadd.s32 %s48, 1
      %s56 = ssub.s32 %s48, %s55
      %p57 = scmp.eq.s32.totalorder %s56, 0
      %s59 = sadd.s32 %s58, 1
      %s60 = scalar_select %p57, %s58, %s59
      %p63 = pneg %p57
      %p64 = scmp.eq.s32.totalorder %s48, 1
      %p65 = por %p63, %p64
      %p66 = scmp.ne.s32.totalorder %s58, %s61
      %p67 = scmp.eq.s32.totalorder %s48, 0
      %p68 = por %p66, %p67
      %p69 = scmp.ne.s32.totalorder %s58, %s61
      %p70 = scmp.eq.s32.totalorder %s53, 1
      %p71 = por %p69, %p70
      %p72 = scmp.ne.s32.totalorder %s61, %s62
      %p73 = scmp.eq.s32.totalorder %s53, 0
      %p74 = por %p72, %p73
      %p75 = scmp.ne.s32.totalorder %s61, %s62
      %p76 = scmp.eq.s32.totalorder %s54, 1
      %p77 = por %p75, %p76
      %p79 = scmp.ne.s32.totalorder %s62, %s78
      %p80 = scmp.eq.s32.totalorder %s54, 0
      %p81 = por %p79, %p80
      %s82 = ssub.s32 %s48, %s55
      %p83 = scmp.eq.s32.totalorder %s82, 0
      %s85 = sadd.s32 %s84, 1
      %s86 = scalar_select %p83, %s84, %s85
      %p89 = pneg %p83
      %p90 = scmp.eq.s32.totalorder %s48, 1
      %p91 = por %p89, %p90
      %p92 = scmp.ne.s32.totalorder %s84, %s87
      %p93 = scmp.eq.s32.totalorder %s48, 0
      %p94 = por %p92, %p93
      %p95 = scmp.ne.s32.totalorder %s84, %s87
      %p96 = scmp.eq.s32.totalorder %s53, 1
      %p97 = por %p95, %p96
      %p98 = scmp.ne.s32.totalorder %s87, %s88
      %p99 = scmp.eq.s32.totalorder %s53, 0
      %p100 = por %p98, %p99
      %p101 = scmp.ne.s32.totalorder %s87, %s88
      %p102 = scmp.eq.s32.totalorder %s54, 1
      %p103 = por %p101, %p102
      %p105 = scmp.ne.s32.totalorder %s88, %s104
      %p106 = scmp.eq.s32.totalorder %s54, 0
      %p107 = por %p105, %p106
      %s108 = ssub.s32 %s48, %s55
      %p109 = scmp.eq.s32.totalorder %s108, 0
      %s111 = sadd.s32 %s110, 1
      %s112 = scalar_select %p109, %s110, %s111
      %p115 = pneg %p109
      %p116 = scmp.eq.s32.totalorder %s48, 1
      %p117 = por %p115, %p116
      %p118 = scmp.ne.s32.totalorder %s110, %s113
      %p119 = scmp.eq.s32.totalorder %s48, 0
      %p120 = por %p118, %p119
      %p121 = scmp.ne.s32.totalorder %s110, %s113
      %p122 = scmp.eq.s32.totalorder %s53, 1
      %p123 = por %p121, %p122
      %p124 = scmp.ne.s32.totalorder %s113, %s114
      %p125 = scmp.eq.s32.totalorder %s53, 0
      %p126 = por %p124, %p125
      %p127 = scmp.ne.s32.totalorder %s113, %s114
      %p128 = scmp.eq.s32.totalorder %s54, 1
      %p129 = por %p127, %p128
      %p131 = scmp.ne.s32.totalorder %s114, %s130
      %p132 = scmp.eq.s32.totalorder %s54, 0
      %p133 = por %p131, %p132
      %s134 = ssub.s32 %s48, %s55
      %p135 = scmp.eq.s32.totalorder %s134, 0
      %s137 = sadd.s32 %s136, 1
      %s138 = scalar_select %p135, %s136, %s137
      %p141 = pneg %p135
      %p142 = scmp.eq.s32.totalorder %s48, 1
      %p143 = por %p141, %p142
      %p144 = scmp.ne.s32.totalorder %s136, %s139
      %p145 = scmp.eq.s32.totalorder %s48, 0
      %p146 = por %p144, %p145
      %p147 = scmp.ne.s32.totalorder %s136, %s139
      %p148 = scmp.eq.s32.totalorder %s53, 1
      %p149 = por %p147, %p148
      %p150 = scmp.ne.s32.totalorder %s139, %s140
      %p151 = scmp.eq.s32.totalorder %s53, 0
      %p152 = por %p150, %p151
      %p153 = scmp.ne.s32.totalorder %s139, %s140
      %p154 = scmp.eq.s32.totalorder %s54, 1
      %p155 = por %p153, %p154
      %p157 = scmp.ne.s32.totalorder %s140, %s156
      %p158 = scmp.eq.s32.totalorder %s54, 0
      %p159 = por %p157, %p158
      %s160 = ssub.s32 %s48, %s55
      %p161 = scmp.eq.s32.totalorder %s160, 0
      %s163 = sadd.s32 %s162, 1
      %s164 = scalar_select %p161, %s162, %s163
      %p167 = pneg %p161
      %p168 = scmp.eq.s32.totalorder %s48, 1
      %p169 = por %p167, %p168
      %p170 = scmp.ne.s32.totalorder %s162, %s165
      %p171 = scmp.eq.s32.totalorder %s48, 0
      %p172 = por %p170, %p171
      %p173 = scmp.ne.s32.totalorder %s162, %s165
      %p174 = scmp.eq.s32.totalorder %s53, 1
      %p175 = por %p173, %p174
      %p176 = scmp.ne.s32.totalorder %s165, %s166
      %p177 = scmp.eq.s32.totalorder %s53, 0
      %p178 = por %p176, %p177
      %p179 = scmp.ne.s32.totalorder %s165, %s166
      %p180 = scmp.eq.s32.totalorder %s54, 1
      %p181 = por %p179, %p180
      %p183 = scmp.ne.s32.totalorder %s166, %s182
      %p184 = scmp.eq.s32.totalorder %s54, 0
      %p185 = por %p183, %p184
      %s187 = sadd.s32 %s186, 1
      %p190 = scmp.eq.s32.totalorder %s48, 1
      %p191 = scmp.ne.s32.totalorder %s186, %s188
      %p192 = scmp.eq.s32.totalorder %s48, 0
      %p193 = por %p191, %p192
      %p194 = scmp.ne.s32.totalorder %s186, %s188
      %p195 = scmp.eq.s32.totalorder %s53, 1
      %p196 = por %p194, %p195
      %p197 = scmp.ne.s32.totalorder %s188, %s189
      %p198 = scmp.eq.s32.totalorder %s53, 0
      %p199 = por %p197, %p198
      %p200 = scmp.ne.s32.totalorder %s188, %s189
      %p201 = scmp.eq.s32.totalorder %s54, 1
      %p202 = por %p200, %p201
      %p204 = scmp.ne.s32.totalorder %s189, %s203
      %p205 = scmp.eq.s32.totalorder %s54, 0
      %p206 = por %p204, %p205
      %s208 = sadd.s32 %s207, 1
      %p211 = scmp.eq.s32.totalorder %s48, 1
      %p212 = scmp.ne.s32.totalorder %s207, %s209
      %p213 = scmp.eq.s32.totalorder %s48, 0
      %p214 = por %p212, %p213
      %p215 = scmp.ne.s32.totalorder %s207, %s209
      %p216 = scmp.eq.s32.totalorder %s53, 1
      %p217 = por %p215, %p216
      %p218 = scmp.ne.s32.totalorder %s209, %s210
      %p219 = scmp.eq.s32.totalorder %s53, 0
      %p220 = por %p218, %p219
      %p221 = scmp.ne.s32.totalorder %s209, %s210
      %p222 = scmp.eq.s32.totalorder %s54, 1
      %p223 = por %p221, %p222
      %p225 = scmp.ne.s32.totalorder %s210, %s224
      %p226 = scmp.eq.s32.totalorder %s54, 0
      %p227 = por %p225, %p226
      %s229 = sadd.s32 %s228, 1
      %p232 = scmp.eq.s32.totalorder %s48, 1
      %p233 = scmp.ne.s32.totalorder %s228, %s230
      %p234 = scmp.eq.s32.totalorder %s48, 0
      %p235 = por %p233, %p234
      %p236 = scmp.ne.s32.totalorder %s228, %s230
      %p237 = scmp.eq.s32.totalorder %s53, 1
      %p238 = por %p236, %p237
      %p239 = scmp.ne.s32.totalorder %s230, %s231
      %p240 = scmp.eq.s32.totalorder %s53, 0
      %p241 = por %p239, %p240
      %p242 = scmp.ne.s32.totalorder %s230, %s231
      %p243 = scmp.eq.s32.totalorder %s54, 1
      %p244 = por %p242, %p243
      %p246 = scmp.ne.s32.totalorder %s231, %s245
      %p247 = scmp.eq.s32.totalorder %s54, 0
      %p248 = por %p246, %p247
      %s250 = sadd.s32 %s249, 1
      %p253 = scmp.eq.s32.totalorder %s48, 1
      %p254 = scmp.ne.s32.totalorder %s249, %s251
      %p255 = scmp.eq.s32.totalorder %s48, 0
      %p256 = por %p254, %p255
      %p257 = scmp.ne.s32.totalorder %s249, %s251
      %p258 = scmp.eq.s32.totalorder %s53, 1
      %p259 = por %p257, %p258
      %p260 = scmp.ne.s32.totalorder %s251, %s252
      %p261 = scmp.eq.s32.totalorder %s53, 0
      %p262 = por %p260, %p261
      %p263 = scmp.ne.s32.totalorder %s251, %s252
      %p264 = scmp.eq.s32.totalorder %s54, 1
      %p265 = por %p263, %p264
      %p267 = scmp.ne.s32.totalorder %s252, %s266
      %p268 = scmp.eq.s32.totalorder %s54, 0
      %p269 = por %p267, %p268
      %s271 = sadd.s32 %s270, 1
      %p274 = scmp.eq.s32.totalorder %s48, 1
      %p275 = scmp.ne.s32.totalorder %s270, %s272
      %p276 = scmp.eq.s32.totalorder %s48, 0
      %p277 = por %p275, %p276
      %p278 = scmp.ne.s32.totalorder %s270, %s272
      %p279 = scmp.eq.s32.totalorder %s53, 1
      %p280 = por %p278, %p279
      %p281 = scmp.ne.s32.totalorder %s272, %s273
      %p282 = scmp.eq.s32.totalorder %s53, 0
      %p283 = por %p281, %p282
      %p284 = scmp.ne.s32.totalorder %s272, %s273
      %p285 = scmp.eq.s32.totalorder %s54, 1
      %p286 = por %p284, %p285
      %p288 = scmp.ne.s32.totalorder %s273, %s287
      %p289 = scmp.eq.s32.totalorder %s54, 0
      %p290 = por %p288, %p289
      %s292 = sadd.s32 %s291, 1
      %p295 = scmp.eq.s32.totalorder %s48, 1
      %p296 = scmp.ne.s32.totalorder %s291, %s293
      %p297 = scmp.eq.s32.totalorder %s48, 0
      %p298 = por %p296, %p297
      %p299 = scmp.ne.s32.totalorder %s291, %s293
      %p300 = scmp.eq.s32.totalorder %s53, 1
      %p301 = por %p299, %p300
      %p302 = scmp.ne.s32.totalorder %s293, %s294
      %p303 = scmp.eq.s32.totalorder %s53, 0
      %p304 = por %p302, %p303
      %p305 = scmp.ne.s32.totalorder %s293, %s294
      %p306 = scmp.eq.s32.totalorder %s54, 1
      %p307 = por %p305, %p306
      %p309 = scmp.ne.s32.totalorder %s294, %s308
      %p310 = scmp.eq.s32.totalorder %s54, 0
      %p311 = por %p309, %p310
      %s313 = sadd.s32 %s312, 1
      %p316 = scmp.eq.s32.totalorder %s48, 1
      %p317 = scmp.ne.s32.totalorder %s312, %s314
      %p318 = scmp.eq.s32.totalorder %s48, 0
      %p319 = por %p317, %p318
      %p320 = scmp.ne.s32.totalorder %s312, %s314
      %p321 = scmp.eq.s32.totalorder %s53, 1
      %p322 = por %p320, %p321
      %p323 = scmp.ne.s32.totalorder %s314, %s315
      %p324 = scmp.eq.s32.totalorder %s53, 0
      %p325 = por %p323, %p324
      %p326 = scmp.ne.s32.totalorder %s314, %s315
      %p327 = scmp.eq.s32.totalorder %s54, 1
      %p328 = por %p326, %p327
      %p330 = scmp.ne.s32.totalorder %s315, %s329
      %p331 = scmp.eq.s32.totalorder %s54, 0
      %p332 = por %p330, %p331
      %s334 = sadd.s32 %s333, 1
      %p337 = scmp.eq.s32.totalorder %s48, 1
      %p338 = scmp.ne.s32.totalorder %s333, %s335
      %p339 = scmp.eq.s32.totalorder %s48, 0
      %p340 = por %p338, %p339
      %p341 = scmp.ne.s32.totalorder %s333, %s335
      %p342 = scmp.eq.s32.totalorder %s53, 1
      %p343 = por %p341, %p342
      %p344 = scmp.ne.s32.totalorder %s335, %s336
      %p345 = scmp.eq.s32.totalorder %s53, 0
      %p346 = por %p344, %p345
      %p347 = scmp.ne.s32.totalorder %s335, %s336
      %p348 = scmp.eq.s32.totalorder %s54, 1
      %p349 = por %p347, %p348
      %p351 = scmp.ne.s32.totalorder %s336, %s350
      %p352 = scmp.eq.s32.totalorder %s54, 0
      %p353 = por %p351, %p352
      %s355 = sadd.s32 %s354, 1
      %p358 = scmp.eq.s32.totalorder %s48, 1
      %p359 = scmp.ne.s32.totalorder %s354, %s356
      %p360 = scmp.eq.s32.totalorder %s48, 0
      %p361 = por %p359, %p360
      %p362 = scmp.ne.s32.totalorder %s354, %s356
      %p363 = scmp.eq.s32.totalorder %s53, 1
      %p364 = por %p362, %p363
      %p365 = scmp.ne.s32.totalorder %s356, %s357
      %p366 = scmp.eq.s32.totalorder %s53, 0
      %p367 = por %p365, %p366
      %p368 = scmp.ne.s32.totalorder %s356, %s357
      %p369 = scmp.eq.s32.totalorder %s54, 1
      %p370 = por %p368, %p369
      %p372 = scmp.ne.s32.totalorder %s357, %s371
      %p373 = scmp.eq.s32.totalorder %s54, 0
      %p374 = por %p372, %p373
      %s376 = sadd.s32 %s375, 1
      %p379 = scmp.eq.s32.totalorder %s48, 1
      %p380 = scmp.ne.s32.totalorder %s375, %s377
      %p381 = scmp.eq.s32.totalorder %s48, 0
      %p382 = por %p380, %p381
      %p383 = scmp.ne.s32.totalorder %s375, %s377
      %p384 = scmp.eq.s32.totalorder %s53, 1
      %p385 = por %p383, %p384
      %p386 = scmp.ne.s32.totalorder %s377, %s378
      %p387 = scmp.eq.s32.totalorder %s53, 0
      %p388 = por %p386, %p387
      %p389 = scmp.ne.s32.totalorder %s377, %s378
      %p390 = scmp.eq.s32.totalorder %s54, 1
      %p391 = por %p389, %p390
      %p393 = scmp.ne.s32.totalorder %s378, %s392
      %p394 = scmp.eq.s32.totalorder %s54, 0
      %p395 = por %p393, %p394
      %s397 = sadd.s32 %s396, 1
      %p400 = scmp.eq.s32.totalorder %s48, 1
      %p401 = scmp.ne.s32.totalorder %s396, %s398
      %p402 = scmp.eq.s32.totalorder %s48, 0
      %p403 = por %p401, %p402
      %p404 = scmp.ne.s32.totalorder %s396, %s398
      %p405 = scmp.eq.s32.totalorder %s53, 1
      %p406 = por %p404, %p405
      %p407 = scmp.ne.s32.totalorder %s398, %s399
      %p408 = scmp.eq.s32.totalorder %s53, 0
      %p409 = por %p407, %p408
      %p410 = scmp.ne.s32.totalorder %s398, %s399
      %p411 = scmp.eq.s32.totalorder %s54, 1
      %p412 = por %p410, %p411
      %p414 = scmp.ne.s32.totalorder %s399, %s413
      %p415 = scmp.eq.s32.totalorder %s54, 0
      %p416 = por %p414, %p415
      %s418 = sadd.s32 %s417, 1
      %p421 = scmp.eq.s32.totalorder %s48, 1
      %p422 = scmp.ne.s32.totalorder %s417, %s419
      %p423 = scmp.eq.s32.totalorder %s48, 0
      %p424 = por %p422, %p423
      %p425 = scmp.ne.s32.totalorder %s417, %s419
      %p426 = scmp.eq.s32.totalorder %s53, 1
      %p427 = por %p425, %p426
      %p428 = scmp.ne.s32.totalorder %s419, %s420
      %p429 = scmp.eq.s32.totalorder %s53, 0
      %p430 = por %p428, %p429
      %p431 = scmp.ne.s32.totalorder %s419, %s420
      %p432 = scmp.eq.s32.totalorder %s54, 1
      %p433 = por %p431, %p432
      %p435 = scmp.ne.s32.totalorder %s420, %s434
      %p436 = scmp.eq.s32.totalorder %s54, 0
      %p437 = por %p435, %p436
      %s439 = sadd.s32 %s438, 1
      %p442 = scmp.eq.s32.totalorder %s48, 1
      %p443 = scmp.ne.s32.totalorder %s438, %s440
      %p444 = scmp.eq.s32.totalorder %s48, 0
      %p445 = por %p443, %p444
      %p446 = scmp.ne.s32.totalorder %s438, %s440
      %p447 = scmp.eq.s32.totalorder %s53, 1
      %p448 = por %p446, %p447
      %p449 = scmp.ne.s32.totalorder %s440, %s441
      %p450 = scmp.eq.s32.totalorder %s53, 0
      %p451 = por %p449, %p450
      %p452 = scmp.ne.s32.totalorder %s440, %s441
      %p453 = scmp.eq.s32.totalorder %s54, 1
      %p454 = por %p452, %p453
      %p456 = scmp.ne.s32.totalorder %s441, %s455
      %p457 = scmp.eq.s32.totalorder %s54, 0
      %p458 = por %p456, %p457
      %s460 = sadd.s32 %s459, 1
      %p463 = scmp.eq.s32.totalorder %s48, 1
      %p464 = scmp.ne.s32.totalorder %s459, %s461
      %p465 = scmp.eq.s32.totalorder %s48, 0
      %p466 = por %p464, %p465
      %p467 = scmp.ne.s32.totalorder %s459, %s461
      %p468 = scmp.eq.s32.totalorder %s53, 1
      %p469 = por %p467, %p468
      %p470 = scmp.ne.s32.totalorder %s461, %s462
      %p471 = scmp.eq.s32.totalorder %s53, 0
      %p472 = por %p470, %p471
      %p473 = scmp.ne.s32.totalorder %s461, %s462
      %p474 = scmp.eq.s32.totalorder %s54, 1
      %p475 = por %p473, %p474
      %p477 = scmp.ne.s32.totalorder %s462, %s476
      %p478 = scmp.eq.s32.totalorder %s54, 0
      %p479 = por %p477, %p478
      %s481 = sadd.s32 %s480, 1
      %p484 = scmp.eq.s32.totalorder %s48, 1
      %p485 = scmp.ne.s32.totalorder %s480, %s482
      %p486 = scmp.eq.s32.totalorder %s48, 0
      %p487 = por %p485, %p486
      %p488 = scmp.ne.s32.totalorder %s480, %s482
      %p489 = scmp.eq.s32.totalorder %s53, 1
      %p490 = por %p488, %p489
      %p491 = scmp.ne.s32.totalorder %s482, %s483
      %p492 = scmp.eq.s32.totalorder %s53, 0
      %p493 = por %p491, %p492
      %p494 = scmp.ne.s32.totalorder %s482, %s483
      %p495 = scmp.eq.s32.totalorder %s54, 1
      %p496 = por %p494, %p495
      %p498 = scmp.ne.s32.totalorder %s483, %s497
      %p499 = scmp.eq.s32.totalorder %s54, 0
      %p500 = por %p498, %p499
      %s502 = sadd.s32 %s501, 1
      %p505 = scmp.eq.s32.totalorder %s48, 1
      %p506 = scmp.ne.s32.totalorder %s501, %s503
      %p507 = scmp.eq.s32.totalorder %s48, 0
      %p508 = por %p506, %p507
      %p509 = scmp.ne.s32.totalorder %s501, %s503
      %p510 = scmp.eq.s32.totalorder %s53, 1
      %p511 = por %p509, %p510
      %p512 = scmp.ne.s32.totalorder %s503, %s504
      %p513 = scmp.eq.s32.totalorder %s53, 0
      %p514 = por %p512, %p513
      %p515 = scmp.ne.s32.totalorder %s503, %s504
      %p516 = scmp.eq.s32.totalorder %s54, 1
      %p517 = por %p515, %p516
      %p519 = scmp.ne.s32.totalorder %s504, %s518
      %p520 = scmp.eq.s32.totalorder %s54, 0
      %p521 = por %p519, %p520
      %s523 = sadd.s32 %s522, 1
      %p526 = scmp.eq.s32.totalorder %s48, 1
      %p527 = scmp.ne.s32.totalorder %s522, %s524
      %p528 = scmp.eq.s32.totalorder %s48, 0
      %p529 = por %p527, %p528
      %p530 = scmp.ne.s32.totalorder %s522, %s524
      %p531 = scmp.eq.s32.totalorder %s53, 1
      %p532 = por %p530, %p531
      %p533 = scmp.ne.s32.totalorder %s524, %s525
      %p534 = scmp.eq.s32.totalorder %s53, 0
      %p535 = por %p533, %p534
      %p536 = scmp.ne.s32.totalorder %s524, %s525
      %p537 = scmp.eq.s32.totalorder %s54, 1
      %p538 = por %p536, %p537
      %p540 = scmp.ne.s32.totalorder %s525, %s539
      %p541 = scmp.eq.s32.totalorder %s54, 0
      %p542 = por %p540, %p541
      %s543 = ssub.s32 %s48, %s55
      %p544 = scmp.eq.s32.totalorder %s543, 0
      %s546 = sadd.s32 %s545, 1
      %s547 = scalar_select %p544, %s545, %s546
      %p550 = pneg %p544
      %p551 = scmp.eq.s32.totalorder %s48, 1
      %p552 = por %p550, %p551
      %p553 = scmp.ne.s32.totalorder %s545, %s548
      %p554 = scmp.eq.s32.totalorder %s48, 0
      %p555 = por %p553, %p554
      %p556 = scmp.ne.s32.totalorder %s545, %s548
      %p557 = scmp.eq.s32.totalorder %s53, 1
      %p558 = por %p556, %p557
      %p559 = scmp.ne.s32.totalorder %s548, %s549
      %p560 = scmp.eq.s32.totalorder %s53, 0
      %p561 = por %p559, %p560
      %p562 = scmp.ne.s32.totalorder %s548, %s549
      %p563 = scmp.eq.s32.totalorder %s54, 1
      %p564 = por %p562, %p563
      %p566 = scmp.ne.s32.totalorder %s549, %s565
      %p567 = scmp.eq.s32.totalorder %s54, 0
      %p568 = por %p566, %p567
      %s569 = ssub.s32 %s48, %s55
      %p570 = scmp.eq.s32.totalorder %s569, 0
      %s572 = sadd.s32 %s571, 1
      %s573 = scalar_select %p570, %s571, %s572
      %p576 = pneg %p570
      %p577 = scmp.eq.s32.totalorder %s48, 1
      %p578 = por %p576, %p577
      %p579 = scmp.ne.s32.totalorder %s571, %s574
      %p580 = scmp.eq.s32.totalorder %s48, 0
      %p581 = por %p579, %p580
      %p582 = scmp.ne.s32.totalorder %s571, %s574
      %p583 = scmp.eq.s32.totalorder %s53, 1
      %p584 = por %p582, %p583
      %p585 = scmp.ne.s32.totalorder %s574, %s575
      %p586 = scmp.eq.s32.totalorder %s53, 0
      %p587 = por %p585, %p586
      %p588 = scmp.ne.s32.totalorder %s574, %s575
      %p589 = scmp.eq.s32.totalorder %s54, 1
      %p590 = por %p588, %p589
      %p592 = scmp.ne.s32.totalorder %s575, %s591
      %p593 = scmp.eq.s32.totalorder %s54, 0
      %p594 = por %p592, %p593
      %p595 = scmp.le.s32.totalorder 1, %s48
      %p596 = scmp.lt.s32.totalorder %s48, 3
      %p597 = pnand %p595, %p596
      %p598 = pneg %p597
      // Predicated region
      $region9: #{tpu_custom_call.1} parent=5 // pred_check
        _
      $region10: #{tpu_custom_call.1} parent=5 // pred_check_branch
        %600 = sbr.rel (%p597) target = $region12
      $region11: #{tpu_custom_call.1} parent=5 // pred_region
        %s601 = ssub.s32 %s48, 1
        // Predicated region
        $region13: #{tpu_custom_call.1} parent=11 // pred_check
          %p602 = pneg %p199
        $region14: #{tpu_custom_call.1} parent=11 // pred_check_branch
          %604 = sbr.rel (%p602) target = $region16
        $region15: #{tpu_custom_call.1} parent=11 // pred_region
          %606 = vsyncadd [#allocation16], 0
          %s608 = sshll.u32 %s5, 4
          %s609 = int_to_ptr.hbm [resolvable:$true] %s608
          %s610 = sshll.u32 [#allocation15], 4
          %s611 = int_to_ptr.vmem [resolvable:$true] %s610
          %613 = dma.hbm_to_vmem [thread:$0]  %s609, 128, %s611, [#allocation16]
        $region16: #{tpu_custom_call.1} parent=11 // pred_fallthru
          _
        // Predicated region
        $region17: #{tpu_custom_call.1} parent=11 // pred_check
          %p614 = pneg %p220
        $region18: #{tpu_custom_call.1} parent=11 // pred_check_branch
          %616 = sbr.rel (%p614) target = $region20
        $region19: #{tpu_custom_call.1} parent=11 // pred_region
          %618 = vsyncadd [#allocation16], 0
          %s620 = sshll.u32 %s6, 4
          %s621 = int_to_ptr.hbm [resolvable:$true] %s620
          %s622 = sshll.u32 [#allocation17], 4
          %s623 = int_to_ptr.vmem [resolvable:$true] %s622
          %625 = dma.hbm_to_vmem [thread:$0]  %s621, 128, %s623, [#allocation16]
        $region20: #{tpu_custom_call.1} parent=11 // pred_fallthru
          _
        // Predicated region
        $region21: #{tpu_custom_call.1} parent=11 // pred_check
          %p626 = pneg %p241
        $region22: #{tpu_custom_call.1} parent=11 // pred_check_branch
          %628 = sbr.rel (%p626) target = $region24
        $region23: #{tpu_custom_call.1} parent=11 // pred_region
          %630 = vsyncadd [#allocation19], 0
          %s632 = sshll.u32 %s7, 4
          %s633 = int_to_ptr.hbm [resolvable:$true] %s632
          %s634 = sshll.u32 [#allocation18], 4
          %s635 = int_to_ptr.vmem [resolvable:$true] %s634
          %637 = dma.hbm_to_vmem [thread:$0]  %s633, 128, %s635, [#allocation19]
        $region24: #{tpu_custom_call.1} parent=11 // pred_fallthru
          _
        // Predicated region
        $region25: #{tpu_custom_call.1} parent=11 // pred_check
          %p638 = pneg %p262
        $region26: #{tpu_custom_call.1} parent=11 // pred_check_branch
          %640 = sbr.rel (%p638) target = $region28
        $region27: #{tpu_custom_call.1} parent=11 // pred_region
          _
        $region28: #{tpu_custom_call.1} parent=11 // pred_fallthru
          _
        // Predicated region
        $region29: #{tpu_custom_call.1} parent=11 // pred_check
          %p641 = pneg %p283
        $region30: #{tpu_custom_call.1} parent=11 // pred_check_branch
          %643 = sbr.rel (%p641) target = $region32
        $region31: #{tpu_custom_call.1} parent=11 // pred_region
          _
        $region32: #{tpu_custom_call.1} parent=11 // pred_fallthru
          _
        // Predicated region
        $region33: #{tpu_custom_call.1} parent=11 // pred_check
          %p644 = pneg %p304
        $region34: #{tpu_custom_call.1} parent=11 // pred_check_branch
          %646 = sbr.rel (%p644) target = $region36
        $region35: #{tpu_custom_call.1} parent=11 // pred_region
          _
        $region36: #{tpu_custom_call.1} parent=11 // pred_fallthru
          _
        // Predicated region
        $region37: #{tpu_custom_call.1} parent=11 // pred_check
          %p647 = pneg %p325
        $region38: #{tpu_custom_call.1} parent=11 // pred_check_branch
          %649 = sbr.rel (%p647) target = $region40
        $region39: #{tpu_custom_call.1} parent=11 // pred_region
          _
        $region40: #{tpu_custom_call.1} parent=11 // pred_fallthru
          _
        // Predicated region
        $region41: #{tpu_custom_call.1} parent=11 // pred_check
          %p650 = pneg %p346
        $region42: #{tpu_custom_call.1} parent=11 // pred_check_branch
          %652 = sbr.rel (%p650) target = $region44
        $region43: #{tpu_custom_call.1} parent=11 // pred_region
          _
        $region44: #{tpu_custom_call.1} parent=11 // pred_fallthru
          _
        // Predicated region
        $region45: #{tpu_custom_call.1} parent=11 // pred_check
          %p653 = pneg %p367
        $region46: #{tpu_custom_call.1} parent=11 // pred_check_branch
          %655 = sbr.rel (%p653) target = $region48
        $region47: #{tpu_custom_call.1} parent=11 // pred_region
          _
        $region48: #{tpu_custom_call.1} parent=11 // pred_fallthru
          _
        // Predicated region
        $region49: #{tpu_custom_call.1} parent=11 // pred_check
          %p656 = pneg %p388
        $region50: #{tpu_custom_call.1} parent=11 // pred_check_branch
          %658 = sbr.rel (%p656) target = $region52
        $region51: #{tpu_custom_call.1} parent=11 // pred_region
          %660 = vsyncadd [#allocation19], 0
          %s661 = sshll.u32 %s14, 4
          %s662 = int_to_ptr.hbm [resolvable:$true] %s661
          %s663 = sshll.u32 [#allocation20], 4
          %s664 = int_to_ptr.vmem [resolvable:$true] %s663
          %669 = dma.hbm_to_vmem [thread:$0]  %s662, 512, %s664, [#allocation19], 64, 64, 4
        $region52: #{tpu_custom_call.1} parent=11 // pred_fallthru
          _
        // Predicated region
        $region53: #{tpu_custom_call.1} parent=11 // pred_check
          %p670 = pneg %p409
        $region54: #{tpu_custom_call.1} parent=11 // pred_check_branch
          %672 = sbr.rel (%p670) target = $region56
        $region55: #{tpu_custom_call.1} parent=11 // pred_region
          _
        $region56: #{tpu_custom_call.1} parent=11 // pred_fallthru
          _
        // Predicated region
        $region57: #{tpu_custom_call.1} parent=11 // pred_check
          %p673 = pneg %p430
        $region58: #{tpu_custom_call.1} parent=11 // pred_check_branch
          %675 = sbr.rel (%p673) target = $region60
        $region59: #{tpu_custom_call.1} parent=11 // pred_region
          %677 = vsyncadd [#allocation22], 0
          %s678 = sshll.u32 %s16, 4
          %s679 = int_to_ptr.hbm [resolvable:$true] %s678
          %s680 = sshll.u32 [#allocation21], 4
          %s681 = int_to_ptr.vmem [resolvable:$true] %s680
          %686 = dma.hbm_to_vmem [thread:$0]  %s679, 512, %s681, [#allocation22], 64, 64, 4
        $region60: #{tpu_custom_call.1} parent=11 // pred_fallthru
          _
        // Predicated region
        $region61: #{tpu_custom_call.1} parent=11 // pred_check
          %p687 = pneg %p451
        $region62: #{tpu_custom_call.1} parent=11 // pred_check_branch
          %689 = sbr.rel (%p687) target = $region64
        $region63: #{tpu_custom_call.1} parent=11 // pred_region
          _
        $region64: #{tpu_custom_call.1} parent=11 // pred_fallthru
          _
        // Predicated region
        $region65: #{tpu_custom_call.1} parent=11 // pred_check
          %p690 = pneg %p472
        $region66: #{tpu_custom_call.1} parent=11 // pred_check_branch
          %692 = sbr.rel (%p690) target = $region68
        $region67: #{tpu_custom_call.1} parent=11 // pred_region
          _
        $region68: #{tpu_custom_call.1} parent=11 // pred_fallthru
          _
        // Predicated region
        $region69: #{tpu_custom_call.1} parent=11 // pred_check
          %p693 = pneg %p493
        $region70: #{tpu_custom_call.1} parent=11 // pred_check_branch
          %695 = sbr.rel (%p693) target = $region72
        $region71: #{tpu_custom_call.1} parent=11 // pred_region
          _
        $region72: #{tpu_custom_call.1} parent=11 // pred_fallthru
          _
        // Predicated region
        $region73: #{tpu_custom_call.1} parent=11 // pred_check
          %p696 = pneg %p514
        $region74: #{tpu_custom_call.1} parent=11 // pred_check_branch
          %698 = sbr.rel (%p696) target = $region76
        $region75: #{tpu_custom_call.1} parent=11 // pred_region
          _
        $region76: #{tpu_custom_call.1} parent=11 // pred_fallthru
          _
        // Predicated region
        $region77: #{tpu_custom_call.1} parent=11 // pred_check
          %p699 = pneg %p535
        $region78: #{tpu_custom_call.1} parent=11 // pred_check_branch
          %701 = sbr.rel (%p699) target = $region80
        $region79: #{tpu_custom_call.1} parent=11 // pred_region
          _
        $region80: #{tpu_custom_call.1} parent=11 // pred_fallthru
          _
      $region12: #{tpu_custom_call.1} parent=5 // pred_fallthru
        _
      %p702 = scmp.lt.s32.totalorder %s48, 2
      // Predicated region
      $region81: #{tpu_custom_call.1} parent=5 // pred_check
        %p703 = pneg %p702
      $region82: #{tpu_custom_call.1} parent=5 // pred_check_branch
        %705 = sbr.rel (%p703) target = $region84
      $region83: #{tpu_custom_call.1} parent=5 // pred_region
        // Predicated region
        $region85: #{tpu_custom_call.1} parent=83 // pred_check
          %p706 = pneg %p68
        $region86: #{tpu_custom_call.1} parent=83 // pred_check_branch
          %708 = sbr.rel (%p706) target = $region88
        $region87: #{tpu_custom_call.1} parent=83 // pred_region
          %s709 = sand.u32 %s58, 1
          %s710 = scalar_lea.sflag [#allocation7], %s709
          %s711 = sand.u32 %s58, 1
          %s712 = smul.addr %s711, 8
          %s713 = scalar_lea.vmem [#allocation6], %s712
          %715 = vsyncadd %s710, 0
          %s716 = smul.addr %s48, 8
          %s717 = scalar_lea.hbm %s0, %s716
          %s719 = sshll.u32 %s717, 4
          %s720 = int_to_ptr.hbm [resolvable:$true] %s719
          %s721 = sshll.u32 %s713, 4
          %s722 = int_to_ptr.vmem [resolvable:$true] %s721
          %724 = dma.hbm_to_vmem [thread:$0]  %s720, 128, %s722, %s710
        $region88: #{tpu_custom_call.1} parent=83 // pred_fallthru
          _
        // Predicated region
        $region89: #{tpu_custom_call.1} parent=83 // pred_check
          %p725 = pneg %p94
        $region90: #{tpu_custom_call.1} parent=83 // pred_check_branch
          %727 = sbr.rel (%p725) target = $region92
        $region91: #{tpu_custom_call.1} parent=83 // pred_region
          %s728 = sand.u32 %s48, 1
          %s729 = scalar_lea.sflag [#allocation10], %s728
          %s730 = sand.u32 %s84, 1
          %s731 = smul.addr %s730, 8
          %s732 = scalar_lea.vmem [#allocation9], %s731
          %734 = vsyncadd %s729, 0
          %s735 = smul.addr %s48, 8
          %s736 = scalar_lea.hbm %s1, %s735
          %s738 = sshll.u32 %s736, 4
          %s739 = int_to_ptr.hbm [resolvable:$true] %s738
          %s740 = sshll.u32 %s732, 4
          %s741 = int_to_ptr.vmem [resolvable:$true] %s740
          %743 = dma.hbm_to_vmem [thread:$0]  %s739, 128, %s741, %s729
        $region92: #{tpu_custom_call.1} parent=83 // pred_fallthru
          _
        // Predicated region
        $region93: #{tpu_custom_call.1} parent=83 // pred_check
          %p744 = pneg %p120
        $region94: #{tpu_custom_call.1} parent=83 // pred_check_branch
          %746 = sbr.rel (%p744) target = $region96
        $region95: #{tpu_custom_call.1} parent=83 // pred_region
          %s747 = sand.u32 %s48, 1
          %s748 = scalar_lea.sflag [#allocation10], %s747
          %s749 = sand.u32 %s110, 1
          %s750 = smul.addr %s749, 8
          %s751 = scalar_lea.vmem [#allocation11], %s750
          %753 = vsyncadd %s748, 0
          %s754 = smul.addr %s48, 8
          %s755 = scalar_lea.hbm %s2, %s754
          %s757 = sshll.u32 %s755, 4
          %s758 = int_to_ptr.hbm [resolvable:$true] %s757
          %s759 = sshll.u32 %s751, 4
          %s760 = int_to_ptr.vmem [resolvable:$true] %s759
          %762 = dma.hbm_to_vmem [thread:$0]  %s758, 128, %s760, %s748
        $region96: #{tpu_custom_call.1} parent=83 // pred_fallthru
          _
        // Predicated region
        $region97: #{tpu_custom_call.1} parent=83 // pred_check
          %p763 = pneg %p146
        $region98: #{tpu_custom_call.1} parent=83 // pred_check_branch
          %765 = sbr.rel (%p763) target = $region100
        $region99: #{tpu_custom_call.1} parent=83 // pred_region
          %s766 = sand.u32 %s48, 1
          %s767 = scalar_lea.sflag [#allocation13], %s766
          %s768 = sand.u32 %s136, 1
          %s769 = smul.addr %s768, 8
          %s770 = scalar_lea.vmem [#allocation12], %s769
          %772 = vsyncadd %s767, 0
          %s773 = smul.addr %s48, 8
          %s774 = scalar_lea.hbm %s3, %s773
          %s776 = sshll.u32 %s774, 4
          %s777 = int_to_ptr.hbm [resolvable:$true] %s776
          %s778 = sshll.u32 %s770, 4
          %s779 = int_to_ptr.vmem [resolvable:$true] %s778
          %781 = dma.hbm_to_vmem [thread:$0]  %s777, 128, %s779, %s767
        $region100: #{tpu_custom_call.1} parent=83 // pred_fallthru
          _
        // Predicated region
        $region101: #{tpu_custom_call.1} parent=83 // pred_check
          %p782 = pneg %p172
        $region102: #{tpu_custom_call.1} parent=83 // pred_check_branch
          %784 = sbr.rel (%p782) target = $region104
        $region103: #{tpu_custom_call.1} parent=83 // pred_region
          %s785 = sand.u32 %s48, 1
          %s786 = scalar_lea.sflag [#allocation13], %s785
          %s787 = sand.u32 %s162, 1
          %s788 = smul.addr %s787, 8
          %s789 = scalar_lea.vmem [#allocation14], %s788
          %791 = vsyncadd %s786, 0
          %s792 = smul.addr %s48, 8
          %s793 = scalar_lea.hbm %s4, %s792
          %s795 = sshll.u32 %s793, 4
          %s796 = int_to_ptr.hbm [resolvable:$true] %s795
          %s797 = sshll.u32 %s789, 4
          %s798 = int_to_ptr.vmem [resolvable:$true] %s797
          %800 = dma.hbm_to_vmem [thread:$0]  %s796, 128, %s798, %s786
        $region104: #{tpu_custom_call.1} parent=83 // pred_fallthru
          _
      $region84: #{tpu_custom_call.1} parent=5 // pred_fallthru
        _
      %p801 = scmp.le.s32.totalorder 1, %s48
      %p802 = scmp.lt.s32.totalorder %s48, 3
      %p803 = pnand %p801, %p802
      %p804 = pneg %p803
      // Predicated region
      $region105: #{tpu_custom_call.1} parent=5 // pred_check
        _
      $region106: #{tpu_custom_call.1} parent=5 // pred_check_branch
        %806 = sbr.rel (%p803) target = $region108
      $region107: #{tpu_custom_call.1} parent=5 // pred_region
        %s807 = ssub.s32 %s48, 1
        %s808 = sand.u32 %s61, 1
        %s809 = scalar_lea.sflag [#allocation7], %s808
        %s810 = sand.u32 %s61, 1
        %s811 = smul.addr %s810, 8
        %s812 = scalar_lea.vmem [#allocation6], %s811
        // Predicated region
        $region109: #{tpu_custom_call.1} parent=107 // pred_check
          %p813 = pneg %p74
        $region110: #{tpu_custom_call.1} parent=107 // pred_check_branch
          %815 = sbr.rel (%p813) target = $region112
        $region111: #{tpu_custom_call.1} parent=107 // pred_region
          %817 = dma.done %s809, 128
        $region112: #{tpu_custom_call.1} parent=107 // pred_fallthru
          _
        %s818 = sand.u32 %s53, 1
        %s819 = scalar_lea.sflag [#allocation10], %s818
        %s820 = sand.u32 %s87, 1
        %s821 = smul.addr %s820, 8
        %s822 = scalar_lea.vmem [#allocation9], %s821
        // Predicated region
        $region113: #{tpu_custom_call.1} parent=107 // pred_check
          %p823 = pneg %p100
        $region114: #{tpu_custom_call.1} parent=107 // pred_check_branch
          %825 = sbr.rel (%p823) target = $region116
        $region115: #{tpu_custom_call.1} parent=107 // pred_region
          %827 = dma.done %s819, 128
        $region116: #{tpu_custom_call.1} parent=107 // pred_fallthru
          _
        %s828 = sand.u32 %s53, 1
        %s829 = scalar_lea.sflag [#allocation10], %s828
        %s830 = sand.u32 %s113, 1
        %s831 = smul.addr %s830, 8
        %s832 = scalar_lea.vmem [#allocation11], %s831
        // Predicated region
        $region117: #{tpu_custom_call.1} parent=107 // pred_check
          %p833 = pneg %p126
        $region118: #{tpu_custom_call.1} parent=107 // pred_check_branch
          %835 = sbr.rel (%p833) target = $region120
        $region119: #{tpu_custom_call.1} parent=107 // pred_region
          %837 = dma.done %s829, 128
        $region120: #{tpu_custom_call.1} parent=107 // pred_fallthru
          _
        %s838 = sand.u32 %s53, 1
        %s839 = scalar_lea.sflag [#allocation13], %s838
        %s840 = sand.u32 %s139, 1
        %s841 = smul.addr %s840, 8
        %s842 = scalar_lea.vmem [#allocation12], %s841
        // Predicated region
        $region121: #{tpu_custom_call.1} parent=107 // pred_check
          %p843 = pneg %p152
        $region122: #{tpu_custom_call.1} parent=107 // pred_check_branch
          %845 = sbr.rel (%p843) target = $region124
        $region123: #{tpu_custom_call.1} parent=107 // pred_region
          %847 = dma.done %s839, 128
        $region124: #{tpu_custom_call.1} parent=107 // pred_fallthru
          _
        %s848 = sand.u32 %s53, 1
        %s849 = scalar_lea.sflag [#allocation13], %s848
        %s850 = sand.u32 %s165, 1
        %s851 = smul.addr %s850, 8
        %s852 = scalar_lea.vmem [#allocation14], %s851
        // Predicated region
        $region125: #{tpu_custom_call.1} parent=107 // pred_check
          %p853 = pneg %p178
        $region126: #{tpu_custom_call.1} parent=107 // pred_check_branch
          %855 = sbr.rel (%p853) target = $region128
        $region127: #{tpu_custom_call.1} parent=107 // pred_region
          %857 = dma.done %s849, 128
        $region128: #{tpu_custom_call.1} parent=107 // pred_fallthru
          _
        // Predicated region
        $region129: #{tpu_custom_call.1} parent=107 // pred_check
          %p858 = pneg %p199
        $region130: #{tpu_custom_call.1} parent=107 // pred_check_branch
          %860 = sbr.rel (%p858) target = $region132
        $region131: #{tpu_custom_call.1} parent=107 // pred_region
          %862 = dma.done [#allocation16], 128
        $region132: #{tpu_custom_call.1} parent=107 // pred_fallthru
          _
        // Predicated region
        $region133: #{tpu_custom_call.1} parent=107 // pred_check
          %p863 = pneg %p220
        $region134: #{tpu_custom_call.1} parent=107 // pred_check_branch
          %865 = sbr.rel (%p863) target = $region136
        $region135: #{tpu_custom_call.1} parent=107 // pred_region
          %867 = dma.done [#allocation16], 128
        $region136: #{tpu_custom_call.1} parent=107 // pred_fallthru
          _
        // Predicated region
        $region137: #{tpu_custom_call.1} parent=107 // pred_check
          %p868 = pneg %p241
        $region138: #{tpu_custom_call.1} parent=107 // pred_check_branch
          %870 = sbr.rel (%p868) target = $region140
        $region139: #{tpu_custom_call.1} parent=107 // pred_region
          %872 = dma.done [#allocation19], 128
        $region140: #{tpu_custom_call.1} parent=107 // pred_fallthru
          _
        // Predicated region
        $region141: #{tpu_custom_call.1} parent=107 // pred_check
          %p873 = pneg %p388
        $region142: #{tpu_custom_call.1} parent=107 // pred_check_branch
          %875 = sbr.rel (%p873) target = $region144
        $region143: #{tpu_custom_call.1} parent=107 // pred_region
          %877 = dma.done [#allocation19], 512
        $region144: #{tpu_custom_call.1} parent=107 // pred_fallthru
          _
        // Predicated region
        $region145: #{tpu_custom_call.1} parent=107 // pred_check
          %p878 = pneg %p430
        $region146: #{tpu_custom_call.1} parent=107 // pred_check_branch
          %880 = sbr.rel (%p878) target = $region148
        $region147: #{tpu_custom_call.1} parent=107 // pred_region
          %882 = dma.done [#allocation22], 512
        $region148: #{tpu_custom_call.1} parent=107 // pred_fallthru
          _
        %s883 = sand.u32 %s61, 1
        %s884 = scalar_lea.sflag [#allocation7], %s883
        %s885 = sand.u32 %s61, 1
        %s886 = smul.addr %s885, 8
        %s887 = scalar_lea.vmem [#allocation6], %s886
        %p888 = pneg %p74
        %p889 = pneg %p71
        %s890 = sand.u32 %s53, 1
        %s891 = scalar_lea.sflag [#allocation10], %s890
        %s892 = sand.u32 %s87, 1
        %s893 = smul.addr %s892, 8
        %s894 = scalar_lea.vmem [#allocation9], %s893
        %p895 = pneg %p100
        %p896 = pneg %p97
        %s897 = sand.u32 %s53, 1
        %s898 = scalar_lea.sflag [#allocation10], %s897
        %s899 = sand.u32 %s113, 1
        %s900 = smul.addr %s899, 8
        %s901 = scalar_lea.vmem [#allocation11], %s900
        %p902 = pneg %p126
        %p903 = pneg %p123
        %s904 = sand.u32 %s53, 1
        %s905 = scalar_lea.sflag [#allocation13], %s904
        %s906 = sand.u32 %s139, 1
        %s907 = smul.addr %s906, 8
        %s908 = scalar_lea.vmem [#allocation12], %s907
        %p909 = pneg %p152
        %p910 = pneg %p149
        %s911 = sand.u32 %s53, 1
        %s912 = scalar_lea.sflag [#allocation13], %s911
        %s913 = sand.u32 %s165, 1
        %s914 = smul.addr %s913, 8
        %s915 = scalar_lea.vmem [#allocation14], %s914
        %p916 = pneg %p178
        %p917 = pneg %p175
        %p918 = pneg %p199
        %p919 = pneg %p196
        %p920 = pneg %p220
        %p921 = pneg %p217
        %p922 = pneg %p241
        %p923 = pneg %p238
        %p924 = pneg %p262
        %p925 = pneg %p259
        %p926 = pneg %p283
        %p927 = pneg %p280
        %p928 = pneg %p304
        %p929 = pneg %p301
        %p930 = pneg %p325
        %p931 = pneg %p322
        %p932 = pneg %p346
        %p933 = pneg %p343
        %p934 = pneg %p367
        %p935 = pneg %p364
        %p936 = pneg %p388
        %p937 = pneg %p385
        %p938 = pneg %p409
        %p939 = pneg %p406
        %p940 = pneg %p430
        %p941 = pneg %p427
        %p942 = pneg %p451
        %p943 = pneg %p448
        %p944 = pneg %p472
        %p945 = pneg %p469
        %p946 = pneg %p493
        %p947 = pneg %p490
        %p948 = pneg %p514
        %p949 = pneg %p511
        %p950 = pneg %p535
        %p951 = pneg %p532
        %p952 = pneg %p561
        %p953 = pneg %p558
        %s954 = sand.u32 %s548, 1
        %s955 = scalar_lea.sflag [#allocation8], %s954
        %s956 = sand.u32 %s548, 1
        %s957 = smul.addr %s956, 8
        %s958 = scalar_lea.vmem [#allocation23], %s957
        %p959 = pneg %p587
        %p960 = pneg %p584
        %s961 = sand.u32 %s574, 1
        %s962 = scalar_lea.sflag [#allocation25], %s961
        %s963 = sand.u32 %s574, 1
        %s964 = smul.addr %s963, 8
        %s965 = scalar_lea.vmem [#allocation24], %s964
        %v967 = vld [vmem:[%s812] sm:$0xff]
        %v968 = vmul.f32 %v967, 5.656854
        %v969 = vld [vmem:[#allocation15] sm:$0xff]
        %v970 = vadd.f32 %v968, %v969
        %v971 = vld [vmem:[%s822] sm:$0xff]
        %v972 = vld [vmem:[%s832] sm:$0xff]
        %v973 = vld [vmem:[%s842] sm:$0xff]
        %v974 = vld [vmem:[%s852] sm:$0xff]
        %v975 = vld [vmem:[#allocation17] sm:$0x1]
        %v976 = vld [vmem:[#allocation18] sm:$0x1]
        %vm977 = vcmask 261120
        %v978 = vsel %vm977, %v970, 0.0
        %979 = vadd.xlane.f32.xlu0 %v978
        %v980 = vpop.xlane.xlu0 %979
        %v981 = vrcp.pop 32.0
        %v982 = vmul.f32 32.0, %v981
        %v983 = vsub.f32 1.0, %v982
        %v984 = vmul.f32 %v981, %v983
        %v985 = vadd.f32 %v981, %v984
        %vm986 = vweird.f32 %v981
        %v987 = vsel %vm986, %v981, %v985
        %v988 = vmul.f32 %v980, %v987
        %v989 = vsub.f32 %v970, %v988
        %v990 = vmul.f32 %v989, %v989
        %v991 = vsel %vm977, %v990, 0.0
        %992 = vadd.xlane.f32.xlu0 %v991
        %v993 = vpop.xlane.xlu0 %992
        %v994 = vmul.f32 %v993, 0.032258064
        %v995 = vperm.slane %v975, 0
        %v996 = vmul.f32 %v995, %v989
        %v997 = vrsqrt.pop %v994
        %v998 = vmul.f32 %v997, %v994
        %v999 = vmul.f32 %v998, %v997
        %v1000 = vmul.f32 0.5, %v999
        %v1001 = vsub.f32 1.5, %v1000
        %v1002 = vmul.f32 %v997, %v1001
        %v1003 = vmul.f32 %v994, %v1002
        %vm1004 = vcmp.eq.f32.partialorder %v994, inf
        %v1005 = vsel %vm1004, %v994, %v1003
        %vm1006 = vcmp.eq.f32.partialorder %v994, 0.0
        %v1007 = vand.u32 %v994, 2147483648
        %v1008 = vsel %vm1006, %v1007, %v1005
        %v1009 = vadd.f32 %v1008, 1e-06
        %v1010 = vrcp.pop %v1009
        %v1011 = vmul.f32 %v1009, %v1010
        %v1012 = vsub.f32 1.0, %v1011
        %v1013 = vmul.f32 %v1010, %v1012
        %v1014 = vadd.f32 %v1010, %v1013
        %vm1015 = vweird.f32 %v1009
        %vm1016 = vweird.f32 %v1010
        %vm1017 = vmor %vm1015, %vm1016
        %v1018 = vsel %vm1017, %v1010, %v1014
        %v1019 = vand.u32 2147483647, %v1009
        %vm1020 = vcmp.eq.f32.partialorder %v1019, 8.507059e+37
        %v1021 = vand.u32 %v1009, 2147483648
        %v1022 = vor.u32 1.1754944e-38, %v1021
        %v1023 = vsel %vm1020, %v1022, %v1018
        %v1024 = vmul.f32 %v996, %v1023
        %v1025 = vperm.slane %v976, 0
        %v1026 = vadd.f32 %v1024, %v1025
        %v1027 = vpack.c.bf16 %v1026, %v1026
        %v1028 = vld [vmem:[%s8] sm:$0xf]
        %v1029 = vld [vmem:[%s8 + $0x4] sm:$0xf]
        %v1030 = vld [vmem:[%s8 + $0x8] sm:$0xf]
        %v1031 = vld [vmem:[%s8 + $0xc] sm:$0xf]
        %v1032 = vld [vmem:[%s9] sm:$0x1]
        %v1033 = vperm.slane %v1032, 0
        %v1038 = vunpack.c.l.b16 %v1028
        %v1039 = vunpack.c.l.b16 %v1029
        %v1040 = vunpack.c.l.b16 %v1030
        %v1041 = vunpack.c.l.b16 %v1031
        %v1042 = vpack.c.b16 %v1039, %v1038
        %v1043 = vpack.c.b16 %v1041, %v1040
        %v1047 = vsel %vm977, %v1027, 0
        %1049 = vmatpush.bf16.msra.mxu0 0
        %1050 = vmatpush.bf16.msra.mxu0 0
        %1051 = vmatpush.bf16.msra.mxu0 0
        %1052 = vmatpush.bf16.msra.mxu0 0
        %1053 = vmatpush.bf16.msra.mxu0 0
        %1054 = vmatpush.bf16.msra.mxu0 0
        %1055 = vmatpush.bf16.msra.mxu0 %v1043
        %1056 = vmatpush.bf16.msra.mxu0 %v1042
        %1057 = vmatmul.bf16.gmra.mxu0 %v1047
        %v1058 = vpop.f32.mrf.mxu0
        %v1059 = vadd.f32 %v1033, %v1058
        %v1060 = vpop.f32.mrf.mxu0
        %1061 = vdwg.mxu0
        %v1062 = vld [vmem:[%s10] sm:$0xf]
        %v1063 = vld [vmem:[%s10 + $0x4] sm:$0xf]
        %v1064 = vld [vmem:[%s10 + $0x8] sm:$0xf]
        %v1065 = vld [vmem:[%s10 + $0xc] sm:$0xf]
        %v1066 = vld [vmem:[%s11] sm:$0x1]
        %vm1067 = vcmask 64512
        %1068 = vst.msk [vmem:[#allocation2] sm:$0xff] %vm1067, %v1059
        %1070 = vrot.lane.b32.xlu0 %v1059, 96
        %v1071 = vpop.permute.xlu0 %1070
        %1073 = vst.msk [vmem:[#allocation3] sm:$0xff] %vm1067, %v1071
        %1074 = vrot.lane.b32.xlu0 %v1059, 64
        %v1075 = vpop.permute.xlu0 %1074
        %1077 = vst.msk [vmem:[#allocation4] sm:$0xff] %vm1067, %v1075
        %1078 = vrot.lane.b32.xlu0 %v1059, 120
        %v1079 = vpop.permute.xlu0 %1078
        %s1081 = scalar_lea.vmem [#allocation2], 8
        %1082 = vst.msk [vmem:[%s1081] sm:$0xff] %vm1067, %v1079
        %1083 = vrot.lane.b32.xlu0 %v1059, 88
        %v1084 = vpop.permute.xlu0 %1083
        %s1086 = scalar_lea.vmem [#allocation3], 8
        %1087 = vst.msk [vmem:[%s1086] sm:$0xff] %vm1067, %v1084
        %1088 = vrot.lane.b32.xlu0 %v1059, 56
        %v1089 = vpop.permute.xlu0 %1088
        %s1091 = scalar_lea.vmem [#allocation4], 8
        %1092 = vst.msk [vmem:[%s1091] sm:$0xff] %vm1067, %v1089
        %1093 = vrot.lane.b32.xlu0 %v1059, 112
        %v1094 = vpop.permute.xlu0 %1093
        %s1096 = scalar_lea.vmem [#allocation2], 16
        %1097 = vst.msk [vmem:[%s1096] sm:$0xff] %vm1067, %v1094
        %1098 = vrot.lane.b32.xlu0 %v1059, 80
        %v1099 = vpop.permute.xlu0 %1098
        %s1101 = scalar_lea.vmem [#allocation3], 16
        %1102 = vst.msk [vmem:[%s1101] sm:$0xff] %vm1067, %v1099
        %1103 = vrot.lane.b32.xlu0 %v1059, 48
        %v1104 = vpop.permute.xlu0 %1103
        %s1106 = scalar_lea.vmem [#allocation4], 16
        %1107 = vst.msk [vmem:[%s1106] sm:$0xff] %vm1067, %v1104
        %1108 = vrot.lane.b32.xlu0 %v1059, 104
        %v1109 = vpop.permute.xlu0 %1108
        %s1111 = scalar_lea.vmem [#allocation2], 24
        %1112 = vst.msk [vmem:[%s1111] sm:$0xff] %vm1067, %v1109
        %1113 = vrot.lane.b32.xlu0 %v1059, 72
        %v1114 = vpop.permute.xlu0 %1113
        %s1116 = scalar_lea.vmem [#allocation3], 24
        %1117 = vst.msk [vmem:[%s1116] sm:$0xff] %vm1067, %v1114
        %1118 = vrot.lane.b32.xlu0 %v1059, 40
        %v1119 = vpop.permute.xlu0 %1118
        %s1121 = scalar_lea.vmem [#allocation4], 24
        %1122 = vst.msk [vmem:[%s1121] sm:$0xff] %vm1067, %v1119
        %v1123 = vld [vmem:[#allocation2] sm:$0xff]
        %v1124 = vld [vmem:[#allocation2 + $0x8] sm:$0xff]
        %v1125 = vld [vmem:[#allocation2 + $0x10] sm:$0xff]
        %v1126 = vld [vmem:[#allocation2 + $0x18] sm:$0xff]
        %v1127 = vpack.c.bf16 %v1123, %v1123
        %v1128 = vpack.c.bf16 %v1124, %v1124
        %v1129 = vpack.c.bf16 %v1125, %v1125
        %v1130 = vpack.c.bf16 %v1126, %v1126
        %v1131 = vld [vmem:[#allocation3] sm:$0xff]
        %v1132 = vld [vmem:[#allocation3 + $0x8] sm:$0xff]
        %v1133 = vld [vmem:[#allocation3 + $0x10] sm:$0xff]
        %v1134 = vld [vmem:[#allocation3 + $0x18] sm:$0xff]
        %v1135 = vpack.c.bf16 %v1131, %v1131
        %v1136 = vpack.c.bf16 %v1132, %v1132
        %v1137 = vpack.c.bf16 %v1133, %v1133
        %v1138 = vpack.c.bf16 %v1134, %v1134
        %v1139 = vld [vmem:[#allocation4] sm:$0xff]
        %v1140 = vld [vmem:[#allocation4 + $0x8] sm:$0xff]
        %v1141 = vld [vmem:[#allocation4 + $0x10] sm:$0xff]
        %v1142 = vld [vmem:[#allocation4 + $0x18] sm:$0xff]
        %v1143 = vpack.c.bf16 %v1139, %v1139
        %v1144 = vpack.c.bf16 %v1140, %v1140
        %v1145 = vpack.c.bf16 %v1141, %v1141
        %v1146 = vpack.c.bf16 %v1142, %v1142
        %v1148 = vsel %vm1067, %v1127, 0
        %v1151 = vsel %vm1067, %v1135, 0
        %1153 = vmatpush.bf16.xpose.msra.mxu0 0
        %1154 = vmatpush.bf16.xpose.msra.mxu0 0
        %1155 = vmatpush.bf16.xpose.msra.mxu0 0
        %1156 = vmatpush.bf16.xpose.msra.mxu0 0
        %1157 = vmatpush.bf16.xpose.msra.mxu0 0
        %1158 = vmatpush.bf16.xpose.msra.mxu0 0
        %1159 = vmatpush.bf16.xpose.msra.mxu0 0
        %1160 = vmatpush.bf16.xpose.msra.mxu0 %v1151
        %1161 = vmatmul.bf16.gmra.mxu0 %v1148
        %v1162 = vpop.f32.mrf.mxu0
        %v1163 = vadd.f32 0.0, %v1162
        %v1164 = vpop.f32.mrf.mxu0
        %1165 = vdwg.mxu0
        %v1167 = vsel %vm1067, %v1128, 0
        %v1170 = vsel %vm1067, %v1136, 0
        %1172 = vmatpush.bf16.xpose.msra.mxu0 0
        %1173 = vmatpush.bf16.xpose.msra.mxu0 0
        %1174 = vmatpush.bf16.xpose.msra.mxu0 0
        %1175 = vmatpush.bf16.xpose.msra.mxu0 0
        %1176 = vmatpush.bf16.xpose.msra.mxu0 0
        %1177 = vmatpush.bf16.xpose.msra.mxu0 0
        %1178 = vmatpush.bf16.xpose.msra.mxu0 0
        %1179 = vmatpush.bf16.xpose.msra.mxu0 %v1170
        %1180 = vmatmul.bf16.gmra.mxu0 %v1167
        %v1181 = vpop.f32.mrf.mxu0
        %v1182 = vadd.f32 0.0, %v1181
        %v1183 = vpop.f32.mrf.mxu0
        %1184 = vdwg.mxu0
        %v1186 = vsel %vm1067, %v1129, 0
        %v1189 = vsel %vm1067, %v1137, 0
        %1191 = vmatpush.bf16.xpose.msra.mxu0 0
        %1192 = vmatpush.bf16.xpose.msra.mxu0 0
        %1193 = vmatpush.bf16.xpose.msra.mxu0 0
        %1194 = vmatpush.bf16.xpose.msra.mxu0 0
        %1195 = vmatpush.bf16.xpose.msra.mxu0 0
        %1196 = vmatpush.bf16.xpose.msra.mxu0 0
        %1197 = vmatpush.bf16.xpose.msra.mxu0 0
        %1198 = vmatpush.bf16.xpose.msra.mxu0 %v1189
        %1199 = vmatmul.bf16.gmra.mxu0 %v1186
        %v1200 = vpop.f32.mrf.mxu0
        %v1201 = vadd.f32 0.0, %v1200
        %v1202 = vpop.f32.mrf.mxu0
        %1203 = vdwg.mxu0
        %v1205 = vsel %vm1067, %v1130, 0
        %v1208 = vsel %vm1067, %v1138, 0
        %1210 = vmatpush.bf16.xpose.msra.mxu0 0
        %1211 = vmatpush.bf16.xpose.msra.mxu0 0
        %1212 = vmatpush.bf16.xpose.msra.mxu0 0
        %1213 = vmatpush.bf16.xpose.msra.mxu0 0
        %1214 = vmatpush.bf16.xpose.msra.mxu0 0
        %1215 = vmatpush.bf16.xpose.msra.mxu0 0
        %1216 = vmatpush.bf16.xpose.msra.mxu0 0
        %1217 = vmatpush.bf16.xpose.msra.mxu0 %v1208
        %1218 = vmatmul.bf16.gmra.mxu0 %v1205
        %v1219 = vpop.f32.mrf.mxu0
        %v1220 = vadd.f32 0.0, %v1219
        %v1221 = vpop.f32.mrf.mxu0
        %1222 = vdwg.mxu0
        %v1223 = vmul.f32 %v1163, 0.35355338
        %v1224 = vmul.f32 %v1182, 0.35355338
        %v1225 = vmul.f32 %v1201, 0.35355338
        %v1226 = vmul.f32 %v1220, 0.35355338
        %v1227 = vadd.f32 %v1223, %v972
        %v1228 = vadd.f32 %v1224, %v972
        %v1229 = vadd.f32 %v1225, %v972
        %v1230 = vadd.f32 %v1226, %v972
        %vm1231 = vcmp.eq.f32.partialorder %v973, 0.0
        %v1232 = vsel %vm1231, 1, 0
        %vm1233 = vcmp.eq.s32.totalorder %v1232, 1
        %v1234 = vsel %vm1233, -1e+09, %v1227
        %v1235 = vsel %vm1233, -1e+09, %v1228
        %v1236 = vsel %vm1233, -1e+09, %v1229
        %v1237 = vsel %vm1233, -1e+09, %v1230
        %v1238 = vsel %vm1067, %v1234, -inf
        %1239 = vmax.xlane.f32.xlu0 %v1238
        %v1240 = vpop.xlane.xlu0 %1239
        %v1241 = vsel %vm1067, %v1235, -inf
        %1242 = vmax.xlane.f32.xlu0 %v1241
        %v1243 = vpop.xlane.xlu0 %1242
        %v1244 = vsel %vm1067, %v1236, -inf
        %1245 = vmax.xlane.f32.xlu0 %v1244
        %v1246 = vpop.xlane.xlu0 %1245
        %v1247 = vsel %vm1067, %v1237, -inf
        %1248 = vmax.xlane.f32.xlu0 %v1247
        %v1249 = vpop.xlane.xlu0 %1248
        %v1250 = vsub.f32 %v1234, %v1240
        %v1251 = vsub.f32 %v1235, %v1243
        %v1252 = vsub.f32 %v1236, %v1246
        %v1253 = vsub.f32 %v1237, %v1249
        %v1254 = vmul.f32 %v1250, 1.442695
        %v1255 = vpow.pop %v1254
        %v1256 = vmul.f32 %v1251, 1.442695
        %v1257 = vpow.pop %v1256
        %v1258 = vmul.f32 %v1252, 1.442695
        %v1259 = vpow.pop %v1258
        %v1260 = vmul.f32 %v1253, 1.442695
        %v1261 = vpow.pop %v1260
        %v1262 = vsel %vm1067, %v1255, 0.0
        %1263 = vadd.xlane.f32.xlu0 %v1262
        %v1264 = vpop.xlane.xlu0 %1263
        %v1265 = vsel %vm1067, %v1257, 0.0
        %1266 = vadd.xlane.f32.xlu0 %v1265
        %v1267 = vpop.xlane.xlu0 %1266
        %v1268 = vsel %vm1067, %v1259, 0.0
        %1269 = vadd.xlane.f32.xlu0 %v1268
        %v1270 = vpop.xlane.xlu0 %1269
        %v1271 = vsel %vm1067, %v1261, 0.0
        %1272 = vadd.xlane.f32.xlu0 %v1271
        %v1273 = vpop.xlane.xlu0 %1272
        %v1274 = vrcp.pop %v1264
        %v1275 = vmul.f32 %v1264, %v1274
        %v1276 = vsub.f32 1.0, %v1275
        %v1277 = vmul.f32 %v1274, %v1276
        %v1278 = vadd.f32 %v1274, %v1277
        %vm1279 = vweird.f32 %v1264
        %vm1280 = vweird.f32 %v1274
        %vm1281 = vmor %vm1279, %vm1280
        %v1282 = vsel %vm1281, %v1274, %v1278
        %v1283 = vand.u32 2147483647, %v1264
        %vm1284 = vcmp.eq.f32.partialorder %v1283, 8.507059e+37
        %v1285 = vand.u32 %v1264, 2147483648
        %v1286 = vor.u32 1.1754944e-38, %v1285
        %v1287 = vsel %vm1284, %v1286, %v1282
        %v1288 = vmul.f32 %v1255, %v1287
        %v1289 = vrcp.pop %v1267
        %v1290 = vmul.f32 %v1267, %v1289
        %v1291 = vsub.f32 1.0, %v1290
        %v1292 = vmul.f32 %v1289, %v1291
        %v1293 = vadd.f32 %v1289, %v1292
        %vm1294 = vweird.f32 %v1267
        %vm1295 = vweird.f32 %v1289
        %vm1296 = vmor %vm1294, %vm1295
        %v1297 = vsel %vm1296, %v1289, %v1293
        %v1298 = vand.u32 2147483647, %v1267
        %vm1299 = vcmp.eq.f32.partialorder %v1298, 8.507059e+37
        %v1300 = vand.u32 %v1267, 2147483648
        %v1301 = vor.u32 1.1754944e-38, %v1300
        %v1302 = vsel %vm1299, %v1301, %v1297
        %v1303 = vmul.f32 %v1257, %v1302
        %v1304 = vrcp.pop %v1270
        %v1305 = vmul.f32 %v1270, %v1304
        %v1306 = vsub.f32 1.0, %v1305
        %v1307 = vmul.f32 %v1304, %v1306
        %v1308 = vadd.f32 %v1304, %v1307
        %vm1309 = vweird.f32 %v1270
        %vm1310 = vweird.f32 %v1304
        %vm1311 = vmor %vm1309, %vm1310
        %v1312 = vsel %vm1311, %v1304, %v1308
        %v1313 = vand.u32 2147483647, %v1270
        %vm1314 = vcmp.eq.f32.partialorder %v1313, 8.507059e+37
        %v1315 = vand.u32 %v1270, 2147483648
        %v1316 = vor.u32 1.1754944e-38, %v1315
        %v1317 = vsel %vm1314, %v1316, %v1312
        %v1318 = vmul.f32 %v1259, %v1317
        %v1319 = vrcp.pop %v1273
        %v1320 = vmul.f32 %v1273, %v1319
        %v1321 = vsub.f32 1.0, %v1320
        %v1322 = vmul.f32 %v1319, %v1321
        %v1323 = vadd.f32 %v1319, %v1322
        %vm1324 = vweird.f32 %v1273
        %vm1325 = vweird.f32 %v1319
        %vm1326 = vmor %vm1324, %vm1325
        %v1327 = vsel %vm1326, %v1319, %v1323
        %v1328 = vand.u32 2147483647, %v1273
        %vm1329 = vcmp.eq.f32.partialorder %v1328, 8.507059e+37
        %v1330 = vand.u32 %v1273, 2147483648
        %v1331 = vor.u32 1.1754944e-38, %v1330
        %v1332 = vsel %vm1329, %v1331, %v1327
        %v1333 = vmul.f32 %v1261, %v1332
        %v1334 = vpack.c.bf16 %v1288, %v1288
        %v1335 = vpack.c.bf16 %v1303, %v1303
        %v1336 = vpack.c.bf16 %v1318, %v1318
        %v1337 = vpack.c.bf16 %v1333, %v1333
        %v1339 = vsel %vm1067, %v1334, 0
        %vm1341 = vcmask 1043456
        %v1343 = vsel %vm1341, %v1143, 0
        %1345 = vmatpush.bf16.msra.mxu0 0
        %1346 = vmatpush.bf16.msra.mxu0 0
        %1347 = vmatpush.bf16.msra.mxu0 0
        %1348 = vmatpush.bf16.msra.mxu0 0
        %1349 = vmatpush.bf16.msra.mxu0 0
        %1350 = vmatpush.bf16.msra.mxu0 0
        %1351 = vmatpush.bf16.msra.mxu0 0
        %1352 = vmatpush.bf16.msra.mxu0 %v1343
        %1353 = vmatmul.bf16.gmra.mxu0 %v1339
        %v1354 = vpop.f32.mrf.mxu0
        %v1355 = vadd.f32 0.0, %v1354
        %v1356 = vpop.f32.mrf.mxu0
        %1357 = vdwg.mxu0
        %v1359 = vsel %vm1067, %v1335, 0
        %v1362 = vsel %vm1341, %v1144, 0
        %1364 = vmatpush.bf16.msra.mxu0 0
        %1365 = vmatpush.bf16.msra.mxu0 0
        %1366 = vmatpush.bf16.msra.mxu0 0
        %1367 = vmatpush.bf16.msra.mxu0 0
        %1368 = vmatpush.bf16.msra.mxu0 0
        %1369 = vmatpush.bf16.msra.mxu0 0
        %1370 = vmatpush.bf16.msra.mxu0 0
        %1371 = vmatpush.bf16.msra.mxu0 %v1362
        %1372 = vmatmul.bf16.gmra.mxu0 %v1359
        %v1373 = vpop.f32.mrf.mxu0
        %v1374 = vadd.f32 0.0, %v1373
        %v1375 = vpop.f32.mrf.mxu0
        %1376 = vdwg.mxu0
        %v1378 = vsel %vm1067, %v1336, 0
        %v1381 = vsel %vm1341, %v1145, 0
        %1383 = vmatpush.bf16.msra.mxu0 0
        %1384 = vmatpush.bf16.msra.mxu0 0
        %1385 = vmatpush.bf16.msra.mxu0 0
        %1386 = vmatpush.bf16.msra.mxu0 0
        %1387 = vmatpush.bf16.msra.mxu0 0
        %1388 = vmatpush.bf16.msra.mxu0 0
        %1389 = vmatpush.bf16.msra.mxu0 0
        %1390 = vmatpush.bf16.msra.mxu0 %v1381
        %1391 = vmatmul.bf16.gmra.mxu0 %v1378
        %v1392 = vpop.f32.mrf.mxu0
        %v1393 = vadd.f32 0.0, %v1392
        %v1394 = vpop.f32.mrf.mxu0
        %1395 = vdwg.mxu0
        %v1397 = vsel %vm1067, %v1337, 0
        %v1400 = vsel %vm1341, %v1146, 0
        %1402 = vmatpush.bf16.msra.mxu0 0
        %1403 = vmatpush.bf16.msra.mxu0 0
        %1404 = vmatpush.bf16.msra.mxu0 0
        %1405 = vmatpush.bf16.msra.mxu0 0
        %1406 = vmatpush.bf16.msra.mxu0 0
        %1407 = vmatpush.bf16.msra.mxu0 0
        %1408 = vmatpush.bf16.msra.mxu0 0
        %1409 = vmatpush.bf16.msra.mxu0 %v1400
        %1410 = vmatmul.bf16.gmra.mxu0 %v1397
        %v1411 = vpop.f32.mrf.mxu0
        %v1412 = vadd.f32 0.0, %v1411
        %v1413 = vpop.f32.mrf.mxu0
        %1414 = vdwg.mxu0
        %1415 = vst.msk [vmem:[%s965] sm:$0xff] %vm1067, %v1288
        %1416 = vst.msk [vmem:[#allocation5] sm:$0xff] %vm1067, %v1355
        %1418 = vrot.lane.b32.xlu0 %v1303, 8
        %v1419 = vpop.permute.xlu0 %1418
        %vm1421 = vcmask 130112
        %1422 = vst.msk [vmem:[%s965] sm:$0xff] %vm1421, %v1419
        %1424 = vrot.lane.b32.xlu0 %v1374, 8
        %v1425 = vpop.permute.xlu0 %1424
        %1427 = vst.msk [vmem:[#allocation5] sm:$0xff] %vm1421, %v1425
        %1429 = vrot.lane.b32.xlu0 %v1318, 16
        %v1430 = vpop.permute.xlu0 %1429
        %vm1432 = vcmask 195712
        %1433 = vst.msk [vmem:[%s965] sm:$0xff] %vm1432, %v1430
        %1435 = vrot.lane.b32.xlu0 %v1393, 16
        %v1436 = vpop.permute.xlu0 %1435
        %1438 = vst.msk [vmem:[#allocation5] sm:$0xff] %vm1432, %v1436
        %1440 = vrot.lane.b32.xlu0 %v1333, 24
        %v1441 = vpop.permute.xlu0 %1440
        %vm1443 = vcmask 261312
        %1444 = vst.msk [vmem:[%s965] sm:$0xff] %vm1443, %v1441
        %1446 = vrot.lane.b32.xlu0 %v1412, 24
        %v1447 = vpop.permute.xlu0 %1446
        %1449 = vst.msk [vmem:[#allocation5] sm:$0xff] %vm1443, %v1447
        %v1450 = vld [vmem:[#allocation5] sm:$0xff]
        %v1451 = vpack.c.bf16 %v1450, %v1450
        %v1452 = vperm.slane %v1066, 0
        %v1457 = vunpack.c.l.b16 %v1062
        %v1458 = vunpack.c.l.b16 %v1063
        %v1459 = vunpack.c.l.b16 %v1064
        %v1460 = vunpack.c.l.b16 %v1065
        %v1461 = vpack.c.b16 %v1458, %v1457
        %v1462 = vpack.c.b16 %v1460, %v1459
        %v1466 = vsel %vm977, %v1451, 0
        %1468 = vmatpush.bf16.msra.mxu0 0
        %1469 = vmatpush.bf16.msra.mxu0 0
        %1470 = vmatpush.bf16.msra.mxu0 0
        %1471 = vmatpush.bf16.msra.mxu0 0
        %1472 = vmatpush.bf16.msra.mxu0 0
        %1473 = vmatpush.bf16.msra.mxu0 0
        %1474 = vmatpush.bf16.msra.mxu0 %v1462
        %1475 = vmatpush.bf16.msra.mxu0 %v1461
        %1476 = vmatmul.bf16.gmra.mxu0 %v1466
        %v1477 = vpop.f32.mrf.mxu0
        %v1478 = vadd.f32 %v1452, %v1477
        %v1479 = vpop.f32.mrf.mxu0
        %1480 = vdwg.mxu0
        %v1481 = vadd.f32 %v970, %v1478
        %v1482 = vld [vmem:[#allocation17 + $0x1] sm:$0x1]
        %v1483 = vld [vmem:[#allocation18 + $0x1] sm:$0x1]
        %v1484 = vsel %vm977, %v1481, 0.0
        %1485 = vadd.xlane.f32.xlu0 %v1484
        %v1486 = vpop.xlane.xlu0 %1485
        %v1487 = vmul.f32 %v1486, %v987
        %v1488 = vsub.f32 %v1481, %v1487
        %v1489 = vmul.f32 %v1488, %v1488
        %v1490 = vsel %vm977, %v1489, 0.0
        %1491 = vadd.xlane.f32.xlu0 %v1490
        %v1492 = vpop.xlane.xlu0 %1491
        %v1493 = vmul.f32 %v1492, 0.032258064
        %v1494 = vperm.slane %v1482, 0
        %v1495 = vmul.f32 %v1494, %v1488
        %v1496 = vrsqrt.pop %v1493
        %v1497 = vmul.f32 %v1496, %v1493
        %v1498 = vmul.f32 %v1497, %v1496
        %v1499 = vmul.f32 0.5, %v1498
        %v1500 = vsub.f32 1.5, %v1499
        %v1501 = vmul.f32 %v1496, %v1500
        %v1502 = vmul.f32 %v1493, %v1501
        %vm1503 = vcmp.eq.f32.partialorder %v1493, inf
        %v1504 = vsel %vm1503, %v1493, %v1502
        %vm1505 = vcmp.eq.f32.partialorder %v1493, 0.0
        %v1506 = vand.u32 %v1493, 2147483648
        %v1507 = vsel %vm1505, %v1506, %v1504
        %v1508 = vadd.f32 %v1507, 1e-06
        %v1509 = vrcp.pop %v1508
        %v1510 = vmul.f32 %v1508, %v1509
        %v1511 = vsub.f32 1.0, %v1510
        %v1512 = vmul.f32 %v1509, %v1511
        %v1513 = vadd.f32 %v1509, %v1512
        %vm1514 = vweird.f32 %v1508
        %vm1515 = vweird.f32 %v1509
        %vm1516 = vmor %vm1514, %vm1515
        %v1517 = vsel %vm1516, %v1509, %v1513
        %v1518 = vand.u32 2147483647, %v1508
        %vm1519 = vcmp.eq.f32.partialorder %v1518, 8.507059e+37
        %v1520 = vand.u32 %v1508, 2147483648
        %v1521 = vor.u32 1.1754944e-38, %v1520
        %v1522 = vsel %vm1519, %v1521, %v1517
        %v1523 = vmul.f32 %v1495, %v1522
        %v1524 = vperm.slane %v1483, 0
        %v1525 = vadd.f32 %v1523, %v1524
        %v1526 = vld [vmem:[%s12] sm:$0xf]
        %v1527 = vld [vmem:[%s12 + $0x4] sm:$0xf]
        %v1528 = vld [vmem:[%s12 + $0x8] sm:$0xf]
        %v1529 = vld [vmem:[%s12 + $0xc] sm:$0xf]
        %v1530 = vld [vmem:[%s13] sm:$0x1]
        %v1531 = vpack.c.bf16 %v1525, %v1525
        %v1532 = vperm.slane %v1530, 0
        %v1537 = vunpack.c.l.b16 %v1526
        %v1538 = vunpack.c.l.b16 %v1527
        %v1539 = vunpack.c.l.b16 %v1528
        %v1540 = vunpack.c.l.b16 %v1529
        %v1541 = vpack.c.b16 %v1538, %v1537
        %v1542 = vpack.c.b16 %v1540, %v1539
        %v1546 = vsel %vm977, %v1531, 0
        %1548 = vmatpush.bf16.msra.mxu0 0
        %1549 = vmatpush.bf16.msra.mxu0 0
        %1550 = vmatpush.bf16.msra.mxu0 0
        %1551 = vmatpush.bf16.msra.mxu0 0
        %1552 = vmatpush.bf16.msra.mxu0 0
        %1553 = vmatpush.bf16.msra.mxu0 0
        %1554 = vmatpush.bf16.msra.mxu0 %v1542
        %1555 = vmatpush.bf16.msra.mxu0 %v1541
        %1556 = vmatmul.bf16.gmra.mxu0 %v1546
        %v1557 = vpop.f32.mrf.mxu0
        %v1558 = vadd.f32 %v1532, %v1557
        %v1559 = vpop.f32.mrf.mxu0
        %1560 = vdwg.mxu0
        %v1561 = vpack.c.bf16 %v971, %v971
        %1562 = vrot.lane.b32.xlu0 %v1541, 96
        %v1563 = vpop.permute.xlu0 %1562
        %1564 = vrot.lane.b32.xlu0 %v1542, 96
        %v1565 = vpop.permute.xlu0 %1564
        %1569 = vrot.lane.b32.xlu0 %v1532, 96
        %v1570 = vpop.permute.xlu0 %1569
        %v1573 = vsel %vm977, %v1561, 0
        %1575 = vmatpush.bf16.msra.mxu0 0
        %1576 = vmatpush.bf16.msra.mxu0 0
        %1577 = vmatpush.bf16.msra.mxu0 0
        %1578 = vmatpush.bf16.msra.mxu0 0
        %1579 = vmatpush.bf16.msra.mxu0 0
        %1580 = vmatpush.bf16.msra.mxu0 0
        %1581 = vmatpush.bf16.msra.mxu0 %v1565
        %1582 = vmatpush.bf16.msra.mxu0 %v1563
        %1583 = vmatmul.bf16.gmra.mxu0 %v1573
        %v1584 = vpop.f32.mrf.mxu0
        %v1585 = vadd.f32 %v1570, %v1584
        %v1586 = vpop.f32.mrf.mxu0
        %1587 = vdwg.mxu0
        %v1588 = vld [vmem:[#allocation20] sm:$0xf]
        %v1589 = vld [vmem:[#allocation20 + $0x4] sm:$0xf]
        %v1590 = vld [vmem:[#allocation20 + $0x8] sm:$0xf]
        %v1591 = vld [vmem:[#allocation20 + $0xc] sm:$0xf]
        %v1592 = vld [vmem:[%s15] sm:$0x1]
        %1593 = vst.msk [vmem:[#allocation2] sm:$0xff] %vm1067, %v1558
        %1594 = vst.msk [vmem:[#allocation3] sm:$0xff] %vm1067, %v1585
        %1596 = vrot.lane.b32.xlu0 %v1585, 96
        %v1597 = vpop.permute.xlu0 %1596
        %1599 = vst.msk [vmem:[#allocation4] sm:$0xff] %vm1067, %v1597
        %1601 = vrot.lane.b32.xlu0 %v1558, 120
        %v1602 = vpop.permute.xlu0 %1601
        %1604 = vst.msk [vmem:[%s1081] sm:$0xff] %vm1067, %v1602
        %1605 = vrot.lane.b32.xlu0 %v1585, 120
        %v1606 = vpop.permute.xlu0 %1605
        %1608 = vst.msk [vmem:[%s1086] sm:$0xff] %vm1067, %v1606
        %1609 = vrot.lane.b32.xlu0 %v1585, 88
        %v1610 = vpop.permute.xlu0 %1609
        %1612 = vst.msk [vmem:[%s1091] sm:$0xff] %vm1067, %v1610
        %1613 = vrot.lane.b32.xlu0 %v1558, 112
        %v1614 = vpop.permute.xlu0 %1613
        %1616 = vst.msk [vmem:[%s1096] sm:$0xff] %vm1067, %v1614
        %1617 = vrot.lane.b32.xlu0 %v1585, 112
        %v1618 = vpop.permute.xlu0 %1617
        %1620 = vst.msk [vmem:[%s1101] sm:$0xff] %vm1067, %v1618
        %1621 = vrot.lane.b32.xlu0 %v1585, 80
        %v1622 = vpop.permute.xlu0 %1621
        %1624 = vst.msk [vmem:[%s1106] sm:$0xff] %vm1067, %v1622
        %1625 = vrot.lane.b32.xlu0 %v1558, 104
        %v1626 = vpop.permute.xlu0 %1625
        %1628 = vst.msk [vmem:[%s1111] sm:$0xff] %vm1067, %v1626
        %1629 = vrot.lane.b32.xlu0 %v1585, 104
        %v1630 = vpop.permute.xlu0 %1629
        %1632 = vst.msk [vmem:[%s1116] sm:$0xff] %vm1067, %v1630
        %1633 = vrot.lane.b32.xlu0 %v1585, 72
        %v1634 = vpop.permute.xlu0 %1633
        %1636 = vst.msk [vmem:[%s1121] sm:$0xff] %vm1067, %v1634
        %v1637 = vld [vmem:[#allocation2] sm:$0xff]
        %v1638 = vld [vmem:[#allocation2 + $0x8] sm:$0xff]
        %v1639 = vld [vmem:[#allocation2 + $0x10] sm:$0xff]
        %v1640 = vld [vmem:[#allocation2 + $0x18] sm:$0xff]
        %v1641 = vpack.c.bf16 %v1637, %v1637
        %v1642 = vpack.c.bf16 %v1638, %v1638
        %v1643 = vpack.c.bf16 %v1639, %v1639
        %v1644 = vpack.c.bf16 %v1640, %v1640
        %v1645 = vld [vmem:[#allocation3] sm:$0xff]
        %v1646 = vld [vmem:[#allocation3 + $0x8] sm:$0xff]
        %v1647 = vld [vmem:[#allocation3 + $0x10] sm:$0xff]
        %v1648 = vld [vmem:[#allocation3 + $0x18] sm:$0xff]
        %v1649 = vpack.c.bf16 %v1645, %v1645
        %v1650 = vpack.c.bf16 %v1646, %v1646
        %v1651 = vpack.c.bf16 %v1647, %v1647
        %v1652 = vpack.c.bf16 %v1648, %v1648
        %v1653 = vld [vmem:[#allocation4] sm:$0xff]
        %v1654 = vld [vmem:[#allocation4 + $0x8] sm:$0xff]
        %v1655 = vld [vmem:[#allocation4 + $0x10] sm:$0xff]
        %v1656 = vld [vmem:[#allocation4 + $0x18] sm:$0xff]
        %v1657 = vpack.c.bf16 %v1653, %v1653
        %v1658 = vpack.c.bf16 %v1654, %v1654
        %v1659 = vpack.c.bf16 %v1655, %v1655
        %v1660 = vpack.c.bf16 %v1656, %v1656
        %v1662 = vsel %vm1067, %v1641, 0
        %v1665 = vsel %vm1067, %v1649, 0
        %1667 = vmatpush.bf16.xpose.msra.mxu0 0
        %1668 = vmatpush.bf16.xpose.msra.mxu0 0
        %1669 = vmatpush.bf16.xpose.msra.mxu0 0
        %1670 = vmatpush.bf16.xpose.msra.mxu0 0
        %1671 = vmatpush.bf16.xpose.msra.mxu0 0
        %1672 = vmatpush.bf16.xpose.msra.mxu0 0
        %1673 = vmatpush.bf16.xpose.msra.mxu0 0
        %1674 = vmatpush.bf16.xpose.msra.mxu0 %v1665
        %1675 = vmatmul.bf16.gmra.mxu0 %v1662
        %v1676 = vpop.f32.mrf.mxu0
        %v1677 = vadd.f32 0.0, %v1676
        %v1678 = vpop.f32.mrf.mxu0
        %1679 = vdwg.mxu0
        %v1681 = vsel %vm1067, %v1642, 0
        %v1684 = vsel %vm1067, %v1650, 0
        %1686 = vmatpush.bf16.xpose.msra.mxu0 0
        %1687 = vmatpush.bf16.xpose.msra.mxu0 0
        %1688 = vmatpush.bf16.xpose.msra.mxu0 0
        %1689 = vmatpush.bf16.xpose.msra.mxu0 0
        %1690 = vmatpush.bf16.xpose.msra.mxu0 0
        %1691 = vmatpush.bf16.xpose.msra.mxu0 0
        %1692 = vmatpush.bf16.xpose.msra.mxu0 0
        %1693 = vmatpush.bf16.xpose.msra.mxu0 %v1684
        %1694 = vmatmul.bf16.gmra.mxu0 %v1681
        %v1695 = vpop.f32.mrf.mxu0
        %v1696 = vadd.f32 0.0, %v1695
        %v1697 = vpop.f32.mrf.mxu0
        %1698 = vdwg.mxu0
        %v1700 = vsel %vm1067, %v1643, 0
        %v1703 = vsel %vm1067, %v1651, 0
        %1705 = vmatpush.bf16.xpose.msra.mxu0 0
        %1706 = vmatpush.bf16.xpose.msra.mxu0 0
        %1707 = vmatpush.bf16.xpose.msra.mxu0 0
        %1708 = vmatpush.bf16.xpose.msra.mxu0 0
        %1709 = vmatpush.bf16.xpose.msra.mxu0 0
        %1710 = vmatpush.bf16.xpose.msra.mxu0 0
        %1711 = vmatpush.bf16.xpose.msra.mxu0 0
        %1712 = vmatpush.bf16.xpose.msra.mxu0 %v1703
        %1713 = vmatmul.bf16.gmra.mxu0 %v1700
        %v1714 = vpop.f32.mrf.mxu0
        %v1715 = vadd.f32 0.0, %v1714
        %v1716 = vpop.f32.mrf.mxu0
        %1717 = vdwg.mxu0
        %v1719 = vsel %vm1067, %v1644, 0
        %v1722 = vsel %vm1067, %v1652, 0
        %1724 = vmatpush.bf16.xpose.msra.mxu0 0
        %1725 = vmatpush.bf16.xpose.msra.mxu0 0
        %1726 = vmatpush.bf16.xpose.msra.mxu0 0
        %1727 = vmatpush.bf16.xpose.msra.mxu0 0
        %1728 = vmatpush.bf16.xpose.msra.mxu0 0
        %1729 = vmatpush.bf16.xpose.msra.mxu0 0
        %1730 = vmatpush.bf16.xpose.msra.mxu0 0
        %1731 = vmatpush.bf16.xpose.msra.mxu0 %v1722
        %1732 = vmatmul.bf16.gmra.mxu0 %v1719
        %v1733 = vpop.f32.mrf.mxu0
        %v1734 = vadd.f32 0.0, %v1733
        %v1735 = vpop.f32.mrf.mxu0
        %1736 = vdwg.mxu0
        %v1737 = vmul.f32 %v1677, 0.35355338
        %v1738 = vmul.f32 %v1696, 0.35355338
        %v1739 = vmul.f32 %v1715, 0.35355338
        %v1740 = vmul.f32 %v1734, 0.35355338
        %vm1741 = vcmp.eq.f32.partialorder %v974, 0.0
        %v1742 = vsel %vm1741, 1, 0
        %vm1743 = vcmp.eq.s32.totalorder %v1742, 1
        %v1744 = vsel %vm1743, -1e+09, %v1737
        %v1745 = vsel %vm1743, -1e+09, %v1738
        %v1746 = vsel %vm1743, -1e+09, %v1739
        %v1747 = vsel %vm1743, -1e+09, %v1740
        %v1748 = vsel %vm1067, %v1744, -inf
        %1749 = vmax.xlane.f32.xlu0 %v1748
        %v1750 = vpop.xlane.xlu0 %1749
        %v1751 = vsel %vm1067, %v1745, -inf
        %1752 = vmax.xlane.f32.xlu0 %v1751
        %v1753 = vpop.xlane.xlu0 %1752
        %v1754 = vsel %vm1067, %v1746, -inf
        %1755 = vmax.xlane.f32.xlu0 %v1754
        %v1756 = vpop.xlane.xlu0 %1755
        %v1757 = vsel %vm1067, %v1747, -inf
        %1758 = vmax.xlane.f32.xlu0 %v1757
        %v1759 = vpop.xlane.xlu0 %1758
        %v1760 = vsub.f32 %v1744, %v1750
        %v1761 = vsub.f32 %v1745, %v1753
        %v1762 = vsub.f32 %v1746, %v1756
        %v1763 = vsub.f32 %v1747, %v1759
        %v1764 = vmul.f32 %v1760, 1.442695
        %v1765 = vpow.pop %v1764
        %v1766 = vmul.f32 %v1761, 1.442695
        %v1767 = vpow.pop %v1766
        %v1768 = vmul.f32 %v1762, 1.442695
        %v1769 = vpow.pop %v1768
        %v1770 = vmul.f32 %v1763, 1.442695
        %v1771 = vpow.pop %v1770
        %v1772 = vsel %vm1067, %v1765, 0.0
        %1773 = vadd.xlane.f32.xlu0 %v1772
        %v1774 = vpop.xlane.xlu0 %1773
        %v1775 = vsel %vm1067, %v1767, 0.0
        %1776 = vadd.xlane.f32.xlu0 %v1775
        %v1777 = vpop.xlane.xlu0 %1776
        %v1778 = vsel %vm1067, %v1769, 0.0
        %1779 = vadd.xlane.f32.xlu0 %v1778
        %v1780 = vpop.xlane.xlu0 %1779
        %v1781 = vsel %vm1067, %v1771, 0.0
        %1782 = vadd.xlane.f32.xlu0 %v1781
        %v1783 = vpop.xlane.xlu0 %1782
        %v1784 = vrcp.pop %v1774
        %v1785 = vmul.f32 %v1774, %v1784
        %v1786 = vsub.f32 1.0, %v1785
        %v1787 = vmul.f32 %v1784, %v1786
        %v1788 = vadd.f32 %v1784, %v1787
        %vm1789 = vweird.f32 %v1774
        %vm1790 = vweird.f32 %v1784
        %vm1791 = vmor %vm1789, %vm1790
        %v1792 = vsel %vm1791, %v1784, %v1788
        %v1793 = vand.u32 2147483647, %v1774
        %vm1794 = vcmp.eq.f32.partialorder %v1793, 8.507059e+37
        %v1795 = vand.u32 %v1774, 2147483648
        %v1796 = vor.u32 1.1754944e-38, %v1795
        %v1797 = vsel %vm1794, %v1796, %v1792
        %v1798 = vmul.f32 %v1765, %v1797
        %v1799 = vrcp.pop %v1777
        %v1800 = vmul.f32 %v1777, %v1799
        %v1801 = vsub.f32 1.0, %v1800
        %v1802 = vmul.f32 %v1799, %v1801
        %v1803 = vadd.f32 %v1799, %v1802
        %vm1804 = vweird.f32 %v1777
        %vm1805 = vweird.f32 %v1799
        %vm1806 = vmor %vm1804, %vm1805
        %v1807 = vsel %vm1806, %v1799, %v1803
        %v1808 = vand.u32 2147483647, %v1777
        %vm1809 = vcmp.eq.f32.partialorder %v1808, 8.507059e+37
        %v1810 = vand.u32 %v1777, 2147483648
        %v1811 = vor.u32 1.1754944e-38, %v1810
        %v1812 = vsel %vm1809, %v1811, %v1807
        %v1813 = vmul.f32 %v1767, %v1812
        %v1814 = vrcp.pop %v1780
        %v1815 = vmul.f32 %v1780, %v1814
        %v1816 = vsub.f32 1.0, %v1815
        %v1817 = vmul.f32 %v1814, %v1816
        %v1818 = vadd.f32 %v1814, %v1817
        %vm1819 = vweird.f32 %v1780
        %vm1820 = vweird.f32 %v1814
        %vm1821 = vmor %vm1819, %vm1820
        %v1822 = vsel %vm1821, %v1814, %v1818
        %v1823 = vand.u32 2147483647, %v1780
        %vm1824 = vcmp.eq.f32.partialorder %v1823, 8.507059e+37
        %v1825 = vand.u32 %v1780, 2147483648
        %v1826 = vor.u32 1.1754944e-38, %v1825
        %v1827 = vsel %vm1824, %v1826, %v1822
        %v1828 = vmul.f32 %v1769, %v1827
        %v1829 = vrcp.pop %v1783
        %v1830 = vmul.f32 %v1783, %v1829
        %v1831 = vsub.f32 1.0, %v1830
        %v1832 = vmul.f32 %v1829, %v1831
        %v1833 = vadd.f32 %v1829, %v1832
        %vm1834 = vweird.f32 %v1783
        %vm1835 = vweird.f32 %v1829
        %vm1836 = vmor %vm1834, %vm1835
        %v1837 = vsel %vm1836, %v1829, %v1833
        %v1838 = vand.u32 2147483647, %v1783
        %vm1839 = vcmp.eq.f32.partialorder %v1838, 8.507059e+37
        %v1840 = vand.u32 %v1783, 2147483648
        %v1841 = vor.u32 1.1754944e-38, %v1840
        %v1842 = vsel %vm1839, %v1841, %v1837
        %v1843 = vmul.f32 %v1771, %v1842
        %v1844 = vpack.c.bf16 %v1798, %v1798
        %v1845 = vpack.c.bf16 %v1813, %v1813
        %v1846 = vpack.c.bf16 %v1828, %v1828
        %v1847 = vpack.c.bf16 %v1843, %v1843
        %v1849 = vsel %vm1067, %v1844, 0
        %v1852 = vsel %vm1341, %v1657, 0
        %1854 = vmatpush.bf16.msra.mxu0 0
        %1855 = vmatpush.bf16.msra.mxu0 0
        %1856 = vmatpush.bf16.msra.mxu0 0
        %1857 = vmatpush.bf16.msra.mxu0 0
        %1858 = vmatpush.bf16.msra.mxu0 0
        %1859 = vmatpush.bf16.msra.mxu0 0
        %1860 = vmatpush.bf16.msra.mxu0 0
        %1861 = vmatpush.bf16.msra.mxu0 %v1852
        %1862 = vmatmul.bf16.gmra.mxu0 %v1849
        %v1863 = vpop.f32.mrf.mxu0
        %v1864 = vadd.f32 0.0, %v1863
        %v1865 = vpop.f32.mrf.mxu0
        %1866 = vdwg.mxu0
        %v1868 = vsel %vm1067, %v1845, 0
        %v1871 = vsel %vm1341, %v1658, 0
        %1873 = vmatpush.bf16.msra.mxu0 0
        %1874 = vmatpush.bf16.msra.mxu0 0
        %1875 = vmatpush.bf16.msra.mxu0 0
        %1876 = vmatpush.bf16.msra.mxu0 0
        %1877 = vmatpush.bf16.msra.mxu0 0
        %1878 = vmatpush.bf16.msra.mxu0 0
        %1879 = vmatpush.bf16.msra.mxu0 0
        %1880 = vmatpush.bf16.msra.mxu0 %v1871
        %1881 = vmatmul.bf16.gmra.mxu0 %v1868
        %v1882 = vpop.f32.mrf.mxu0
        %v1883 = vadd.f32 0.0, %v1882
        %v1884 = vpop.f32.mrf.mxu0
        %1885 = vdwg.mxu0
        %v1887 = vsel %vm1067, %v1846, 0
        %v1890 = vsel %vm1341, %v1659, 0
        %1892 = vmatpush.bf16.msra.mxu0 0
        %1893 = vmatpush.bf16.msra.mxu0 0
        %1894 = vmatpush.bf16.msra.mxu0 0
        %1895 = vmatpush.bf16.msra.mxu0 0
        %1896 = vmatpush.bf16.msra.mxu0 0
        %1897 = vmatpush.bf16.msra.mxu0 0
        %1898 = vmatpush.bf16.msra.mxu0 0
        %1899 = vmatpush.bf16.msra.mxu0 %v1890
        %1900 = vmatmul.bf16.gmra.mxu0 %v1887
        %v1901 = vpop.f32.mrf.mxu0
        %v1902 = vadd.f32 0.0, %v1901
        %v1903 = vpop.f32.mrf.mxu0
        %1904 = vdwg.mxu0
        %v1906 = vsel %vm1067, %v1847, 0
        %v1909 = vsel %vm1341, %v1660, 0
        %1911 = vmatpush.bf16.msra.mxu0 0
        %1912 = vmatpush.bf16.msra.mxu0 0
        %1913 = vmatpush.bf16.msra.mxu0 0
        %1914 = vmatpush.bf16.msra.mxu0 0
        %1915 = vmatpush.bf16.msra.mxu0 0
        %1916 = vmatpush.bf16.msra.mxu0 0
        %1917 = vmatpush.bf16.msra.mxu0 0
        %1918 = vmatpush.bf16.msra.mxu0 %v1909
        %1919 = vmatmul.bf16.gmra.mxu0 %v1906
        %v1920 = vpop.f32.mrf.mxu0
        %v1921 = vadd.f32 0.0, %v1920
        %v1922 = vpop.f32.mrf.mxu0
        %1923 = vdwg.mxu0
        %1925 = vrot.lane.b32.xlu0 %v1798, 32
        %v1926 = vpop.permute.xlu0 %1925
        %vm1928 = vcmask 326912
        %1929 = vst.msk [vmem:[%s965] sm:$0xff] %vm1928, %v1926
        %1930 = vst.msk [vmem:[#allocation5] sm:$0xff] %vm1067, %v1864
        %1932 = vrot.lane.b32.xlu0 %v1813, 40
        %v1933 = vpop.permute.xlu0 %1932
        %vm1935 = vcmask 392512
        %1936 = vst.msk [vmem:[%s965] sm:$0xff] %vm1935, %v1933
        %1938 = vrot.lane.b32.xlu0 %v1883, 8
        %v1939 = vpop.permute.xlu0 %1938
        %1941 = vst.msk [vmem:[#allocation5] sm:$0xff] %vm1421, %v1939
        %1943 = vrot.lane.b32.xlu0 %v1828, 48
        %v1944 = vpop.permute.xlu0 %1943
        %vm1946 = vcmask 458112
        %1947 = vst.msk [vmem:[%s965] sm:$0xff] %vm1946, %v1944
        %1949 = vrot.lane.b32.xlu0 %v1902, 16
        %v1950 = vpop.permute.xlu0 %1949
        %1952 = vst.msk [vmem:[#allocation5] sm:$0xff] %vm1432, %v1950
        %1954 = vrot.lane.b32.xlu0 %v1843, 56
        %v1955 = vpop.permute.xlu0 %1954
        %vm1957 = vcmask 523712
        %1958 = vst.msk [vmem:[%s965] sm:$0xff] %vm1957, %v1955
        %1960 = vrot.lane.b32.xlu0 %v1921, 24
        %v1961 = vpop.permute.xlu0 %1960
        %1963 = vst.msk [vmem:[#allocation5] sm:$0xff] %vm1443, %v1961
        %v1964 = vld [vmem:[#allocation5] sm:$0xff]
        %v1965 = vpack.c.bf16 %v1964, %v1964
        %v1966 = vperm.slane %v1592, 0
        %v1971 = vunpack.c.l.b16 %v1588
        %v1972 = vunpack.c.l.b16 %v1589
        %v1973 = vunpack.c.l.b16 %v1590
        %v1974 = vunpack.c.l.b16 %v1591
        %v1975 = vpack.c.b16 %v1972, %v1971
        %v1976 = vpack.c.b16 %v1974, %v1973
        %v1980 = vsel %vm977, %v1965, 0
        %1982 = vmatpush.bf16.msra.mxu0 0
        %1983 = vmatpush.bf16.msra.mxu0 0
        %1984 = vmatpush.bf16.msra.mxu0 0
        %1985 = vmatpush.bf16.msra.mxu0 0
        %1986 = vmatpush.bf16.msra.mxu0 0
        %1987 = vmatpush.bf16.msra.mxu0 0
        %1988 = vmatpush.bf16.msra.mxu0 %v1976
        %1989 = vmatpush.bf16.msra.mxu0 %v1975
        %1990 = vmatmul.bf16.gmra.mxu0 %v1980
        %v1991 = vpop.f32.mrf.mxu0
        %v1992 = vadd.f32 %v1966, %v1991
        %v1993 = vpop.f32.mrf.mxu0
        %1994 = vdwg.mxu0
        %v1995 = vadd.f32 %v1481, %v1992
        %v1996 = vld [vmem:[#allocation17 + $0x2] sm:$0x1]
        %v1997 = vld [vmem:[#allocation18 + $0x2] sm:$0x1]
        %v1998 = vsel %vm977, %v1995, 0.0
        %1999 = vadd.xlane.f32.xlu0 %v1998
        %v2000 = vpop.xlane.xlu0 %1999
        %v2001 = vmul.f32 %v2000, %v987
        %v2002 = vsub.f32 %v1995, %v2001
        %v2003 = vmul.f32 %v2002, %v2002
        %v2004 = vsel %vm977, %v2003, 0.0
        %2005 = vadd.xlane.f32.xlu0 %v2004
        %v2006 = vpop.xlane.xlu0 %2005
        %v2007 = vmul.f32 %v2006, 0.032258064
        %v2008 = vperm.slane %v1996, 0
        %v2009 = vmul.f32 %v2008, %v2002
        %v2010 = vrsqrt.pop %v2007
        %v2011 = vmul.f32 %v2010, %v2007
        %v2012 = vmul.f32 %v2011, %v2010
        %v2013 = vmul.f32 0.5, %v2012
        %v2014 = vsub.f32 1.5, %v2013
        %v2015 = vmul.f32 %v2010, %v2014
        %v2016 = vmul.f32 %v2007, %v2015
        %vm2017 = vcmp.eq.f32.partialorder %v2007, inf
        %v2018 = vsel %vm2017, %v2007, %v2016
        %vm2019 = vcmp.eq.f32.partialorder %v2007, 0.0
        %v2020 = vand.u32 %v2007, 2147483648
        %v2021 = vsel %vm2019, %v2020, %v2018
        %v2022 = vadd.f32 %v2021, 1e-06
        %v2023 = vrcp.pop %v2022
        %v2024 = vmul.f32 %v2022, %v2023
        %v2025 = vsub.f32 1.0, %v2024
        %v2026 = vmul.f32 %v2023, %v2025
        %v2027 = vadd.f32 %v2023, %v2026
        %vm2028 = vweird.f32 %v2022
        %vm2029 = vweird.f32 %v2023
        %vm2030 = vmor %vm2028, %vm2029
        %v2031 = vsel %vm2030, %v2023, %v2027
        %v2032 = vand.u32 2147483647, %v2022
        %vm2033 = vcmp.eq.f32.partialorder %v2032, 8.507059e+37
        %v2034 = vand.u32 %v2022, 2147483648
        %v2035 = vor.u32 1.1754944e-38, %v2034
        %v2036 = vsel %vm2033, %v2035, %v2031
        %v2037 = vmul.f32 %v2009, %v2036
        %v2038 = vperm.slane %v1997, 0
        %v2039 = vadd.f32 %v2037, %v2038
        %v2040 = vpack.c.bf16 %v2039, %v2039
        %v2041 = vld [vmem:[#allocation21] sm:$0xf]
        %v2042 = vld [vmem:[#allocation21 + $0x4] sm:$0xf]
        %v2043 = vld [vmem:[#allocation21 + $0x8] sm:$0xf]
        %v2044 = vld [vmem:[#allocation21 + $0xc] sm:$0xf]
        %v2045 = vld [vmem:[%s17] sm:$0x1]
        %v2046 = vperm.slane %v2045, 0
        %v2051 = vunpack.c.l.b16 %v2041
        %v2052 = vunpack.c.l.b16 %v2042
        %v2053 = vunpack.c.l.b16 %v2043
        %v2054 = vunpack.c.l.b16 %v2044
        %v2055 = vpack.c.b16 %v2052, %v2051
        %v2056 = vpack.c.b16 %v2054, %v2053
        %v2060 = vsel %vm977, %v2040, 0
        %2062 = vmatpush.bf16.msra.mxu0 0
        %2063 = vmatpush.bf16.msra.mxu0 0
        %2064 = vmatpush.bf16.msra.mxu0 0
        %2065 = vmatpush.bf16.msra.mxu0 0
        %2066 = vmatpush.bf16.msra.mxu0 0
        %2067 = vmatpush.bf16.msra.mxu0 0
        %2068 = vmatpush.bf16.msra.mxu0 %v2056
        %2069 = vmatpush.bf16.msra.mxu0 %v2055
        %2070 = vmatmul.bf16.gmra.mxu0 %v2060
        %v2071 = vpop.f32.mrf.mxu0
        %v2072 = vadd.f32 %v2046, %v2071
        %v2073 = vpop.f32.mrf.mxu0
        %2074 = vdwg.mxu0
        %v2075 = vmax.f32 %v2072, 0.0
        %v2076 = vpack.c.bf16 %v2075, %v2075
        %v2077 = vld [vmem:[%s18] sm:$0xf]
        %v2078 = vld [vmem:[%s18 + $0x4] sm:$0xf]
        %v2079 = vld [vmem:[%s18 + $0x8] sm:$0xf]
        %v2080 = vld [vmem:[%s18 + $0xc] sm:$0xf]
        %v2081 = vld [vmem:[%s18 + $0x10] sm:$0xf]
        %v2082 = vld [vmem:[%s18 + $0x14] sm:$0xf]
        %v2083 = vld [vmem:[%s18 + $0x18] sm:$0xf]
        %v2084 = vld [vmem:[%s18 + $0x1c] sm:$0xf]
        %v2093 = vunpack.c.l.b16 %v2077
        %v2094 = vunpack.c.l.b16 %v2078
        %v2095 = vunpack.c.l.b16 %v2079
        %v2096 = vunpack.c.l.b16 %v2080
        %v2097 = vunpack.c.l.b16 %v2081
        %v2098 = vunpack.c.l.b16 %v2082
        %v2099 = vunpack.c.l.b16 %v2083
        %v2100 = vunpack.c.l.b16 %v2084
        %v2101 = vpack.c.b16 %v2094, %v2093
        %v2102 = vpack.c.b16 %v2096, %v2095
        %v2103 = vpack.c.b16 %v2098, %v2097
        %v2104 = vpack.c.b16 %v2100, %v2099
        %vm2109 = vcmask 523264
        %v2111 = vsel %vm2109, %v2076, 0
        %2113 = vmatpush.bf16.msra.mxu0 0
        %2114 = vmatpush.bf16.msra.mxu0 0
        %2115 = vmatpush.bf16.msra.mxu0 0
        %2116 = vmatpush.bf16.msra.mxu0 0
        %2117 = vmatpush.bf16.msra.mxu0 %v2104
        %2118 = vmatpush.bf16.msra.mxu0 %v2103
        %2119 = vmatpush.bf16.msra.mxu0 %v2102
        %2120 = vmatpush.bf16.msra.mxu0 %v2101
        %2121 = vmatmul.bf16.gmra.mxu0 %v2111
        %v2122 = vpop.f32.mrf.mxu0
        %v2123 = vadd.f32 0.0, %v2122
        %v2124 = vpop.f32.mrf.mxu0
        %2125 = vdwg.mxu0
        %v2126 = vadd.f32 %v1995, %v2123
        %v2127 = vld [vmem:[%s19] sm:$0x1]
        %v2128 = vperm.slane %v2127, 0
        %v2129 = vadd.f32 %v2126, %v2128
        %v2130 = vld [vmem:[#allocation17 + $0x3] sm:$0x1]
        %v2131 = vld [vmem:[#allocation18 + $0x3] sm:$0x1]
        %v2132 = vsel %vm977, %v2129, 0.0
        %2133 = vadd.xlane.f32.xlu0 %v2132
        %v2134 = vpop.xlane.xlu0 %2133
        %v2135 = vmul.f32 %v2134, %v987
        %v2136 = vsub.f32 %v2129, %v2135
        %v2137 = vmul.f32 %v2136, %v2136
        %v2138 = vsel %vm977, %v2137, 0.0
        %2139 = vadd.xlane.f32.xlu0 %v2138
        %v2140 = vpop.xlane.xlu0 %2139
        %v2141 = vmul.f32 %v2140, 0.032258064
        %v2142 = vperm.slane %v2130, 0
        %v2143 = vmul.f32 %v2142, %v2136
        %v2144 = vrsqrt.pop %v2141
        %v2145 = vmul.f32 %v2144, %v2141
        %v2146 = vmul.f32 %v2145, %v2144
        %v2147 = vmul.f32 0.5, %v2146
        %v2148 = vsub.f32 1.5, %v2147
        %v2149 = vmul.f32 %v2144, %v2148
        %v2150 = vmul.f32 %v2141, %v2149
        %vm2151 = vcmp.eq.f32.partialorder %v2141, inf
        %v2152 = vsel %vm2151, %v2141, %v2150
        %vm2153 = vcmp.eq.f32.partialorder %v2141, 0.0
        %v2154 = vand.u32 %v2141, 2147483648
        %v2155 = vsel %vm2153, %v2154, %v2152
        %v2156 = vadd.f32 %v2155, 1e-06
        %v2157 = vrcp.pop %v2156
        %v2158 = vmul.f32 %v2156, %v2157
        %v2159 = vsub.f32 1.0, %v2158
        %v2160 = vmul.f32 %v2157, %v2159
        %v2161 = vadd.f32 %v2157, %v2160
        %vm2162 = vweird.f32 %v2156
        %vm2163 = vweird.f32 %v2157
        %vm2164 = vmor %vm2162, %vm2163
        %v2165 = vsel %vm2164, %v2157, %v2161
        %v2166 = vand.u32 2147483647, %v2156
        %vm2167 = vcmp.eq.f32.partialorder %v2166, 8.507059e+37
        %v2168 = vand.u32 %v2156, 2147483648
        %v2169 = vor.u32 1.1754944e-38, %v2168
        %v2170 = vsel %vm2167, %v2169, %v2165
        %v2171 = vmul.f32 %v2143, %v2170
        %v2172 = vperm.slane %v2131, 0
        %v2173 = vadd.f32 %v2171, %v2172
        %v2174 = vpack.c.bf16 %v2173, %v2173
        %s2175 = scalar_lea.vmem %s8, 16
        %v2176 = vld [vmem:[%s2175] sm:$0xf]
        %v2177 = vld [vmem:[%s2175 + $0x4] sm:$0xf]
        %v2178 = vld [vmem:[%s2175 + $0x8] sm:$0xf]
        %v2179 = vld [vmem:[%s2175 + $0xc] sm:$0xf]
        %v2180 = vld [vmem:[%s9 + $0x1] sm:$0x1]
        %v2181 = vperm.slane %v2180, 0
        %v2186 = vunpack.c.l.b16 %v2176
        %v2187 = vunpack.c.l.b16 %v2177
        %v2188 = vunpack.c.l.b16 %v2178
        %v2189 = vunpack.c.l.b16 %v2179
        %v2190 = vpack.c.b16 %v2187, %v2186
        %v2191 = vpack.c.b16 %v2189, %v2188
        %v2195 = vsel %vm977, %v2174, 0
        %2197 = vmatpush.bf16.msra.mxu0 0
        %2198 = vmatpush.bf16.msra.mxu0 0
        %2199 = vmatpush.bf16.msra.mxu0 0
        %2200 = vmatpush.bf16.msra.mxu0 0
        %2201 = vmatpush.bf16.msra.mxu0 0
        %2202 = vmatpush.bf16.msra.mxu0 0
        %2203 = vmatpush.bf16.msra.mxu0 %v2191
        %2204 = vmatpush.bf16.msra.mxu0 %v2190
        %2205 = vmatmul.bf16.gmra.mxu0 %v2195
        %v2206 = vpop.f32.mrf.mxu0
        %v2207 = vadd.f32 %v2181, %v2206
        %v2208 = vpop.f32.mrf.mxu0
        %2209 = vdwg.mxu0
        %s2210 = scalar_lea.vmem %s10, 16
        %v2211 = vld [vmem:[%s2210] sm:$0xf]
        %v2212 = vld [vmem:[%s2210 + $0x4] sm:$0xf]
        %v2213 = vld [vmem:[%s2210 + $0x8] sm:$0xf]
        %v2214 = vld [vmem:[%s2210 + $0xc] sm:$0xf]
        %v2215 = vld [vmem:[%s11 + $0x1] sm:$0x1]
        %2216 = vst.msk [vmem:[#allocation2] sm:$0xff] %vm1067, %v2207
        %2218 = vrot.lane.b32.xlu0 %v2207, 96
        %v2219 = vpop.permute.xlu0 %2218
        %2221 = vst.msk [vmem:[#allocation3] sm:$0xff] %vm1067, %v2219
        %2222 = vrot.lane.b32.xlu0 %v2207, 64
        %v2223 = vpop.permute.xlu0 %2222
        %2225 = vst.msk [vmem:[#allocation4] sm:$0xff] %vm1067, %v2223
        %2226 = vrot.lane.b32.xlu0 %v2207, 120
        %v2227 = vpop.permute.xlu0 %2226
        %2229 = vst.msk [vmem:[%s1081] sm:$0xff] %vm1067, %v2227
        %2230 = vrot.lane.b32.xlu0 %v2207, 88
        %v2231 = vpop.permute.xlu0 %2230
        %2233 = vst.msk [vmem:[%s1086] sm:$0xff] %vm1067, %v2231
        %2234 = vrot.lane.b32.xlu0 %v2207, 56
        %v2235 = vpop.permute.xlu0 %2234
        %2237 = vst.msk [vmem:[%s1091] sm:$0xff] %vm1067, %v2235
        %2238 = vrot.lane.b32.xlu0 %v2207, 112
        %v2239 = vpop.permute.xlu0 %2238
        %2241 = vst.msk [vmem:[%s1096] sm:$0xff] %vm1067, %v2239
        %2242 = vrot.lane.b32.xlu0 %v2207, 80
        %v2243 = vpop.permute.xlu0 %2242
        %2245 = vst.msk [vmem:[%s1101] sm:$0xff] %vm1067, %v2243
        %2246 = vrot.lane.b32.xlu0 %v2207, 48
        %v2247 = vpop.permute.xlu0 %2246
        %2249 = vst.msk [vmem:[%s1106] sm:$0xff] %vm1067, %v2247
        %2250 = vrot.lane.b32.xlu0 %v2207, 104
        %v2251 = vpop.permute.xlu0 %2250
        %2253 = vst.msk [vmem:[%s1111] sm:$0xff] %vm1067, %v2251
        %2254 = vrot.lane.b32.xlu0 %v2207, 72
        %v2255 = vpop.permute.xlu0 %2254
        %2257 = vst.msk [vmem:[%s1116] sm:$0xff] %vm1067, %v2255
        %2258 = vrot.lane.b32.xlu0 %v2207, 40
        %v2259 = vpop.permute.xlu0 %2258
        %2261 = vst.msk [vmem:[%s1121] sm:$0xff] %vm1067, %v2259
        %v2262 = vld [vmem:[#allocation2] sm:$0xff]
        %v2263 = vld [vmem:[#allocation2 + $0x8] sm:$0xff]
        %v2264 = vld [vmem:[#allocation2 + $0x10] sm:$0xff]
        %v2265 = vld [vmem:[#allocation2 + $0x18] sm:$0xff]
        %v2266 = vpack.c.bf16 %v2262, %v2262
        %v2267 = vpack.c.bf16 %v2263, %v2263
        %v2268 = vpack.c.bf16 %v2264, %v2264
        %v2269 = vpack.c.bf16 %v2265, %v2265
        %v2270 = vld [vmem:[#allocation3] sm:$0xff]
        %v2271 = vld [vmem:[#allocation3 + $0x8] sm:$0xff]
        %v2272 = vld [vmem:[#allocation3 + $0x10] sm:$0xff]
        %v2273 = vld [vmem:[#allocation3 + $0x18] sm:$0xff]
        %v2274 = vpack.c.bf16 %v2270, %v2270
        %v2275 = vpack.c.bf16 %v2271, %v2271
        %v2276 = vpack.c.bf16 %v2272, %v2272
        %v2277 = vpack.c.bf16 %v2273, %v2273
        %v2278 = vld [vmem:[#allocation4] sm:$0xff]
        %v2279 = vld [vmem:[#allocation4 + $0x8] sm:$0xff]
        %v2280 = vld [vmem:[#allocation4 + $0x10] sm:$0xff]
        %v2281 = vld [vmem:[#allocation4 + $0x18] sm:$0xff]
        %v2282 = vpack.c.bf16 %v2278, %v2278
        %v2283 = vpack.c.bf16 %v2279, %v2279
        %v2284 = vpack.c.bf16 %v2280, %v2280
        %v2285 = vpack.c.bf16 %v2281, %v2281
        %v2287 = vsel %vm1067, %v2266, 0
        %v2290 = vsel %vm1067, %v2274, 0
        %2292 = vmatpush.bf16.xpose.msra.mxu0 0
        %2293 = vmatpush.bf16.xpose.msra.mxu0 0
        %2294 = vmatpush.bf16.xpose.msra.mxu0 0
        %2295 = vmatpush.bf16.xpose.msra.mxu0 0
        %2296 = vmatpush.bf16.xpose.msra.mxu0 0
        %2297 = vmatpush.bf16.xpose.msra.mxu0 0
        %2298 = vmatpush.bf16.xpose.msra.mxu0 0
        %2299 = vmatpush.bf16.xpose.msra.mxu0 %v2290
        %2300 = vmatmul.bf16.gmra.mxu0 %v2287
        %v2301 = vpop.f32.mrf.mxu0
        %v2302 = vadd.f32 0.0, %v2301
        %v2303 = vpop.f32.mrf.mxu0
        %2304 = vdwg.mxu0
        %v2306 = vsel %vm1067, %v2267, 0
        %v2309 = vsel %vm1067, %v2275, 0
        %2311 = vmatpush.bf16.xpose.msra.mxu0 0
        %2312 = vmatpush.bf16.xpose.msra.mxu0 0
        %2313 = vmatpush.bf16.xpose.msra.mxu0 0
        %2314 = vmatpush.bf16.xpose.msra.mxu0 0
        %2315 = vmatpush.bf16.xpose.msra.mxu0 0
        %2316 = vmatpush.bf16.xpose.msra.mxu0 0
        %2317 = vmatpush.bf16.xpose.msra.mxu0 0
        %2318 = vmatpush.bf16.xpose.msra.mxu0 %v2309
        %2319 = vmatmul.bf16.gmra.mxu0 %v2306
        %v2320 = vpop.f32.mrf.mxu0
        %v2321 = vadd.f32 0.0, %v2320
        %v2322 = vpop.f32.mrf.mxu0
        %2323 = vdwg.mxu0
        %v2325 = vsel %vm1067, %v2268, 0
        %v2328 = vsel %vm1067, %v2276, 0
        %2330 = vmatpush.bf16.xpose.msra.mxu0 0
        %2331 = vmatpush.bf16.xpose.msra.mxu0 0
        %2332 = vmatpush.bf16.xpose.msra.mxu0 0
        %2333 = vmatpush.bf16.xpose.msra.mxu0 0
        %2334 = vmatpush.bf16.xpose.msra.mxu0 0
        %2335 = vmatpush.bf16.xpose.msra.mxu0 0
        %2336 = vmatpush.bf16.xpose.msra.mxu0 0
        %2337 = vmatpush.bf16.xpose.msra.mxu0 %v2328
        %2338 = vmatmul.bf16.gmra.mxu0 %v2325
        %v2339 = vpop.f32.mrf.mxu0
        %v2340 = vadd.f32 0.0, %v2339
        %v2341 = vpop.f32.mrf.mxu0
        %2342 = vdwg.mxu0
        %v2344 = vsel %vm1067, %v2269, 0
        %v2347 = vsel %vm1067, %v2277, 0
        %2349 = vmatpush.bf16.xpose.msra.mxu0 0
        %2350 = vmatpush.bf16.xpose.msra.mxu0 0
        %2351 = vmatpush.bf16.xpose.msra.mxu0 0
        %2352 = vmatpush.bf16.xpose.msra.mxu0 0
        %2353 = vmatpush.bf16.xpose.msra.mxu0 0
        %2354 = vmatpush.bf16.xpose.msra.mxu0 0
        %2355 = vmatpush.bf16.xpose.msra.mxu0 0
        %2356 = vmatpush.bf16.xpose.msra.mxu0 %v2347
        %2357 = vmatmul.bf16.gmra.mxu0 %v2344
        %v2358 = vpop.f32.mrf.mxu0
        %v2359 = vadd.f32 0.0, %v2358
        %v2360 = vpop.f32.mrf.mxu0
        %2361 = vdwg.mxu0
        %v2362 = vmul.f32 %v2302, 0.35355338
        %v2363 = vmul.f32 %v2321, 0.35355338
        %v2364 = vmul.f32 %v2340, 0.35355338
        %v2365 = vmul.f32 %v2359, 0.35355338
        %v2366 = vadd.f32 %v2362, %v972
        %v2367 = vadd.f32 %v2363, %v972
        %v2368 = vadd.f32 %v2364, %v972
        %v2369 = vadd.f32 %v2365, %v972
        %v2370 = vsel %vm1233, -1e+09, %v2366
        %v2371 = vsel %vm1233, -1e+09, %v2367
        %v2372 = vsel %vm1233, -1e+09, %v2368
        %v2373 = vsel %vm1233, -1e+09, %v2369
        %v2374 = vsel %vm1067, %v2370, -inf
        %2375 = vmax.xlane.f32.xlu0 %v2374
        %v2376 = vpop.xlane.xlu0 %2375
        %v2377 = vsel %vm1067, %v2371, -inf
        %2378 = vmax.xlane.f32.xlu0 %v2377
        %v2379 = vpop.xlane.xlu0 %2378
        %v2380 = vsel %vm1067, %v2372, -inf
        %2381 = vmax.xlane.f32.xlu0 %v2380
        %v2382 = vpop.xlane.xlu0 %2381
        %v2383 = vsel %vm1067, %v2373, -inf
        %2384 = vmax.xlane.f32.xlu0 %v2383
        %v2385 = vpop.xlane.xlu0 %2384
        %v2386 = vsub.f32 %v2370, %v2376
        %v2387 = vsub.f32 %v2371, %v2379
        %v2388 = vsub.f32 %v2372, %v2382
        %v2389 = vsub.f32 %v2373, %v2385
        %v2390 = vmul.f32 %v2386, 1.442695
        %v2391 = vpow.pop %v2390
        %v2392 = vmul.f32 %v2387, 1.442695
        %v2393 = vpow.pop %v2392
        %v2394 = vmul.f32 %v2388, 1.442695
        %v2395 = vpow.pop %v2394
        %v2396 = vmul.f32 %v2389, 1.442695
        %v2397 = vpow.pop %v2396
        %v2398 = vsel %vm1067, %v2391, 0.0
        %2399 = vadd.xlane.f32.xlu0 %v2398
        %v2400 = vpop.xlane.xlu0 %2399
        %v2401 = vsel %vm1067, %v2393, 0.0
        %2402 = vadd.xlane.f32.xlu0 %v2401
        %v2403 = vpop.xlane.xlu0 %2402
        %v2404 = vsel %vm1067, %v2395, 0.0
        %2405 = vadd.xlane.f32.xlu0 %v2404
        %v2406 = vpop.xlane.xlu0 %2405
        %v2407 = vsel %vm1067, %v2397, 0.0
        %2408 = vadd.xlane.f32.xlu0 %v2407
        %v2409 = vpop.xlane.xlu0 %2408
        %v2410 = vrcp.pop %v2400
        %v2411 = vmul.f32 %v2400, %v2410
        %v2412 = vsub.f32 1.0, %v2411
        %v2413 = vmul.f32 %v2410, %v2412
        %v2414 = vadd.f32 %v2410, %v2413
        %vm2415 = vweird.f32 %v2400
        %vm2416 = vweird.f32 %v2410
        %vm2417 = vmor %vm2415, %vm2416
        %v2418 = vsel %vm2417, %v2410, %v2414
        %v2419 = vand.u32 2147483647, %v2400
        %vm2420 = vcmp.eq.f32.partialorder %v2419, 8.507059e+37
        %v2421 = vand.u32 %v2400, 2147483648
        %v2422 = vor.u32 1.1754944e-38, %v2421
        %v2423 = vsel %vm2420, %v2422, %v2418
        %v2424 = vmul.f32 %v2391, %v2423
        %v2425 = vrcp.pop %v2403
        %v2426 = vmul.f32 %v2403, %v2425
        %v2427 = vsub.f32 1.0, %v2426
        %v2428 = vmul.f32 %v2425, %v2427
        %v2429 = vadd.f32 %v2425, %v2428
        %vm2430 = vweird.f32 %v2403
        %vm2431 = vweird.f32 %v2425
        %vm2432 = vmor %vm2430, %vm2431
        %v2433 = vsel %vm2432, %v2425, %v2429
        %v2434 = vand.u32 2147483647, %v2403
        %vm2435 = vcmp.eq.f32.partialorder %v2434, 8.507059e+37
        %v2436 = vand.u32 %v2403, 2147483648
        %v2437 = vor.u32 1.1754944e-38, %v2436
        %v2438 = vsel %vm2435, %v2437, %v2433
        %v2439 = vmul.f32 %v2393, %v2438
        %v2440 = vrcp.pop %v2406
        %v2441 = vmul.f32 %v2406, %v2440
        %v2442 = vsub.f32 1.0, %v2441
        %v2443 = vmul.f32 %v2440, %v2442
        %v2444 = vadd.f32 %v2440, %v2443
        %vm2445 = vweird.f32 %v2406
        %vm2446 = vweird.f32 %v2440
        %vm2447 = vmor %vm2445, %vm2446
        %v2448 = vsel %vm2447, %v2440, %v2444
        %v2449 = vand.u32 2147483647, %v2406
        %vm2450 = vcmp.eq.f32.partialorder %v2449, 8.507059e+37
        %v2451 = vand.u32 %v2406, 2147483648
        %v2452 = vor.u32 1.1754944e-38, %v2451
        %v2453 = vsel %vm2450, %v2452, %v2448
        %v2454 = vmul.f32 %v2395, %v2453
        %v2455 = vrcp.pop %v2409
        %v2456 = vmul.f32 %v2409, %v2455
        %v2457 = vsub.f32 1.0, %v2456
        %v2458 = vmul.f32 %v2455, %v2457
        %v2459 = vadd.f32 %v2455, %v2458
        %vm2460 = vweird.f32 %v2409
        %vm2461 = vweird.f32 %v2455
        %vm2462 = vmor %vm2460, %vm2461
        %v2463 = vsel %vm2462, %v2455, %v2459
        %v2464 = vand.u32 2147483647, %v2409
        %vm2465 = vcmp.eq.f32.partialorder %v2464, 8.507059e+37
        %v2466 = vand.u32 %v2409, 2147483648
        %v2467 = vor.u32 1.1754944e-38, %v2466
        %v2468 = vsel %vm2465, %v2467, %v2463
        %v2469 = vmul.f32 %v2397, %v2468
        %v2470 = vpack.c.bf16 %v2424, %v2424
        %v2471 = vpack.c.bf16 %v2439, %v2439
        %v2472 = vpack.c.bf16 %v2454, %v2454
        %v2473 = vpack.c.bf16 %v2469, %v2469
        %v2475 = vsel %vm1067, %v2470, 0
        %v2478 = vsel %vm1341, %v2282, 0
        %2480 = vmatpush.bf16.msra.mxu0 0
        %2481 = vmatpush.bf16.msra.mxu0 0
        %2482 = vmatpush.bf16.msra.mxu0 0
        %2483 = vmatpush.bf16.msra.mxu0 0
        %2484 = vmatpush.bf16.msra.mxu0 0
        %2485 = vmatpush.bf16.msra.mxu0 0
        %2486 = vmatpush.bf16.msra.mxu0 0
        %2487 = vmatpush.bf16.msra.mxu0 %v2478
        %2488 = vmatmul.bf16.gmra.mxu0 %v2475
        %v2489 = vpop.f32.mrf.mxu0
        %v2490 = vadd.f32 0.0, %v2489
        %v2491 = vpop.f32.mrf.mxu0
        %2492 = vdwg.mxu0
        %v2494 = vsel %vm1067, %v2471, 0
        %v2497 = vsel %vm1341, %v2283, 0
        %2499 = vmatpush.bf16.msra.mxu0 0
        %2500 = vmatpush.bf16.msra.mxu0 0
        %2501 = vmatpush.bf16.msra.mxu0 0
        %2502 = vmatpush.bf16.msra.mxu0 0
        %2503 = vmatpush.bf16.msra.mxu0 0
        %2504 = vmatpush.bf16.msra.mxu0 0
        %2505 = vmatpush.bf16.msra.mxu0 0
        %2506 = vmatpush.bf16.msra.mxu0 %v2497
        %2507 = vmatmul.bf16.gmra.mxu0 %v2494
        %v2508 = vpop.f32.mrf.mxu0
        %v2509 = vadd.f32 0.0, %v2508
        %v2510 = vpop.f32.mrf.mxu0
        %2511 = vdwg.mxu0
        %v2513 = vsel %vm1067, %v2472, 0
        %v2516 = vsel %vm1341, %v2284, 0
        %2518 = vmatpush.bf16.msra.mxu0 0
        %2519 = vmatpush.bf16.msra.mxu0 0
        %2520 = vmatpush.bf16.msra.mxu0 0
        %2521 = vmatpush.bf16.msra.mxu0 0
        %2522 = vmatpush.bf16.msra.mxu0 0
        %2523 = vmatpush.bf16.msra.mxu0 0
        %2524 = vmatpush.bf16.msra.mxu0 0
        %2525 = vmatpush.bf16.msra.mxu0 %v2516
        %2526 = vmatmul.bf16.gmra.mxu0 %v2513
        %v2527 = vpop.f32.mrf.mxu0
        %v2528 = vadd.f32 0.0, %v2527
        %v2529 = vpop.f32.mrf.mxu0
        %2530 = vdwg.mxu0
        %v2532 = vsel %vm1067, %v2473, 0
        %v2535 = vsel %vm1341, %v2285, 0
        %2537 = vmatpush.bf16.msra.mxu0 0
        %2538 = vmatpush.bf16.msra.mxu0 0
        %2539 = vmatpush.bf16.msra.mxu0 0
        %2540 = vmatpush.bf16.msra.mxu0 0
        %2541 = vmatpush.bf16.msra.mxu0 0
        %2542 = vmatpush.bf16.msra.mxu0 0
        %2543 = vmatpush.bf16.msra.mxu0 0
        %2544 = vmatpush.bf16.msra.mxu0 %v2535
        %2545 = vmatmul.bf16.gmra.mxu0 %v2532
        %v2546 = vpop.f32.mrf.mxu0
        %v2547 = vadd.f32 0.0, %v2546
        %v2548 = vpop.f32.mrf.mxu0
        %2549 = vdwg.mxu0
        %2551 = vrot.lane.b32.xlu0 %v2424, 64
        %v2552 = vpop.permute.xlu0 %2551
        %vm2554 = vcmask 589312
        %2555 = vst.msk [vmem:[%s965] sm:$0xff] %vm2554, %v2552
        %2556 = vst.msk [vmem:[#allocation5] sm:$0xff] %vm1067, %v2490
        %2558 = vrot.lane.b32.xlu0 %v2439, 72
        %v2559 = vpop.permute.xlu0 %2558
        %vm2561 = vcmask 654912
        %2562 = vst.msk [vmem:[%s965] sm:$0xff] %vm2561, %v2559
        %2564 = vrot.lane.b32.xlu0 %v2509, 8
        %v2565 = vpop.permute.xlu0 %2564
        %2567 = vst.msk [vmem:[#allocation5] sm:$0xff] %vm1421, %v2565
        %2569 = vrot.lane.b32.xlu0 %v2454, 80
        %v2570 = vpop.permute.xlu0 %2569
        %vm2572 = vcmask 720512
        %2573 = vst.msk [vmem:[%s965] sm:$0xff] %vm2572, %v2570
        %2575 = vrot.lane.b32.xlu0 %v2528, 16
        %v2576 = vpop.permute.xlu0 %2575
        %2578 = vst.msk [vmem:[#allocation5] sm:$0xff] %vm1432, %v2576
        %2580 = vrot.lane.b32.xlu0 %v2469, 88
        %v2581 = vpop.permute.xlu0 %2580
        %vm2583 = vcmask 786112
        %2584 = vst.msk [vmem:[%s965] sm:$0xff] %vm2583, %v2581
        %2586 = vrot.lane.b32.xlu0 %v2547, 24
        %v2587 = vpop.permute.xlu0 %2586
        %2589 = vst.msk [vmem:[#allocation5] sm:$0xff] %vm1443, %v2587
        %v2590 = vld [vmem:[#allocation5] sm:$0xff]
        %v2591 = vpack.c.bf16 %v2590, %v2590
        %v2592 = vperm.slane %v2215, 0
        %v2597 = vunpack.c.l.b16 %v2211
        %v2598 = vunpack.c.l.b16 %v2212
        %v2599 = vunpack.c.l.b16 %v2213
        %v2600 = vunpack.c.l.b16 %v2214
        %v2601 = vpack.c.b16 %v2598, %v2597
        %v2602 = vpack.c.b16 %v2600, %v2599
        %v2606 = vsel %vm977, %v2591, 0
        %2608 = vmatpush.bf16.msra.mxu0 0
        %2609 = vmatpush.bf16.msra.mxu0 0
        %2610 = vmatpush.bf16.msra.mxu0 0
        %2611 = vmatpush.bf16.msra.mxu0 0
        %2612 = vmatpush.bf16.msra.mxu0 0
        %2613 = vmatpush.bf16.msra.mxu0 0
        %2614 = vmatpush.bf16.msra.mxu0 %v2602
        %2615 = vmatpush.bf16.msra.mxu0 %v2601
        %2616 = vmatmul.bf16.gmra.mxu0 %v2606
        %v2617 = vpop.f32.mrf.mxu0
        %v2618 = vadd.f32 %v2592, %v2617
        %v2619 = vpop.f32.mrf.mxu0
        %2620 = vdwg.mxu0
        %v2621 = vadd.f32 %v2129, %v2618
        %v2622 = vld [vmem:[#allocation17 + $0x4] sm:$0x1]
        %v2623 = vld [vmem:[#allocation18 + $0x4] sm:$0x1]
        %v2624 = vsel %vm977, %v2621, 0.0
        %2625 = vadd.xlane.f32.xlu0 %v2624
        %v2626 = vpop.xlane.xlu0 %2625
        %v2627 = vmul.f32 %v2626, %v987
        %v2628 = vsub.f32 %v2621, %v2627
        %v2629 = vmul.f32 %v2628, %v2628
        %v2630 = vsel %vm977, %v2629, 0.0
        %2631 = vadd.xlane.f32.xlu0 %v2630
        %v2632 = vpop.xlane.xlu0 %2631
        %v2633 = vmul.f32 %v2632, 0.032258064
        %v2634 = vperm.slane %v2622, 0
        %v2635 = vmul.f32 %v2634, %v2628
        %v2636 = vrsqrt.pop %v2633
        %v2637 = vmul.f32 %v2636, %v2633
        %v2638 = vmul.f32 %v2637, %v2636
        %v2639 = vmul.f32 0.5, %v2638
        %v2640 = vsub.f32 1.5, %v2639
        %v2641 = vmul.f32 %v2636, %v2640
        %v2642 = vmul.f32 %v2633, %v2641
        %vm2643 = vcmp.eq.f32.partialorder %v2633, inf
        %v2644 = vsel %vm2643, %v2633, %v2642
        %vm2645 = vcmp.eq.f32.partialorder %v2633, 0.0
        %v2646 = vand.u32 %v2633, 2147483648
        %v2647 = vsel %vm2645, %v2646, %v2644
        %v2648 = vadd.f32 %v2647, 1e-06
        %v2649 = vrcp.pop %v2648
        %v2650 = vmul.f32 %v2648, %v2649
        %v2651 = vsub.f32 1.0, %v2650
        %v2652 = vmul.f32 %v2649, %v2651
        %v2653 = vadd.f32 %v2649, %v2652
        %vm2654 = vweird.f32 %v2648
        %vm2655 = vweird.f32 %v2649
        %vm2656 = vmor %vm2654, %vm2655
        %v2657 = vsel %vm2656, %v2649, %v2653
        %v2658 = vand.u32 2147483647, %v2648
        %vm2659 = vcmp.eq.f32.partialorder %v2658, 8.507059e+37
        %v2660 = vand.u32 %v2648, 2147483648
        %v2661 = vor.u32 1.1754944e-38, %v2660
        %v2662 = vsel %vm2659, %v2661, %v2657
        %v2663 = vmul.f32 %v2635, %v2662
        %v2664 = vperm.slane %v2623, 0
        %v2665 = vadd.f32 %v2663, %v2664
        %s2666 = scalar_lea.vmem %s12, 16
        %v2667 = vld [vmem:[%s2666] sm:$0xf]
        %v2668 = vld [vmem:[%s2666 + $0x4] sm:$0xf]
        %v2669 = vld [vmem:[%s2666 + $0x8] sm:$0xf]
        %v2670 = vld [vmem:[%s2666 + $0xc] sm:$0xf]
        %v2671 = vld [vmem:[%s13 + $0x1] sm:$0x1]
        %v2672 = vpack.c.bf16 %v2665, %v2665
        %v2673 = vperm.slane %v2671, 0
        %v2678 = vunpack.c.l.b16 %v2667
        %v2679 = vunpack.c.l.b16 %v2668
        %v2680 = vunpack.c.l.b16 %v2669
        %v2681 = vunpack.c.l.b16 %v2670
        %v2682 = vpack.c.b16 %v2679, %v2678
        %v2683 = vpack.c.b16 %v2681, %v2680
        %v2687 = vsel %vm977, %v2672, 0
        %2689 = vmatpush.bf16.msra.mxu0 0
        %2690 = vmatpush.bf16.msra.mxu0 0
        %2691 = vmatpush.bf16.msra.mxu0 0
        %2692 = vmatpush.bf16.msra.mxu0 0
        %2693 = vmatpush.bf16.msra.mxu0 0
        %2694 = vmatpush.bf16.msra.mxu0 0
        %2695 = vmatpush.bf16.msra.mxu0 %v2683
        %2696 = vmatpush.bf16.msra.mxu0 %v2682
        %2697 = vmatmul.bf16.gmra.mxu0 %v2687
        %v2698 = vpop.f32.mrf.mxu0
        %v2699 = vadd.f32 %v2673, %v2698
        %v2700 = vpop.f32.mrf.mxu0
        %2701 = vdwg.mxu0
        %2702 = vrot.lane.b32.xlu0 %v2682, 96
        %v2703 = vpop.permute.xlu0 %2702
        %2704 = vrot.lane.b32.xlu0 %v2683, 96
        %v2705 = vpop.permute.xlu0 %2704
        %2709 = vrot.lane.b32.xlu0 %v2673, 96
        %v2710 = vpop.permute.xlu0 %2709
        %2712 = vmatpush.bf16.msra.mxu0 0
        %2713 = vmatpush.bf16.msra.mxu0 0
        %2714 = vmatpush.bf16.msra.mxu0 0
        %2715 = vmatpush.bf16.msra.mxu0 0
        %2716 = vmatpush.bf16.msra.mxu0 0
        %2717 = vmatpush.bf16.msra.mxu0 0
        %2718 = vmatpush.bf16.msra.mxu0 %v2705
        %2719 = vmatpush.bf16.msra.mxu0 %v2703
        %2720 = vmatmul.bf16.gmra.mxu0 %v1573
        %v2721 = vpop.f32.mrf.mxu0
        %v2722 = vadd.f32 %v2710, %v2721
        %v2723 = vpop.f32.mrf.mxu0
        %2724 = vdwg.mxu0
        %s2725 = scalar_lea.vmem [#allocation20], 16
        %v2726 = vld [vmem:[%s2725] sm:$0xf]
        %v2727 = vld [vmem:[%s2725 + $0x4] sm:$0xf]
        %v2728 = vld [vmem:[%s2725 + $0x8] sm:$0xf]
        %v2729 = vld [vmem:[%s2725 + $0xc] sm:$0xf]
        %v2730 = vld [vmem:[%s15 + $0x1] sm:$0x1]
        %2731 = vst.msk [vmem:[#allocation2] sm:$0xff] %vm1067, %v2699
        %2732 = vst.msk [vmem:[#allocation3] sm:$0xff] %vm1067, %v2722
        %2734 = vrot.lane.b32.xlu0 %v2722, 96
        %v2735 = vpop.permute.xlu0 %2734
        %2737 = vst.msk [vmem:[#allocation4] sm:$0xff] %vm1067, %v2735
        %2739 = vrot.lane.b32.xlu0 %v2699, 120
        %v2740 = vpop.permute.xlu0 %2739
        %2742 = vst.msk [vmem:[%s1081] sm:$0xff] %vm1067, %v2740
        %2743 = vrot.lane.b32.xlu0 %v2722, 120
        %v2744 = vpop.permute.xlu0 %2743
        %2746 = vst.msk [vmem:[%s1086] sm:$0xff] %vm1067, %v2744
        %2747 = vrot.lane.b32.xlu0 %v2722, 88
        %v2748 = vpop.permute.xlu0 %2747
        %2750 = vst.msk [vmem:[%s1091] sm:$0xff] %vm1067, %v2748
        %2751 = vrot.lane.b32.xlu0 %v2699, 112
        %v2752 = vpop.permute.xlu0 %2751
        %2754 = vst.msk [vmem:[%s1096] sm:$0xff] %vm1067, %v2752
        %2755 = vrot.lane.b32.xlu0 %v2722, 112
        %v2756 = vpop.permute.xlu0 %2755
        %2758 = vst.msk [vmem:[%s1101] sm:$0xff] %vm1067, %v2756
        %2759 = vrot.lane.b32.xlu0 %v2722, 80
        %v2760 = vpop.permute.xlu0 %2759
        %2762 = vst.msk [vmem:[%s1106] sm:$0xff] %vm1067, %v2760
        %2763 = vrot.lane.b32.xlu0 %v2699, 104
        %v2764 = vpop.permute.xlu0 %2763
        %2766 = vst.msk [vmem:[%s1111] sm:$0xff] %vm1067, %v2764
        %2767 = vrot.lane.b32.xlu0 %v2722, 104
        %v2768 = vpop.permute.xlu0 %2767
        %2770 = vst.msk [vmem:[%s1116] sm:$0xff] %vm1067, %v2768
        %2771 = vrot.lane.b32.xlu0 %v2722, 72
        %v2772 = vpop.permute.xlu0 %2771
        %2774 = vst.msk [vmem:[%s1121] sm:$0xff] %vm1067, %v2772
        %v2775 = vld [vmem:[#allocation2] sm:$0xff]
        %v2776 = vld [vmem:[#allocation2 + $0x8] sm:$0xff]
        %v2777 = vld [vmem:[#allocation2 + $0x10] sm:$0xff]
        %v2778 = vld [vmem:[#allocation2 + $0x18] sm:$0xff]
        %v2779 = vpack.c.bf16 %v2775, %v2775
        %v2780 = vpack.c.bf16 %v2776, %v2776
        %v2781 = vpack.c.bf16 %v2777, %v2777
        %v2782 = vpack.c.bf16 %v2778, %v2778
        %v2783 = vld [vmem:[#allocation3] sm:$0xff]
        %v2784 = vld [vmem:[#allocation3 + $0x8] sm:$0xff]
        %v2785 = vld [vmem:[#allocation3 + $0x10] sm:$0xff]
        %v2786 = vld [vmem:[#allocation3 + $0x18] sm:$0xff]
        %v2787 = vpack.c.bf16 %v2783, %v2783
        %v2788 = vpack.c.bf16 %v2784, %v2784
        %v2789 = vpack.c.bf16 %v2785, %v2785
        %v2790 = vpack.c.bf16 %v2786, %v2786
        %v2791 = vld [vmem:[#allocation4] sm:$0xff]
        %v2792 = vld [vmem:[#allocation4 + $0x8] sm:$0xff]
        %v2793 = vld [vmem:[#allocation4 + $0x10] sm:$0xff]
        %v2794 = vld [vmem:[#allocation4 + $0x18] sm:$0xff]
        %v2795 = vpack.c.bf16 %v2791, %v2791
        %v2796 = vpack.c.bf16 %v2792, %v2792
        %v2797 = vpack.c.bf16 %v2793, %v2793
        %v2798 = vpack.c.bf16 %v2794, %v2794
        %v2800 = vsel %vm1067, %v2779, 0
        %v2803 = vsel %vm1067, %v2787, 0
        %2805 = vmatpush.bf16.xpose.msra.mxu0 0
        %2806 = vmatpush.bf16.xpose.msra.mxu0 0
        %2807 = vmatpush.bf16.xpose.msra.mxu0 0
        %2808 = vmatpush.bf16.xpose.msra.mxu0 0
        %2809 = vmatpush.bf16.xpose.msra.mxu0 0
        %2810 = vmatpush.bf16.xpose.msra.mxu0 0
        %2811 = vmatpush.bf16.xpose.msra.mxu0 0
        %2812 = vmatpush.bf16.xpose.msra.mxu0 %v2803
        %2813 = vmatmul.bf16.gmra.mxu0 %v2800
        %v2814 = vpop.f32.mrf.mxu0
        %v2815 = vadd.f32 0.0, %v2814
        %v2816 = vpop.f32.mrf.mxu0
        %2817 = vdwg.mxu0
        %v2819 = vsel %vm1067, %v2780, 0
        %v2822 = vsel %vm1067, %v2788, 0
        %2824 = vmatpush.bf16.xpose.msra.mxu0 0
        %2825 = vmatpush.bf16.xpose.msra.mxu0 0
        %2826 = vmatpush.bf16.xpose.msra.mxu0 0
        %2827 = vmatpush.bf16.xpose.msra.mxu0 0
        %2828 = vmatpush.bf16.xpose.msra.mxu0 0
        %2829 = vmatpush.bf16.xpose.msra.mxu0 0
        %2830 = vmatpush.bf16.xpose.msra.mxu0 0
        %2831 = vmatpush.bf16.xpose.msra.mxu0 %v2822
        %2832 = vmatmul.bf16.gmra.mxu0 %v2819
        %v2833 = vpop.f32.mrf.mxu0
        %v2834 = vadd.f32 0.0, %v2833
        %v2835 = vpop.f32.mrf.mxu0
        %2836 = vdwg.mxu0
        %v2838 = vsel %vm1067, %v2781, 0
        %v2841 = vsel %vm1067, %v2789, 0
        %2843 = vmatpush.bf16.xpose.msra.mxu0 0
        %2844 = vmatpush.bf16.xpose.msra.mxu0 0
        %2845 = vmatpush.bf16.xpose.msra.mxu0 0
        %2846 = vmatpush.bf16.xpose.msra.mxu0 0
        %2847 = vmatpush.bf16.xpose.msra.mxu0 0
        %2848 = vmatpush.bf16.xpose.msra.mxu0 0
        %2849 = vmatpush.bf16.xpose.msra.mxu0 0
        %2850 = vmatpush.bf16.xpose.msra.mxu0 %v2841
        %2851 = vmatmul.bf16.gmra.mxu0 %v2838
        %v2852 = vpop.f32.mrf.mxu0
        %v2853 = vadd.f32 0.0, %v2852
        %v2854 = vpop.f32.mrf.mxu0
        %2855 = vdwg.mxu0
        %v2857 = vsel %vm1067, %v2782, 0
        %v2860 = vsel %vm1067, %v2790, 0
        %2862 = vmatpush.bf16.xpose.msra.mxu0 0
        %2863 = vmatpush.bf16.xpose.msra.mxu0 0
        %2864 = vmatpush.bf16.xpose.msra.mxu0 0
        %2865 = vmatpush.bf16.xpose.msra.mxu0 0
        %2866 = vmatpush.bf16.xpose.msra.mxu0 0
        %2867 = vmatpush.bf16.xpose.msra.mxu0 0
        %2868 = vmatpush.bf16.xpose.msra.mxu0 0
        %2869 = vmatpush.bf16.xpose.msra.mxu0 %v2860
        %2870 = vmatmul.bf16.gmra.mxu0 %v2857
        %v2871 = vpop.f32.mrf.mxu0
        %v2872 = vadd.f32 0.0, %v2871
        %v2873 = vpop.f32.mrf.mxu0
        %2874 = vdwg.mxu0
        %v2875 = vmul.f32 %v2815, 0.35355338
        %v2876 = vmul.f32 %v2834, 0.35355338
        %v2877 = vmul.f32 %v2853, 0.35355338
        %v2878 = vmul.f32 %v2872, 0.35355338
        %v2879 = vsel %vm1743, -1e+09, %v2875
        %v2880 = vsel %vm1743, -1e+09, %v2876
        %v2881 = vsel %vm1743, -1e+09, %v2877
        %v2882 = vsel %vm1743, -1e+09, %v2878
        %v2883 = vsel %vm1067, %v2879, -inf
        %2884 = vmax.xlane.f32.xlu0 %v2883
        %v2885 = vpop.xlane.xlu0 %2884
        %v2886 = vsel %vm1067, %v2880, -inf
        %2887 = vmax.xlane.f32.xlu0 %v2886
        %v2888 = vpop.xlane.xlu0 %2887
        %v2889 = vsel %vm1067, %v2881, -inf
        %2890 = vmax.xlane.f32.xlu0 %v2889
        %v2891 = vpop.xlane.xlu0 %2890
        %v2892 = vsel %vm1067, %v2882, -inf
        %2893 = vmax.xlane.f32.xlu0 %v2892
        %v2894 = vpop.xlane.xlu0 %2893
        %v2895 = vsub.f32 %v2879, %v2885
        %v2896 = vsub.f32 %v2880, %v2888
        %v2897 = vsub.f32 %v2881, %v2891
        %v2898 = vsub.f32 %v2882, %v2894
        %v2899 = vmul.f32 %v2895, 1.442695
        %v2900 = vpow.pop %v2899
        %v2901 = vmul.f32 %v2896, 1.442695
        %v2902 = vpow.pop %v2901
        %v2903 = vmul.f32 %v2897, 1.442695
        %v2904 = vpow.pop %v2903
        %v2905 = vmul.f32 %v2898, 1.442695
        %v2906 = vpow.pop %v2905
        %v2907 = vsel %vm1067, %v2900, 0.0
        %2908 = vadd.xlane.f32.xlu0 %v2907
        %v2909 = vpop.xlane.xlu0 %2908
        %v2910 = vsel %vm1067, %v2902, 0.0
        %2911 = vadd.xlane.f32.xlu0 %v2910
        %v2912 = vpop.xlane.xlu0 %2911
        %v2913 = vsel %vm1067, %v2904, 0.0
        %2914 = vadd.xlane.f32.xlu0 %v2913
        %v2915 = vpop.xlane.xlu0 %2914
        %v2916 = vsel %vm1067, %v2906, 0.0
        %2917 = vadd.xlane.f32.xlu0 %v2916
        %v2918 = vpop.xlane.xlu0 %2917
        %v2919 = vrcp.pop %v2909
        %v2920 = vmul.f32 %v2909, %v2919
        %v2921 = vsub.f32 1.0, %v2920
        %v2922 = vmul.f32 %v2919, %v2921
        %v2923 = vadd.f32 %v2919, %v2922
        %vm2924 = vweird.f32 %v2909
        %vm2925 = vweird.f32 %v2919
        %vm2926 = vmor %vm2924, %vm2925
        %v2927 = vsel %vm2926, %v2919, %v2923
        %v2928 = vand.u32 2147483647, %v2909
        %vm2929 = vcmp.eq.f32.partialorder %v2928, 8.507059e+37
        %v2930 = vand.u32 %v2909, 2147483648
        %v2931 = vor.u32 1.1754944e-38, %v2930
        %v2932 = vsel %vm2929, %v2931, %v2927
        %v2933 = vmul.f32 %v2900, %v2932
        %v2934 = vrcp.pop %v2912
        %v2935 = vmul.f32 %v2912, %v2934
        %v2936 = vsub.f32 1.0, %v2935
        %v2937 = vmul.f32 %v2934, %v2936
        %v2938 = vadd.f32 %v2934, %v2937
        %vm2939 = vweird.f32 %v2912
        %vm2940 = vweird.f32 %v2934
        %vm2941 = vmor %vm2939, %vm2940
        %v2942 = vsel %vm2941, %v2934, %v2938
        %v2943 = vand.u32 2147483647, %v2912
        %vm2944 = vcmp.eq.f32.partialorder %v2943, 8.507059e+37
        %v2945 = vand.u32 %v2912, 2147483648
        %v2946 = vor.u32 1.1754944e-38, %v2945
        %v2947 = vsel %vm2944, %v2946, %v2942
        %v2948 = vmul.f32 %v2902, %v2947
        %v2949 = vrcp.pop %v2915
        %v2950 = vmul.f32 %v2915, %v2949
        %v2951 = vsub.f32 1.0, %v2950
        %v2952 = vmul.f32 %v2949, %v2951
        %v2953 = vadd.f32 %v2949, %v2952
        %vm2954 = vweird.f32 %v2915
        %vm2955 = vweird.f32 %v2949
        %vm2956 = vmor %vm2954, %vm2955
        %v2957 = vsel %vm2956, %v2949, %v2953
        %v2958 = vand.u32 2147483647, %v2915
        %vm2959 = vcmp.eq.f32.partialorder %v2958, 8.507059e+37
        %v2960 = vand.u32 %v2915, 2147483648
        %v2961 = vor.u32 1.1754944e-38, %v2960
        %v2962 = vsel %vm2959, %v2961, %v2957
        %v2963 = vmul.f32 %v2904, %v2962
        %v2964 = vrcp.pop %v2918
        %v2965 = vmul.f32 %v2918, %v2964
        %v2966 = vsub.f32 1.0, %v2965
        %v2967 = vmul.f32 %v2964, %v2966
        %v2968 = vadd.f32 %v2964, %v2967
        %vm2969 = vweird.f32 %v2918
        %vm2970 = vweird.f32 %v2964
        %vm2971 = vmor %vm2969, %vm2970
        %v2972 = vsel %vm2971, %v2964, %v2968
        %v2973 = vand.u32 2147483647, %v2918
        %vm2974 = vcmp.eq.f32.partialorder %v2973, 8.507059e+37
        %v2975 = vand.u32 %v2918, 2147483648
        %v2976 = vor.u32 1.1754944e-38, %v2975
        %v2977 = vsel %vm2974, %v2976, %v2972
        %v2978 = vmul.f32 %v2906, %v2977
        %v2979 = vpack.c.bf16 %v2933, %v2933
        %v2980 = vpack.c.bf16 %v2948, %v2948
        %v2981 = vpack.c.bf16 %v2963, %v2963
        %v2982 = vpack.c.bf16 %v2978, %v2978
        %v2984 = vsel %vm1067, %v2979, 0
        %v2987 = vsel %vm1341, %v2795, 0
        %2989 = vmatpush.bf16.msra.mxu0 0
        %2990 = vmatpush.bf16.msra.mxu0 0
        %2991 = vmatpush.bf16.msra.mxu0 0
        %2992 = vmatpush.bf16.msra.mxu0 0
        %2993 = vmatpush.bf16.msra.mxu0 0
        %2994 = vmatpush.bf16.msra.mxu0 0
        %2995 = vmatpush.bf16.msra.mxu0 0
        %2996 = vmatpush.bf16.msra.mxu0 %v2987
        %2997 = vmatmul.bf16.gmra.mxu0 %v2984
        %v2998 = vpop.f32.mrf.mxu0
        %v2999 = vadd.f32 0.0, %v2998
        %v3000 = vpop.f32.mrf.mxu0
        %3001 = vdwg.mxu0
        %v3003 = vsel %vm1067, %v2980, 0
        %v3006 = vsel %vm1341, %v2796, 0
        %3008 = vmatpush.bf16.msra.mxu0 0
        %3009 = vmatpush.bf16.msra.mxu0 0
        %3010 = vmatpush.bf16.msra.mxu0 0
        %3011 = vmatpush.bf16.msra.mxu0 0
        %3012 = vmatpush.bf16.msra.mxu0 0
        %3013 = vmatpush.bf16.msra.mxu0 0
        %3014 = vmatpush.bf16.msra.mxu0 0
        %3015 = vmatpush.bf16.msra.mxu0 %v3006
        %3016 = vmatmul.bf16.gmra.mxu0 %v3003
        %v3017 = vpop.f32.mrf.mxu0
        %v3018 = vadd.f32 0.0, %v3017
        %v3019 = vpop.f32.mrf.mxu0
        %3020 = vdwg.mxu0
        %v3022 = vsel %vm1067, %v2981, 0
        %v3025 = vsel %vm1341, %v2797, 0
        %3027 = vmatpush.bf16.msra.mxu0 0
        %3028 = vmatpush.bf16.msra.mxu0 0
        %3029 = vmatpush.bf16.msra.mxu0 0
        %3030 = vmatpush.bf16.msra.mxu0 0
        %3031 = vmatpush.bf16.msra.mxu0 0
        %3032 = vmatpush.bf16.msra.mxu0 0
        %3033 = vmatpush.bf16.msra.mxu0 0
        %3034 = vmatpush.bf16.msra.mxu0 %v3025
        %3035 = vmatmul.bf16.gmra.mxu0 %v3022
        %v3036 = vpop.f32.mrf.mxu0
        %v3037 = vadd.f32 0.0, %v3036
        %v3038 = vpop.f32.mrf.mxu0
        %3039 = vdwg.mxu0
        %v3041 = vsel %vm1067, %v2982, 0
        %v3044 = vsel %vm1341, %v2798, 0
        %3046 = vmatpush.bf16.msra.mxu0 0
        %3047 = vmatpush.bf16.msra.mxu0 0
        %3048 = vmatpush.bf16.msra.mxu0 0
        %3049 = vmatpush.bf16.msra.mxu0 0
        %3050 = vmatpush.bf16.msra.mxu0 0
        %3051 = vmatpush.bf16.msra.mxu0 0
        %3052 = vmatpush.bf16.msra.mxu0 0
        %3053 = vmatpush.bf16.msra.mxu0 %v3044
        %3054 = vmatmul.bf16.gmra.mxu0 %v3041
        %v3055 = vpop.f32.mrf.mxu0
        %v3056 = vadd.f32 0.0, %v3055
        %v3057 = vpop.f32.mrf.mxu0
        %3058 = vdwg.mxu0
        %3060 = vrot.lane.b32.xlu0 %v2933, 96
        %v3061 = vpop.permute.xlu0 %3060
        %vm3063 = vcmask 851712
        %3064 = vst.msk [vmem:[%s965] sm:$0xff] %vm3063, %v3061
        %3065 = vst.msk [vmem:[#allocation5] sm:$0xff] %vm1067, %v2999
        %3067 = vrot.lane.b32.xlu0 %v2948, 104
        %v3068 = vpop.permute.xlu0 %3067
        %vm3070 = vcmask 917312
        %3071 = vst.msk [vmem:[%s965] sm:$0xff] %vm3070, %v3068
        %3073 = vrot.lane.b32.xlu0 %v3018, 8
        %v3074 = vpop.permute.xlu0 %3073
        %3076 = vst.msk [vmem:[#allocation5] sm:$0xff] %vm1421, %v3074
        %3078 = vrot.lane.b32.xlu0 %v2963, 112
        %v3079 = vpop.permute.xlu0 %3078
        %vm3081 = vcmask 982912
        %3082 = vst.msk [vmem:[%s965] sm:$0xff] %vm3081, %v3079
        %3084 = vrot.lane.b32.xlu0 %v3037, 16
        %v3085 = vpop.permute.xlu0 %3084
        %3087 = vst.msk [vmem:[#allocation5] sm:$0xff] %vm1432, %v3085
        %3089 = vrot.lane.b32.xlu0 %v2978, 120
        %v3090 = vpop.permute.xlu0 %3089
        %vm3092 = vcmask 1048512
        %3093 = vst.msk [vmem:[%s965] sm:$0xff] %vm3092, %v3090
        %3095 = vrot.lane.b32.xlu0 %v3056, 24
        %v3096 = vpop.permute.xlu0 %3095
        %3098 = vst.msk [vmem:[#allocation5] sm:$0xff] %vm1443, %v3096
        %v3099 = vld [vmem:[#allocation5] sm:$0xff]
        %v3100 = vpack.c.bf16 %v3099, %v3099
        %v3101 = vperm.slane %v2730, 0
        %v3106 = vunpack.c.l.b16 %v2726
        %v3107 = vunpack.c.l.b16 %v2727
        %v3108 = vunpack.c.l.b16 %v2728
        %v3109 = vunpack.c.l.b16 %v2729
        %v3110 = vpack.c.b16 %v3107, %v3106
        %v3111 = vpack.c.b16 %v3109, %v3108
        %v3115 = vsel %vm977, %v3100, 0
        %3117 = vmatpush.bf16.msra.mxu0 0
        %3118 = vmatpush.bf16.msra.mxu0 0
        %3119 = vmatpush.bf16.msra.mxu0 0
        %3120 = vmatpush.bf16.msra.mxu0 0
        %3121 = vmatpush.bf16.msra.mxu0 0
        %3122 = vmatpush.bf16.msra.mxu0 0
        %3123 = vmatpush.bf16.msra.mxu0 %v3111
        %3124 = vmatpush.bf16.msra.mxu0 %v3110
        %3125 = vmatmul.bf16.gmra.mxu0 %v3115
        %v3126 = vpop.f32.mrf.mxu0
        %v3127 = vadd.f32 %v3101, %v3126
        %v3128 = vpop.f32.mrf.mxu0
        %3129 = vdwg.mxu0
        %v3130 = vadd.f32 %v2621, %v3127
        %v3131 = vld [vmem:[#allocation17 + $0x5] sm:$0x1]
        %v3132 = vld [vmem:[#allocation18 + $0x5] sm:$0x1]
        %v3133 = vsel %vm977, %v3130, 0.0
        %3134 = vadd.xlane.f32.xlu0 %v3133
        %v3135 = vpop.xlane.xlu0 %3134
        %v3136 = vmul.f32 %v3135, %v987
        %v3137 = vsub.f32 %v3130, %v3136
        %v3138 = vmul.f32 %v3137, %v3137
        %v3139 = vsel %vm977, %v3138, 0.0
        %3140 = vadd.xlane.f32.xlu0 %v3139
        %v3141 = vpop.xlane.xlu0 %3140
        %v3142 = vmul.f32 %v3141, 0.032258064
        %v3143 = vperm.slane %v3131, 0
        %v3144 = vmul.f32 %v3143, %v3137
        %v3145 = vrsqrt.pop %v3142
        %v3146 = vmul.f32 %v3145, %v3142
        %v3147 = vmul.f32 %v3146, %v3145
        %v3148 = vmul.f32 0.5, %v3147
        %v3149 = vsub.f32 1.5, %v3148
        %v3150 = vmul.f32 %v3145, %v3149
        %v3151 = vmul.f32 %v3142, %v3150
        %vm3152 = vcmp.eq.f32.partialorder %v3142, inf
        %v3153 = vsel %vm3152, %v3142, %v3151
        %vm3154 = vcmp.eq.f32.partialorder %v3142, 0.0
        %v3155 = vand.u32 %v3142, 2147483648
        %v3156 = vsel %vm3154, %v3155, %v3153
        %v3157 = vadd.f32 %v3156, 1e-06
        %v3158 = vrcp.pop %v3157
        %v3159 = vmul.f32 %v3157, %v3158
        %v3160 = vsub.f32 1.0, %v3159
        %v3161 = vmul.f32 %v3158, %v3160
        %v3162 = vadd.f32 %v3158, %v3161
        %vm3163 = vweird.f32 %v3157
        %vm3164 = vweird.f32 %v3158
        %vm3165 = vmor %vm3163, %vm3164
        %v3166 = vsel %vm3165, %v3158, %v3162
        %v3167 = vand.u32 2147483647, %v3157
        %vm3168 = vcmp.eq.f32.partialorder %v3167, 8.507059e+37
        %v3169 = vand.u32 %v3157, 2147483648
        %v3170 = vor.u32 1.1754944e-38, %v3169
        %v3171 = vsel %vm3168, %v3170, %v3166
        %v3172 = vmul.f32 %v3144, %v3171
        %v3173 = vperm.slane %v3132, 0
        %v3174 = vadd.f32 %v3172, %v3173
        %v3175 = vpack.c.bf16 %v3174, %v3174
        %s3176 = scalar_lea.vmem [#allocation21], 16
        %v3177 = vld [vmem:[%s3176] sm:$0xf]
        %v3178 = vld [vmem:[%s3176 + $0x4] sm:$0xf]
        %v3179 = vld [vmem:[%s3176 + $0x8] sm:$0xf]
        %v3180 = vld [vmem:[%s3176 + $0xc] sm:$0xf]
        %v3181 = vld [vmem:[%s17 + $0x1] sm:$0x1]
        %v3182 = vperm.slane %v3181, 0
        %v3187 = vunpack.c.l.b16 %v3177
        %v3188 = vunpack.c.l.b16 %v3178
        %v3189 = vunpack.c.l.b16 %v3179
        %v3190 = vunpack.c.l.b16 %v3180
        %v3191 = vpack.c.b16 %v3188, %v3187
        %v3192 = vpack.c.b16 %v3190, %v3189
        %v3196 = vsel %vm977, %v3175, 0
        %3198 = vmatpush.bf16.msra.mxu0 0
        %3199 = vmatpush.bf16.msra.mxu0 0
        %3200 = vmatpush.bf16.msra.mxu0 0
        %3201 = vmatpush.bf16.msra.mxu0 0
        %3202 = vmatpush.bf16.msra.mxu0 0
        %3203 = vmatpush.bf16.msra.mxu0 0
        %3204 = vmatpush.bf16.msra.mxu0 %v3192
        %3205 = vmatpush.bf16.msra.mxu0 %v3191
        %3206 = vmatmul.bf16.gmra.mxu0 %v3196
        %v3207 = vpop.f32.mrf.mxu0
        %v3208 = vadd.f32 %v3182, %v3207
        %v3209 = vpop.f32.mrf.mxu0
        %3210 = vdwg.mxu0
        %v3211 = vmax.f32 %v3208, 0.0
        %v3212 = vpack.c.bf16 %v3211, %v3211
        %s3213 = scalar_lea.vmem %s18, 32
        %v3214 = vld [vmem:[%s3213] sm:$0xf]
        %v3215 = vld [vmem:[%s3213 + $0x4] sm:$0xf]
        %v3216 = vld [vmem:[%s3213 + $0x8] sm:$0xf]
        %v3217 = vld [vmem:[%s3213 + $0xc] sm:$0xf]
        %v3218 = vld [vmem:[%s3213 + $0x10] sm:$0xf]
        %v3219 = vld [vmem:[%s3213 + $0x14] sm:$0xf]
        %v3220 = vld [vmem:[%s3213 + $0x18] sm:$0xf]
        %v3221 = vld [vmem:[%s3213 + $0x1c] sm:$0xf]
        %v3230 = vunpack.c.l.b16 %v3214
        %v3231 = vunpack.c.l.b16 %v3215
        %v3232 = vunpack.c.l.b16 %v3216
        %v3233 = vunpack.c.l.b16 %v3217
        %v3234 = vunpack.c.l.b16 %v3218
        %v3235 = vunpack.c.l.b16 %v3219
        %v3236 = vunpack.c.l.b16 %v3220
        %v3237 = vunpack.c.l.b16 %v3221
        %v3238 = vpack.c.b16 %v3231, %v3230
        %v3239 = vpack.c.b16 %v3233, %v3232
        %v3240 = vpack.c.b16 %v3235, %v3234
        %v3241 = vpack.c.b16 %v3237, %v3236
        %v3247 = vsel %vm2109, %v3212, 0
        %3249 = vmatpush.bf16.msra.mxu0 0
        %3250 = vmatpush.bf16.msra.mxu0 0
        %3251 = vmatpush.bf16.msra.mxu0 0
        %3252 = vmatpush.bf16.msra.mxu0 0
        %3253 = vmatpush.bf16.msra.mxu0 %v3241
        %3254 = vmatpush.bf16.msra.mxu0 %v3240
        %3255 = vmatpush.bf16.msra.mxu0 %v3239
        %3256 = vmatpush.bf16.msra.mxu0 %v3238
        %3257 = vmatmul.bf16.gmra.mxu0 %v3247
        %v3258 = vpop.f32.mrf.mxu0
        %v3259 = vadd.f32 0.0, %v3258
        %v3260 = vpop.f32.mrf.mxu0
        %3261 = vdwg.mxu0
        %v3262 = vadd.f32 %v3130, %v3259
        %v3263 = vld [vmem:[%s19 + $0x1] sm:$0x1]
        %v3264 = vperm.slane %v3263, 0
        %v3265 = vadd.f32 %v3262, %v3264
        %v3266 = vld [vmem:[%s20] sm:$0x1]
        %v3267 = vld [vmem:[%s21] sm:$0x1]
        %v3268 = vsel %vm977, %v3265, 0.0
        %3269 = vadd.xlane.f32.xlu0 %v3268
        %v3270 = vpop.xlane.xlu0 %3269
        %v3271 = vmul.f32 %v3270, %v987
        %v3272 = vsub.f32 %v3265, %v3271
        %v3273 = vmul.f32 %v3272, %v3272
        %v3274 = vsel %vm977, %v3273, 0.0
        %3275 = vadd.xlane.f32.xlu0 %v3274
        %v3276 = vpop.xlane.xlu0 %3275
        %v3277 = vmul.f32 %v3276, 0.032258064
        %v3279 = vperm.slane %v3266, 0
        %v3281 = vmul.f32 %v3279, %v3272
        %v3282 = vrsqrt.pop %v3277
        %v3283 = vmul.f32 %v3282, %v3277
        %v3284 = vmul.f32 %v3283, %v3282
        %v3285 = vmul.f32 0.5, %v3284
        %v3286 = vsub.f32 1.5, %v3285
        %v3287 = vmul.f32 %v3282, %v3286
        %v3288 = vmul.f32 %v3277, %v3287
        %vm3289 = vcmp.eq.f32.partialorder %v3277, inf
        %v3290 = vsel %vm3289, %v3277, %v3288
        %vm3291 = vcmp.eq.f32.partialorder %v3277, 0.0
        %v3292 = vand.u32 %v3277, 2147483648
        %v3293 = vsel %vm3291, %v3292, %v3290
        %v3294 = vadd.f32 %v3293, 1e-06
        %v3295 = vrcp.pop %v3294
        %v3296 = vmul.f32 %v3294, %v3295
        %v3297 = vsub.f32 1.0, %v3296
        %v3298 = vmul.f32 %v3295, %v3297
        %v3299 = vadd.f32 %v3295, %v3298
        %vm3300 = vweird.f32 %v3294
        %vm3301 = vweird.f32 %v3295
        %vm3302 = vmor %vm3300, %vm3301
        %v3303 = vsel %vm3302, %v3295, %v3299
        %v3304 = vand.u32 2147483647, %v3294
        %vm3305 = vcmp.eq.f32.partialorder %v3304, 8.507059e+37
        %v3306 = vand.u32 %v3294, 2147483648
        %v3307 = vor.u32 1.1754944e-38, %v3306
        %v3308 = vsel %vm3305, %v3307, %v3303
        %v3309 = vmul.f32 %v3281, %v3308
        %v3311 = vperm.slane %v3267, 0
        %v3313 = vadd.f32 %v3309, %v3311
        %3314 = vst.msk [vmem:[%s958] sm:$0xff] %vm977, %v3313
        %s3315 = sand.u32 %s548, 1
        %s3316 = scalar_lea.sflag [#allocation8], %s3315
        %s3317 = sand.u32 %s548, 1
        %s3318 = smul.addr %s3317, 8
        %s3319 = scalar_lea.vmem [#allocation23], %s3318
        %s3320 = sand.u32 %s574, 1
        %s3321 = scalar_lea.sflag [#allocation25], %s3320
        %s3322 = sand.u32 %s574, 1
        %s3323 = smul.addr %s3322, 8
        %s3324 = scalar_lea.vmem [#allocation24], %s3323
        // Predicated region
        $region149: #{tpu_custom_call.1} parent=107 // pred_check
          %p3325 = pneg %p558
        $region150: #{tpu_custom_call.1} parent=107 // pred_check_branch
          %3327 = sbr.rel (%p3325) target = $region152
        $region151: #{tpu_custom_call.1} parent=107 // pred_region
          %3329 = vsyncadd %s3316, 0
          %s3330 = smul.addr %s53, 8
          %s3331 = scalar_lea.hbm %s22, %s3330
          %s3333 = sshll.u32 %s3319, 4
          %s3334 = int_to_ptr.vmem [resolvable:$true] %s3333
          %s3335 = sshll.u32 %s3331, 4
          %s3336 = int_to_ptr.hbm [resolvable:$true] %s3335
          %3338 = dma.vmem_to_hbm [thread:$0]  %s3334, 128, %s3336, %s3316
        $region152: #{tpu_custom_call.1} parent=107 // pred_fallthru
          _
        // Predicated region
        $region153: #{tpu_custom_call.1} parent=107 // pred_check
          %p3339 = pneg %p584
        $region154: #{tpu_custom_call.1} parent=107 // pred_check_branch
          %3341 = sbr.rel (%p3339) target = $region156
        $region155: #{tpu_custom_call.1} parent=107 // pred_region
          %3343 = vsyncadd %s3321, 0
          %s3344 = smul.addr %s53, 8
          %s3345 = scalar_lea.hbm %s23, %s3344
          %s3347 = sshll.u32 %s3324, 4
          %s3348 = int_to_ptr.vmem [resolvable:$true] %s3347
          %s3349 = sshll.u32 %s3345, 4
          %s3350 = int_to_ptr.hbm [resolvable:$true] %s3349
          %3352 = dma.vmem_to_hbm [thread:$0]  %s3348, 128, %s3350, %s3321
        $region156: #{tpu_custom_call.1} parent=107 // pred_fallthru
          _
      $region108: #{tpu_custom_call.1} parent=5 // pred_fallthru
        _
      %p3353 = scmp.le.s32.totalorder 2, %s48
      // Predicated region
      $region157: #{tpu_custom_call.1} parent=5 // pred_check
        %p3354 = pneg %p3353
      $region158: #{tpu_custom_call.1} parent=5 // pred_check_branch
        %3356 = sbr.rel (%p3354) target = $region160
      $region159: #{tpu_custom_call.1} parent=5 // pred_region
        %s3357 = ssub.s32 %s48, 2
        // Predicated region
        $region161: #{tpu_custom_call.1} parent=159 // pred_check
          %p3358 = pneg %p564
        $region162: #{tpu_custom_call.1} parent=159 // pred_check_branch
          %3360 = sbr.rel (%p3358) target = $region164
        $region163: #{tpu_custom_call.1} parent=159 // pred_region
          %s3361 = sand.u32 %s549, 1
          %s3362 = scalar_lea.sflag [#allocation8], %s3361
          %s3363 = sand.u32 %s549, 1
          %s3364 = smul.addr %s3363, 8
          %s3365 = scalar_lea.vmem [#allocation23], %s3364
          %3367 = dma.done %s3362, 128
        $region164: #{tpu_custom_call.1} parent=159 // pred_fallthru
          _
        // Predicated region
        $region165: #{tpu_custom_call.1} parent=159 // pred_check
          %p3368 = pneg %p590
        $region166: #{tpu_custom_call.1} parent=159 // pred_check_branch
          %3370 = sbr.rel (%p3368) target = $region168
        $region167: #{tpu_custom_call.1} parent=159 // pred_region
          %s3371 = sand.u32 %s575, 1
          %s3372 = scalar_lea.sflag [#allocation25], %s3371
          %s3373 = sand.u32 %s575, 1
          %s3374 = smul.addr %s3373, 8
          %s3375 = scalar_lea.vmem [#allocation24], %s3374
          %3377 = dma.done %s3372, 128
        $region168: #{tpu_custom_call.1} parent=159 // pred_fallthru
          _
      $region160: #{tpu_custom_call.1} parent=5 // pred_fallthru
        _
    $region6: #{tpu_custom_call.1} parent=1 // loop_footer
      %s52 = sadd.s32 1, %s48
    $region7: #{tpu_custom_call.1} parent=1 // loop_footer_branch
      %47 = sbr.rel target = $region3
    $region8: #{tpu_custom_call.1} parent=1 // loop_exit
      _
    %3378 = vsyncpa [#allocation7], 1
    %s3379 = scalar_lea.sflag [#allocation7], 1
    %3380 = vsyncpa %s3379, 1
    %3381 = vsyncpa [#allocation10], 1
    %s3382 = scalar_lea.sflag [#allocation10], 1
    %3383 = vsyncpa %s3382, 1
    %3384 = vsyncpa [#allocation13], 1
    %s3385 = scalar_lea.sflag [#allocation13], 1
    %3386 = vsyncpa %s3385, 1
    %3387 = vsyncpa [#allocation16], 1
    %3388 = vsyncpa [#allocation19], 1
    %3389 = vsyncpa [#allocation22], 1
    %3390 = vsyncpa [#allocation8], 1
    %s3391 = scalar_lea.sflag [#allocation8], 1
    %3392 = vsyncpa %s3391, 1
    %3393 = vsyncpa [#allocation25], 1
    %s3394 = scalar_lea.sflag [#allocation25], 1
    %3395 = vsyncpa %s3394, 1

</llo_original>
